<compile_context>
chip_gen: v7x
topology: tpu7x:2x2x1
jax: 0.10.0
libtpu: 0.0.40
codegen_flags: <defaults>
</compile_context>

<pallas_src>
import functools
import math

import numpy as np
import jax
import jax.numpy as jnp
from jax import lax
from jax.experimental import pallas as pl
from jax.experimental.pallas import tpu as pltpu

BN_EPS = 1e-5
BN_GAMMA = 1.1            # BatchNorm weight init = 1.1, bias = 0
INV_SQRT2 = 1.0 / math.sqrt(2.0)
CIN1_PAD = 8              # conv1 input channels padded 1 -> 8 (sublane multiple)


# ----------------------------- in-kernel math --------------------------------
def _gelu(x):
    """Exact (erf) GELU via the A&S 7.1.26 polynomial (~1.5e-7 abs err)."""
    u = x * INV_SQRT2
    au = jnp.abs(u)
    d = 1.0 + 0.3275911 * au
    t = pl.reciprocal(d, approx=True)            # EUP slot, not a VALU divide
    t = t * (2.0 - d * t)                        # one Newton step -> ~f32 accurate
    poly = ((((1.061405429 * t - 1.453152027) * t + 1.421413741) * t
             - 0.284496736) * t + 0.254829592) * t
    erf_abs = 1.0 - poly * jnp.exp(-au * au)
    erf_u = jnp.where(u >= 0.0, erf_abs, -erf_abs)
    return 0.5 * x * (1.0 + erf_u)


def _batchnorm(y, axis):
    """Training-mode BatchNorm (batch stats, biased var, gamma=1.1, beta=0)."""
    mu = jnp.mean(y, axis=axis, keepdims=True)
    var = jnp.mean(jnp.square(y - mu), axis=axis, keepdims=True)
    return BN_GAMMA * (y - mu) * lax.rsqrt(var + BN_EPS)


def _bn_bias_gelu(y, b_ref, apply_bn, axis=1):
    if apply_bn:
        y = _batchnorm(y, axis)    # conv/fc bias cancels under BN -> skipped
    else:
        y = y + b_ref[...]
    return _gelu(y)


def _conv_roll(x, w_ref, mask_ref, b_ref, *, w, r, apply_bn):
    """3x3 'same' conv on a (Cin, r=B*H*W) slab, lane extent r % 128 == 0.

    Each tap is a lane shift (pltpu.roll, XLU) times a prefetched boundary
    mask; the 9 slabs are stacked along sublanes so the whole layer is a
    single MXU matmul with contraction depth 9*Cin.
    """
    masks = mask_ref[...]                              # (9, r) f32, prefetched
    slabs = []
    for k in range(9):
        dy, dx = k // 3 - 1, k % 3 - 1
        d = dy * w + dx
        if d == 0:                                     # centre tap: no shift/mask
            slabs.append(x)
        else:
            s = pltpu.roll(x, shift=(-d) % r, axis=1)  # y[:, i] = x[:, i + d]
            slabs.append(s * masks[k:k + 1, :])
    stacked = jnp.concatenate(slabs, axis=0).astype(jnp.bfloat16)   # (9*Cin, r)
    y = jnp.dot(w_ref[...], stacked, preferred_element_type=jnp.float32)
    return _bn_bias_gelu(y, b_ref, apply_bn)


def _conv_small(x, w_ref, taps, b_ref, *, apply_bn):
    """Same conv for tiny lane extents (r=32): each tap uses a prefetched
    (r, r) one-hot shift+mask matrix instead of pltpu.roll."""
    xb = x.astype(jnp.bfloat16)
    slabs = []
    for k in range(9):
        if k == 4:                                     # centre tap
            slabs.append(x)
        else:
            slabs.append(jnp.dot(xb, taps[k], preferred_element_type=jnp.float32))
    stacked = jnp.concatenate(slabs, axis=0).astype(jnp.bfloat16)   # (9*Cin, r)
    y = jnp.dot(w_ref[...], stacked, preferred_element_type=jnp.float32)
    return _bn_bias_gelu(y, b_ref, apply_bn)


def _maxpool_roll(x, sel_ref, *, w, r):
    """F.max_pool2d(x, 2, 2): two shifted maxes + prefetched one-hot compaction."""
    m = jnp.maximum(x, pltpu.roll(x, shift=r - 1, axis=1))   # x[:, i+1]
    m = jnp.maximum(m, pltpu.roll(m, shift=r - w, axis=1))   # m[:, i+w]
    return jnp.dot(m.astype(jnp.bfloat16), sel_ref[...],
                   preferred_element_type=jnp.float32)


# ------------------------------ fused kernel ---------------------------------
def _fused_cnn_kernel(x_ref, w1_ref, b1_ref, m1_ref, w2_ref, b2_ref, m2_ref,
                      w3_ref, b3_ref, w4_ref, b4_ref, t34_ref,
                      sel1_ref, sel2_ref, p3avg_ref,
                      fw1_ref, fb1_ref, fw2_ref, fb2_ref, out_ref,
                      *, batch, h, w, apply_bn):
    f32, bf16 = jnp.float32, jnp.bfloat16
    h2, w2 = h // 2, w // 2
    r1, r2 = batch * h * w, batch * h2 * w2

    # conv1 + bn1 + gelu -> maxpool (dropout = identity)
    a = _conv_roll(x_ref[...], w1_ref, m1_ref, b1_ref, w=w, r=r1, apply_bn=apply_bn)
    a = _maxpool_roll(a, sel1_ref, w=w, r=r1)
    # conv2 + bn2 + gelu -> maxpool
    a = _conv_roll(a, w2_ref, m2_ref, b2_ref, w=w2, r=r2, apply_bn=apply_bn)
    a = _maxpool_roll(a, sel2_ref, w=w2, r=r2)
    # conv3 + bn3 + gelu, conv4 + bn4 + gelu (4x4 spatial: prefetched tap matrices)
    taps = [t34_ref[k] for k in range(9)]
    a = _conv_small(a, w3_ref, taps, b3_ref, apply_bn=apply_bn)
    a = _conv_small(a, w4_ref, taps, b4_ref, apply_bn=apply_bn)

    # maxpool + global average pool fused & transposed: (C, r) -> (B, C).
    # taps[5]/taps[7] are the (+1, +w) shift matrices; their border masks only
    # zero lanes that the corner-selecting average matrix drops anyway.
    m = jnp.maximum(a, jnp.dot(a.astype(bf16), taps[5], preferred_element_type=f32))
    m = jnp.maximum(m, jnp.dot(m.astype(bf16), taps[7], preferred_element_type=f32))
    pooled = jnp.einsum("bj,cj->bc", p3avg_ref[...], m.astype(bf16),
                        preferred_element_type=f32)              # (B, 32)

    # fc1 + bn5 + gelu + fc2 (rows = batch, lanes = features -> lane-axis store)
    hid = jnp.dot(pooled.astype(bf16), fw1_ref[...], preferred_element_type=f32)
    hid = _bn_bias_gelu(hid, fb1_ref, apply_bn, axis=0)
    out_ref[...] = (jnp.dot(hid.astype(bf16), fw2_ref[...],
                            preferred_element_type=f32) + fb2_ref[...])


def _full_spec(shape):
    nd = len(shape)
    return pl.BlockSpec(shape, lambda i, _nd=nd: (0,) * _nd)


# -------------------- shape-only constants (hoisted, numpy) ------------------
def _conv_masks(b, h, w):
    """(9, b*h*w) f32 per-tap validity of the shifted source pixel ('same' pad)."""
    r = b * h * w
    i = np.arange(r)
    x, y = i % w, (i // w) % h
    masks = np.zeros((9, r), np.float32)
    for k in range(9):
        dy, dx = k // 3 - 1, k % 3 - 1
        masks[k] = ((x + dx >= 0) & (x + dx < w) & (y + dy >= 0) & (y + dy < h))
    return jnp.asarray(masks)


def _conv_taps(b, h, w):
    """(9, r, r) bf16 one-hot shift+mask matrices (tiny lane extents only)."""
    r = b * h * w
    i = np.arange(r)
    x, y = i % w, (i // w) % h
    taps = np.zeros((9, r, r), np.float32)
    for k in range(9):
        dy, dx = k // 3 - 1, k % 3 - 1
        valid = (x + dx >= 0) & (x + dx < w) & (y + dy >= 0) & (y + dy < h)
        cols = i[valid]
        taps[k, cols + dy * w + dx, cols] = 1.0
    return jnp.asarray(taps, dtype=jnp.bfloat16)


def _pool_sel(b, h, w):
    """(b*h*w, b*(h//2)*(w//2)) bf16 one-hot compaction: keep 2x2 corner lanes."""
    r_in, h2, w2 = b * h * w, h // 2, w // 2
    o = np.arange(b * h2 * w2)
    bi, y2, x2 = o // (h2 * w2), (o // w2) % h2, o % w2
    sel = np.zeros((r_in, o.size), np.float32)
    sel[bi * h * w + 2 * y2 * w + 2 * x2, o] = 1.0
    return jnp.asarray(sel, dtype=jnp.bfloat16)


def _pool_avg_t(b, h, w):
    """(b, b*h*w) bf16: fused 2x2-maxpool compaction + global average, transposed."""
    r, n = b * h * w, (h // 2) * (w // 2)
    i = np.arange(r)
    bi, x, y = i // (h * w), i % w, (i // w) % h
    corner = (x % 2 == 0) & (y % 2 == 0)
    m = np.zeros((b, r), np.float32)
    m[bi[corner], i[corner]] = 1.0 / n          # 1/4 -> exact in bf16
    return jnp.asarray(m, dtype=jnp.bfloat16)


# ------------------------------ parameters -----------------------------------
def init_params(key):
    ks = jax.random.split(key, 6)

    def conv_p(k, cin, cout, cin_pad):
        n = 3 * 3 * cout
        wgt = jax.random.normal(k, (cout, cin, 3, 3), jnp.float32) * math.sqrt(2.0 / n)
        wgt = wgt.at[:cout // 4].multiply(2.0)        # "high frequency" out-channels
        # kernel layout: (Cout, 9*Cin_pad), columns ordered tap-major, channel-minor
        wr = jnp.transpose(wgt, (0, 2, 3, 1))                      # (Cout, 3, 3, Cin)
        wr = jnp.pad(wr, ((0, 0), (0, 0), (0, 0), (0, cin_pad - cin)))
        wr = wr.reshape(cout, 9 * cin_pad).astype(jnp.bfloat16)
        return wr, jnp.zeros((cout, 1), jnp.float32)

    def lin_p(k, fin, fout, fin_pad, fout_pad):
        bound = 1.5 / math.sqrt(fin)
        wgt = jax.random.uniform(k, (fout, fin), jnp.float32,
                                 minval=-bound, maxval=bound)
        wt = jnp.pad(wgt.T, ((0, fin_pad - fin), (0, fout_pad - fout)))
        return wt.astype(jnp.bfloat16), jnp.zeros((1, fout_pad), jnp.float32)

    return {
        "conv1": conv_p(ks[0], 1, 16, CIN1_PAD),
        "conv2": conv_p(ks[1], 16, 32, 16),
        "conv3": conv_p(ks[2], 32, 32, 32),
        "conv4": conv_p(ks[3], 32, 32, 32),
        "fc1": lin_p(ks[4], 32, 20, 32, 32),
        "fc2": lin_p(ks[5], 20, 10, 32, 16),
    }


# ------------------------------- forward -------------------------------------
@jax.jit
def forward(params, x_nchw):
    b, cin, h, w = x_nchw.shape
    assert cin == 1 and h % 8 == 0 and w % 8 == 0      # three rounds of 2x2 pooling
    assert (b * h * w) % 512 == 0                      # conv1/conv2 lane extents % 128
    apply_bn = b > 1                                   # matches `if batch_size > 1`

    # NCHW -> (Cin_pad, B*H*W) slab: channels on sublanes, flat spatial on lanes.
    x = jnp.transpose(x_nchw.astype(jnp.float32), (1, 0, 2, 3)).reshape(cin, b * h * w)
    x = jnp.pad(x, ((0, CIN1_PAD - cin), (0, 0)))

    # Shape-only constants are built with numpy at trace time (prefetched into
    # VMEM as inputs); no iota/compare/select chains run inside the kernel.
    mask1 = _conv_masks(b, h, w)
    mask2 = _conv_masks(b, h // 2, w // 2)
    taps34 = _conv_taps(b, h // 4, w // 4)
    sel1 = _pool_sel(b, h, w)
    sel2 = _pool_sel(b, h // 2, w // 2)
    p3avg = _pool_avg_t(b, h // 4, w // 4)

    args = (x,
            *params["conv1"], mask1,
            *params["conv2"], mask2,
            *params["conv3"],
            *params["conv4"], taps34,
            sel1, sel2, p3avg,
            *params["fc1"], *params["fc2"])

    kernel = functools.partial(_fused_cnn_kernel, batch=b, h=h, w=w,
                               apply_bn=apply_bn)
    out = pl.pallas_call(
        kernel,
        out_shape=jax.ShapeDtypeStruct((b, 16), jnp.float32),
        grid=(1,),
        in_specs=[_full_spec(a.shape) for a in args],
        out_specs=_full_spec((b, 16)),
        compiler_params=pltpu.CompilerParams(dimension_semantics=("arbitrary",)),
    )(*args)
    return out[:, :10]                                 # un-pad logits -> (B, 10)


if __name__ == "__main__":
    key = jax.random.PRNGKey(0)
    pkey, xkey = jax.random.split(key)
    params = init_params(pkey)
    x = jax.random.normal(xkey, (2, 1, 16, 16), jnp.float32)   # NCHW, like PyTorch
    out = forward(params, x)
    jax.block_until_ready(out)
    assert out.shape == (2, 10) and out.dtype == jnp.float32
    assert bool(jnp.isfinite(out).all())
    print("KERNEL_OK")
</pallas_src>

<mosaic_0001>
module attributes {stable_mosaic.version = 11 : i64} {
  func.func @_fused_cnn_kernel(%arg0: i32, %arg1: memref<8x512xf32, #tpu.memory_space<vmem>>, %arg2: memref<16x72xbf16, #tpu.memory_space<vmem>>, %arg3: memref<16x1xf32, #tpu.memory_space<vmem>>, %arg4: memref<9x512xf32, #tpu.memory_space<vmem>>, %arg5: memref<32x144xbf16, #tpu.memory_space<vmem>>, %arg6: memref<32x1xf32, #tpu.memory_space<vmem>>, %arg7: memref<9x128xf32, #tpu.memory_space<vmem>>, %arg8: memref<32x288xbf16, #tpu.memory_space<vmem>>, %arg9: memref<32x1xf32, #tpu.memory_space<vmem>>, %arg10: memref<32x288xbf16, #tpu.memory_space<vmem>>, %arg11: memref<32x1xf32, #tpu.memory_space<vmem>>, %arg12: memref<9x32x32xbf16, #tpu.memory_space<vmem>>, %arg13: memref<512x128xbf16, #tpu.memory_space<vmem>>, %arg14: memref<128x32xbf16, #tpu.memory_space<vmem>>, %arg15: memref<2x32xbf16, #tpu.memory_space<vmem>>, %arg16: memref<32x32xbf16, #tpu.memory_space<vmem>>, %arg17: memref<1x32xf32, #tpu.memory_space<vmem>>, %arg18: memref<32x16xbf16, #tpu.memory_space<vmem>>, %arg19: memref<1x16xf32, #tpu.memory_space<vmem>>, %arg20: memref<2x16xf32, #tpu.memory_space<vmem>>) attributes {dimension_semantics = [#tpu.dimension_semantics<arbitrary>], iteration_bounds = array<i64: 1>, scalar_prefetch = 0 : i64, scratch_operands = 0 : i64, tpu.core_type = #tpu.core_type<tc>, window_params = [{pipeline_mode = #tpu.pipeline_mode<synchronous>, transform_indices = @transform_0, window_bounds = array<i64: 8, 512>}, {pipeline_mode = #tpu.pipeline_mode<synchronous>, transform_indices = @transform_1, window_bounds = array<i64: 16, 72>}, {pipeline_mode = #tpu.pipeline_mode<synchronous>, transform_indices = @transform_2, window_bounds = array<i64: 16, 1>}, {pipeline_mode = #tpu.pipeline_mode<synchronous>, transform_indices = @transform_3, window_bounds = array<i64: 9, 512>}, {pipeline_mode = #tpu.pipeline_mode<synchronous>, transform_indices = @transform_4, window_bounds = array<i64: 32, 144>}, {pipeline_mode = #tpu.pipeline_mode<synchronous>, transform_indices = @transform_5, window_bounds = array<i64: 32, 1>}, {pipeline_mode = #tpu.pipeline_mode<synchronous>, transform_indices = @transform_6, window_bounds = array<i64: 9, 128>}, {pipeline_mode = #tpu.pipeline_mode<synchronous>, transform_indices = @transform_7, window_bounds = array<i64: 32, 288>}, {pipeline_mode = #tpu.pipeline_mode<synchronous>, transform_indices = @transform_8, window_bounds = array<i64: 32, 1>}, {pipeline_mode = #tpu.pipeline_mode<synchronous>, transform_indices = @transform_9, window_bounds = array<i64: 32, 288>}, {pipeline_mode = #tpu.pipeline_mode<synchronous>, transform_indices = @transform_10, window_bounds = array<i64: 32, 1>}, {pipeline_mode = #tpu.pipeline_mode<synchronous>, transform_indices = @transform_11, window_bounds = array<i64: 9, 32, 32>}, {pipeline_mode = #tpu.pipeline_mode<synchronous>, transform_indices = @transform_12, window_bounds = array<i64: 512, 128>}, {pipeline_mode = #tpu.pipeline_mode<synchronous>, transform_indices = @transform_13, window_bounds = array<i64: 128, 32>}, {pipeline_mode = #tpu.pipeline_mode<synchronous>, transform_indices = @transform_14, window_bounds = array<i64: 2, 32>}, {pipeline_mode = #tpu.pipeline_mode<synchronous>, transform_indices = @transform_15, window_bounds = array<i64: 32, 32>}, {pipeline_mode = #tpu.pipeline_mode<synchronous>, transform_indices = @transform_16, window_bounds = array<i64: 1, 32>}, {pipeline_mode = #tpu.pipeline_mode<synchronous>, transform_indices = @transform_17, window_bounds = array<i64: 32, 16>}, {pipeline_mode = #tpu.pipeline_mode<synchronous>, transform_indices = @transform_18, window_bounds = array<i64: 1, 16>}, {pipeline_mode = #tpu.pipeline_mode<synchronous>, transform_indices = @transform_19, window_bounds = array<i64: 2, 16>}]} {
    %c0 = arith.constant 0 : index
    %c0_0 = arith.constant 0 : index
    %0 = vector.load %arg1[%c0, %c0_0] : memref<8x512xf32, #tpu.memory_space<vmem>>, vector<8x512xf32>
    %c0_1 = arith.constant 0 : index
    %c0_2 = arith.constant 0 : index
    %1 = vector.load %arg4[%c0_1, %c0_2] : memref<9x512xf32, #tpu.memory_space<vmem>>, vector<9x512xf32>
    %c17_i32 = arith.constant 17 : i32
    %2 = tpu.dynamic_rotate %0 by %c17_i32 dim 1 : vector<8x512xf32>, i32 -> vector<8x512xf32>
    %3 = vector.extract_strided_slice %1 {offsets = [0, 0], sizes = [1, 512], strides = [1, 1]} : vector<9x512xf32> to vector<1x512xf32>
    %4 = vector.broadcast %3 : vector<1x512xf32> to vector<8x512xf32>
    %5 = arith.mulf %2, %4 : vector<8x512xf32>
    %c16_i32 = arith.constant 16 : i32
    %6 = tpu.dynamic_rotate %0 by %c16_i32 dim 1 : vector<8x512xf32>, i32 -> vector<8x512xf32>
    %7 = vector.extract_strided_slice %1 {offsets = [1, 0], sizes = [1, 512], strides = [1, 1]} : vector<9x512xf32> to vector<1x512xf32>
    %8 = vector.broadcast %7 : vector<1x512xf32> to vector<8x512xf32>
    %9 = arith.mulf %6, %8 : vector<8x512xf32>
    %c15_i32 = arith.constant 15 : i32
    %10 = tpu.dynamic_rotate %0 by %c15_i32 dim 1 : vector<8x512xf32>, i32 -> vector<8x512xf32>
    %11 = vector.extract_strided_slice %1 {offsets = [2, 0], sizes = [1, 512], strides = [1, 1]} : vector<9x512xf32> to vector<1x512xf32>
    %12 = vector.broadcast %11 : vector<1x512xf32> to vector<8x512xf32>
    %13 = arith.mulf %10, %12 : vector<8x512xf32>
    %c1_i32 = arith.constant 1 : i32
    %14 = tpu.dynamic_rotate %0 by %c1_i32 dim 1 : vector<8x512xf32>, i32 -> vector<8x512xf32>
    %15 = vector.extract_strided_slice %1 {offsets = [3, 0], sizes = [1, 512], strides = [1, 1]} : vector<9x512xf32> to vector<1x512xf32>
    %16 = vector.broadcast %15 : vector<1x512xf32> to vector<8x512xf32>
    %17 = arith.mulf %14, %16 : vector<8x512xf32>
    %c511_i32 = arith.constant 511 : i32
    %18 = tpu.dynamic_rotate %0 by %c511_i32 dim 1 : vector<8x512xf32>, i32 -> vector<8x512xf32>
    %19 = vector.extract_strided_slice %1 {offsets = [5, 0], sizes = [1, 512], strides = [1, 1]} : vector<9x512xf32> to vector<1x512xf32>
    %20 = vector.broadcast %19 : vector<1x512xf32> to vector<8x512xf32>
    %21 = arith.mulf %18, %20 : vector<8x512xf32>
    %c497_i32 = arith.constant 497 : i32
    %22 = tpu.dynamic_rotate %0 by %c497_i32 dim 1 : vector<8x512xf32>, i32 -> vector<8x512xf32>
    %23 = vector.extract_strided_slice %1 {offsets = [6, 0], sizes = [1, 512], strides = [1, 1]} : vector<9x512xf32> to vector<1x512xf32>
    %24 = vector.broadcast %23 : vector<1x512xf32> to vector<8x512xf32>
    %25 = arith.mulf %22, %24 : vector<8x512xf32>
    %c496_i32 = arith.constant 496 : i32
    %26 = tpu.dynamic_rotate %0 by %c496_i32 dim 1 : vector<8x512xf32>, i32 -> vector<8x512xf32>
    %27 = vector.extract_strided_slice %1 {offsets = [7, 0], sizes = [1, 512], strides = [1, 1]} : vector<9x512xf32> to vector<1x512xf32>
    %28 = vector.broadcast %27 : vector<1x512xf32> to vector<8x512xf32>
    %29 = arith.mulf %26, %28 : vector<8x512xf32>
    %c495_i32 = arith.constant 495 : i32
    %30 = tpu.dynamic_rotate %0 by %c495_i32 dim 1 : vector<8x512xf32>, i32 -> vector<8x512xf32>
    %31 = vector.extract_strided_slice %1 {offsets = [8, 0], sizes = [1, 512], strides = [1, 1]} : vector<9x512xf32> to vector<1x512xf32>
    %32 = vector.broadcast %31 : vector<1x512xf32> to vector<8x512xf32>
    %33 = arith.mulf %30, %32 : vector<8x512xf32>
    %34 = tpu.concatenate %5, %9, %13, %17, %0, %21, %25, %29, %33 in 0 : vector<8x512xf32>, vector<8x512xf32>, vector<8x512xf32>, vector<8x512xf32>, vector<8x512xf32>, vector<8x512xf32>, vector<8x512xf32>, vector<8x512xf32>, vector<8x512xf32> -> vector<72x512xf32>
    %35 = arith.truncf %34 : vector<72x512xf32> to vector<72x512xbf16>
    %c0_3 = arith.constant 0 : index
    %c0_4 = arith.constant 0 : index
    %36 = vector.load %arg2[%c0_3, %c0_4] : memref<16x72xbf16, #tpu.memory_space<vmem>>, vector<16x72xbf16>
    %cst = arith.constant dense<0.000000e+00> : vector<16x512xf32>
    %37 = tpu.matmul %36, %35, %cst {dimension_numbers = #tpu.dot_dimension_numbers<[1], [0], [0], [1], [0, 0, 1, 1], [], []>} : vector<16x72xbf16>, vector<72x512xbf16>, vector<16x512xf32> -> vector<16x512xf32>
    %cst_5 = arith.constant dense<0.000000e+00> : vector<16xf32>
    %38 = vector.multi_reduction <add>, %37, %cst_5 [1] : vector<16x512xf32> to vector<16xf32>
    %39 = vector.shape_cast %38 : vector<16xf32> to vector<16x1xf32>
    %cst_6 = arith.constant 5.120000e+02 : f32
    %40 = vector.broadcast %cst_6 : f32 to vector<16x1xf32>
    %41 = arith.divf %39, %40 : vector<16x1xf32>
    %42 = vector.broadcast %41 : vector<16x1xf32> to vector<16x512xf32>
    %43 = arith.subf %37, %42 : vector<16x512xf32>
    %44 = arith.mulf %43, %43 : vector<16x512xf32>
    %cst_7 = arith.constant dense<0.000000e+00> : vector<16xf32>
    %45 = vector.multi_reduction <add>, %44, %cst_7 [1] : vector<16x512xf32> to vector<16xf32>
    %46 = vector.shape_cast %45 : vector<16xf32> to vector<16x1xf32>
    %cst_8 = arith.constant 5.120000e+02 : f32
    %47 = vector.broadcast %cst_8 : f32 to vector<16x1xf32>
    %48 = arith.divf %46, %47 : vector<16x1xf32>
    %49 = vector.broadcast %41 : vector<16x1xf32> to vector<16x512xf32>
    %50 = arith.subf %37, %49 : vector<16x512xf32>
    %cst_9 = arith.constant 1.100000e+00 : f32
    %51 = vector.broadcast %cst_9 : f32 to vector<16x512xf32>
    %52 = arith.mulf %51, %50 : vector<16x512xf32>
    %cst_10 = arith.constant 9.99999974E-6 : f32
    %53 = vector.broadcast %cst_10 : f32 to vector<16x1xf32>
    %54 = arith.addf %48, %53 : vector<16x1xf32>
    %55 = math.rsqrt %54 : vector<16x1xf32>
    %56 = vector.broadcast %55 : vector<16x1xf32> to vector<16x512xf32>
    %57 = arith.mulf %52, %56 : vector<16x512xf32>
    %cst_11 = arith.constant 0.707106769 : f32
    %58 = vector.broadcast %cst_11 : f32 to vector<16x512xf32>
    %59 = arith.mulf %57, %58 : vector<16x512xf32>
    %60 = math.absf %59 : vector<16x512xf32>
    %cst_12 = arith.constant 0.327591091 : f32
    %61 = vector.broadcast %cst_12 : f32 to vector<16x512xf32>
    %62 = arith.mulf %61, %60 : vector<16x512xf32>
    %cst_13 = arith.constant 1.000000e+00 : f32
    %63 = vector.broadcast %cst_13 : f32 to vector<16x512xf32>
    %64 = arith.addf %63, %62 : vector<16x512xf32>
    %65 = tpu.reciprocal %64 {approx = true} : vector<16x512xf32> -> vector<16x512xf32>
    %66 = arith.mulf %64, %65 : vector<16x512xf32>
    %cst_14 = arith.constant 2.000000e+00 : f32
    %67 = vector.broadcast %cst_14 : f32 to vector<16x512xf32>
    %68 = arith.subf %67, %66 : vector<16x512xf32>
    %69 = arith.mulf %65, %68 : vector<16x512xf32>
    %cst_15 = arith.constant 1.06140542 : f32
    %70 = vector.broadcast %cst_15 : f32 to vector<16x512xf32>
    %71 = arith.mulf %70, %69 : vector<16x512xf32>
    %cst_16 = arith.constant 1.45315206 : f32
    %72 = vector.broadcast %cst_16 : f32 to vector<16x512xf32>
    %73 = arith.subf %71, %72 : vector<16x512xf32>
    %74 = arith.mulf %73, %69 : vector<16x512xf32>
    %cst_17 = arith.constant 1.42141378 : f32
    %75 = vector.broadcast %cst_17 : f32 to vector<16x512xf32>
    %76 = arith.addf %74, %75 : vector<16x512xf32>
    %77 = arith.mulf %76, %69 : vector<16x512xf32>
    %cst_18 = arith.constant 0.284496725 : f32
    %78 = vector.broadcast %cst_18 : f32 to vector<16x512xf32>
    %79 = arith.subf %77, %78 : vector<16x512xf32>
    %80 = arith.mulf %79, %69 : vector<16x512xf32>
    %cst_19 = arith.constant 0.254829586 : f32
    %81 = vector.broadcast %cst_19 : f32 to vector<16x512xf32>
    %82 = arith.addf %80, %81 : vector<16x512xf32>
    %83 = arith.mulf %82, %69 : vector<16x512xf32>
    %cst_20 = arith.constant 0.000000e+00 : f32
    %84 = vector.broadcast %cst_20 : f32 to vector<16x512xf32>
    %85 = arith.subf %84, %60 : vector<16x512xf32>
    %86 = arith.mulf %85, %60 : vector<16x512xf32>
    %87 = math.exp %86 : vector<16x512xf32>
    %88 = arith.mulf %83, %87 : vector<16x512xf32>
    %cst_21 = arith.constant 1.000000e+00 : f32
    %89 = vector.broadcast %cst_21 : f32 to vector<16x512xf32>
    %90 = arith.subf %89, %88 : vector<16x512xf32>
    %cst_22 = arith.constant 0.000000e+00 : f32
    %91 = vector.broadcast %cst_22 : f32 to vector<16x512xf32>
    %92 = arith.cmpf oge, %59, %91 : vector<16x512xf32>
    %cst_23 = arith.constant 0.000000e+00 : f32
    %93 = vector.broadcast %cst_23 : f32 to vector<16x512xf32>
    %94 = arith.subf %93, %90 : vector<16x512xf32>
    %95 = arith.select %92, %90, %94 : vector<16x512xi1>, vector<16x512xf32>
    %cst_24 = arith.constant 5.000000e-01 : f32
    %96 = vector.broadcast %cst_24 : f32 to vector<16x512xf32>
    %97 = arith.mulf %96, %57 : vector<16x512xf32>
    %cst_25 = arith.constant 1.000000e+00 : f32
    %98 = vector.broadcast %cst_25 : f32 to vector<16x512xf32>
    %99 = arith.addf %98, %95 : vector<16x512xf32>
    %100 = arith.mulf %97, %99 : vector<16x512xf32>
    %c511_i32_26 = arith.constant 511 : i32
    %101 = tpu.dynamic_rotate %100 by %c511_i32_26 dim 1 : vector<16x512xf32>, i32 -> vector<16x512xf32>
    %102 = arith.maximumf %100, %101 : vector<16x512xf32>
    %c496_i32_27 = arith.constant 496 : i32
    %103 = tpu.dynamic_rotate %102 by %c496_i32_27 dim 1 : vector<16x512xf32>, i32 -> vector<16x512xf32>
    %104 = arith.maximumf %102, %103 : vector<16x512xf32>
    %105 = arith.truncf %104 : vector<16x512xf32> to vector<16x512xbf16>
    %c0_28 = arith.constant 0 : index
    %c0_29 = arith.constant 0 : index
    %106 = vector.load %arg13[%c0_28, %c0_29] : memref<512x128xbf16, #tpu.memory_space<vmem>>, vector<512x128xbf16>
    %cst_30 = arith.constant dense<0.000000e+00> : vector<16x128xf32>
    %107 = tpu.matmul %105, %106, %cst_30 {dimension_numbers = #tpu.dot_dimension_numbers<[1], [0], [0], [1], [0, 0, 1, 1], [], []>} : vector<16x512xbf16>, vector<512x128xbf16>, vector<16x128xf32> -> vector<16x128xf32>
    %c0_31 = arith.constant 0 : index
    %c0_32 = arith.constant 0 : index
    %108 = vector.load %arg7[%c0_31, %c0_32] : memref<9x128xf32, #tpu.memory_space<vmem>>, vector<9x128xf32>
    %c9_i32 = arith.constant 9 : i32
    %109 = tpu.dynamic_rotate %107 by %c9_i32 dim 1 : vector<16x128xf32>, i32 -> vector<16x128xf32>
    %110 = vector.extract_strided_slice %108 {offsets = [0, 0], sizes = [1, 128], strides = [1, 1]} : vector<9x128xf32> to vector<1x128xf32>
    %111 = vector.broadcast %110 : vector<1x128xf32> to vector<16x128xf32>
    %112 = arith.mulf %109, %111 : vector<16x128xf32>
    %c8_i32 = arith.constant 8 : i32
    %113 = tpu.dynamic_rotate %107 by %c8_i32 dim 1 : vector<16x128xf32>, i32 -> vector<16x128xf32>
    %114 = vector.extract_strided_slice %108 {offsets = [1, 0], sizes = [1, 128], strides = [1, 1]} : vector<9x128xf32> to vector<1x128xf32>
    %115 = vector.broadcast %114 : vector<1x128xf32> to vector<16x128xf32>
    %116 = arith.mulf %113, %115 : vector<16x128xf32>
    %c7_i32 = arith.constant 7 : i32
    %117 = tpu.dynamic_rotate %107 by %c7_i32 dim 1 : vector<16x128xf32>, i32 -> vector<16x128xf32>
    %118 = vector.extract_strided_slice %108 {offsets = [2, 0], sizes = [1, 128], strides = [1, 1]} : vector<9x128xf32> to vector<1x128xf32>
    %119 = vector.broadcast %118 : vector<1x128xf32> to vector<16x128xf32>
    %120 = arith.mulf %117, %119 : vector<16x128xf32>
    %c1_i32_33 = arith.constant 1 : i32
    %121 = tpu.dynamic_rotate %107 by %c1_i32_33 dim 1 : vector<16x128xf32>, i32 -> vector<16x128xf32>
    %122 = vector.extract_strided_slice %108 {offsets = [3, 0], sizes = [1, 128], strides = [1, 1]} : vector<9x128xf32> to vector<1x128xf32>
    %123 = vector.broadcast %122 : vector<1x128xf32> to vector<16x128xf32>
    %124 = arith.mulf %121, %123 : vector<16x128xf32>
    %c127_i32 = arith.constant 127 : i32
    %125 = tpu.dynamic_rotate %107 by %c127_i32 dim 1 : vector<16x128xf32>, i32 -> vector<16x128xf32>
    %126 = vector.extract_strided_slice %108 {offsets = [5, 0], sizes = [1, 128], strides = [1, 1]} : vector<9x128xf32> to vector<1x128xf32>
    %127 = vector.broadcast %126 : vector<1x128xf32> to vector<16x128xf32>
    %128 = arith.mulf %125, %127 : vector<16x128xf32>
    %c121_i32 = arith.constant 121 : i32
    %129 = tpu.dynamic_rotate %107 by %c121_i32 dim 1 : vector<16x128xf32>, i32 -> vector<16x128xf32>
    %130 = vector.extract_strided_slice %108 {offsets = [6, 0], sizes = [1, 128], strides = [1, 1]} : vector<9x128xf32> to vector<1x128xf32>
    %131 = vector.broadcast %130 : vector<1x128xf32> to vector<16x128xf32>
    %132 = arith.mulf %129, %131 : vector<16x128xf32>
    %c120_i32 = arith.constant 120 : i32
    %133 = tpu.dynamic_rotate %107 by %c120_i32 dim 1 : vector<16x128xf32>, i32 -> vector<16x128xf32>
    %134 = vector.extract_strided_slice %108 {offsets = [7, 0], sizes = [1, 128], strides = [1, 1]} : vector<9x128xf32> to vector<1x128xf32>
    %135 = vector.broadcast %134 : vector<1x128xf32> to vector<16x128xf32>
    %136 = arith.mulf %133, %135 : vector<16x128xf32>
    %c119_i32 = arith.constant 119 : i32
    %137 = tpu.dynamic_rotate %107 by %c119_i32 dim 1 : vector<16x128xf32>, i32 -> vector<16x128xf32>
    %138 = vector.extract_strided_slice %108 {offsets = [8, 0], sizes = [1, 128], strides = [1, 1]} : vector<9x128xf32> to vector<1x128xf32>
    %139 = vector.broadcast %138 : vector<1x128xf32> to vector<16x128xf32>
    %140 = arith.mulf %137, %139 : vector<16x128xf32>
    %141 = tpu.concatenate %112, %116, %120, %124, %107, %128, %132, %136, %140 in 0 : vector<16x128xf32>, vector<16x128xf32>, vector<16x128xf32>, vector<16x128xf32>, vector<16x128xf32>, vector<16x128xf32>, vector<16x128xf32>, vector<16x128xf32>, vector<16x128xf32> -> vector<144x128xf32>
    %142 = arith.truncf %141 : vector<144x128xf32> to vector<144x128xbf16>
    %c0_34 = arith.constant 0 : index
    %c0_35 = arith.constant 0 : index
    %143 = vector.load %arg5[%c0_34, %c0_35] : memref<32x144xbf16, #tpu.memory_space<vmem>>, vector<32x144xbf16>
    %cst_36 = arith.constant dense<0.000000e+00> : vector<32x128xf32>
    %144 = tpu.matmul %143, %142, %cst_36 {dimension_numbers = #tpu.dot_dimension_numbers<[1], [0], [0], [1], [0, 0, 1, 1], [], []>} : vector<32x144xbf16>, vector<144x128xbf16>, vector<32x128xf32> -> vector<32x128xf32>
    %cst_37 = arith.constant dense<0.000000e+00> : vector<32xf32>
    %145 = vector.multi_reduction <add>, %144, %cst_37 [1] : vector<32x128xf32> to vector<32xf32>
    %146 = vector.shape_cast %145 : vector<32xf32> to vector<32x1xf32>
    %cst_38 = arith.constant 1.280000e+02 : f32
    %147 = vector.broadcast %cst_38 : f32 to vector<32x1xf32>
    %148 = arith.divf %146, %147 : vector<32x1xf32>
    %149 = vector.broadcast %148 : vector<32x1xf32> to vector<32x128xf32>
    %150 = arith.subf %144, %149 : vector<32x128xf32>
    %151 = arith.mulf %150, %150 : vector<32x128xf32>
    %cst_39 = arith.constant dense<0.000000e+00> : vector<32xf32>
    %152 = vector.multi_reduction <add>, %151, %cst_39 [1] : vector<32x128xf32> to vector<32xf32>
    %153 = vector.shape_cast %152 : vector<32xf32> to vector<32x1xf32>
    %cst_40 = arith.constant 1.280000e+02 : f32
    %154 = vector.broadcast %cst_40 : f32 to vector<32x1xf32>
    %155 = arith.divf %153, %154 : vector<32x1xf32>
    %156 = vector.broadcast %148 : vector<32x1xf32> to vector<32x128xf32>
    %157 = arith.subf %144, %156 : vector<32x128xf32>
    %cst_41 = arith.constant 1.100000e+00 : f32
    %158 = vector.broadcast %cst_41 : f32 to vector<32x128xf32>
    %159 = arith.mulf %158, %157 : vector<32x128xf32>
    %cst_42 = arith.constant 9.99999974E-6 : f32
    %160 = vector.broadcast %cst_42 : f32 to vector<32x1xf32>
    %161 = arith.addf %155, %160 : vector<32x1xf32>
    %162 = math.rsqrt %161 : vector<32x1xf32>
    %163 = vector.broadcast %162 : vector<32x1xf32> to vector<32x128xf32>
    %164 = arith.mulf %159, %163 : vector<32x128xf32>
    %cst_43 = arith.constant 0.707106769 : f32
    %165 = vector.broadcast %cst_43 : f32 to vector<32x128xf32>
    %166 = arith.mulf %164, %165 : vector<32x128xf32>
    %167 = math.absf %166 : vector<32x128xf32>
    %cst_44 = arith.constant 0.327591091 : f32
    %168 = vector.broadcast %cst_44 : f32 to vector<32x128xf32>
    %169 = arith.mulf %168, %167 : vector<32x128xf32>
    %cst_45 = arith.constant 1.000000e+00 : f32
    %170 = vector.broadcast %cst_45 : f32 to vector<32x128xf32>
    %171 = arith.addf %170, %169 : vector<32x128xf32>
    %172 = tpu.reciprocal %171 {approx = true} : vector<32x128xf32> -> vector<32x128xf32>
    %173 = arith.mulf %171, %172 : vector<32x128xf32>
    %cst_46 = arith.constant 2.000000e+00 : f32
    %174 = vector.broadcast %cst_46 : f32 to vector<32x128xf32>
    %175 = arith.subf %174, %173 : vector<32x128xf32>
    %176 = arith.mulf %172, %175 : vector<32x128xf32>
    %cst_47 = arith.constant 1.06140542 : f32
    %177 = vector.broadcast %cst_47 : f32 to vector<32x128xf32>
    %178 = arith.mulf %177, %176 : vector<32x128xf32>
    %cst_48 = arith.constant 1.45315206 : f32
    %179 = vector.broadcast %cst_48 : f32 to vector<32x128xf32>
    %180 = arith.subf %178, %179 : vector<32x128xf32>
    %181 = arith.mulf %180, %176 : vector<32x128xf32>
    %cst_49 = arith.constant 1.42141378 : f32
    %182 = vector.broadcast %cst_49 : f32 to vector<32x128xf32>
    %183 = arith.addf %181, %182 : vector<32x128xf32>
    %184 = arith.mulf %183, %176 : vector<32x128xf32>
    %cst_50 = arith.constant 0.284496725 : f32
    %185 = vector.broadcast %cst_50 : f32 to vector<32x128xf32>
    %186 = arith.subf %184, %185 : vector<32x128xf32>
    %187 = arith.mulf %186, %176 : vector<32x128xf32>
    %cst_51 = arith.constant 0.254829586 : f32
    %188 = vector.broadcast %cst_51 : f32 to vector<32x128xf32>
    %189 = arith.addf %187, %188 : vector<32x128xf32>
    %190 = arith.mulf %189, %176 : vector<32x128xf32>
    %cst_52 = arith.constant 0.000000e+00 : f32
    %191 = vector.broadcast %cst_52 : f32 to vector<32x128xf32>
    %192 = arith.subf %191, %167 : vector<32x128xf32>
    %193 = arith.mulf %192, %167 : vector<32x128xf32>
    %194 = math.exp %193 : vector<32x128xf32>
    %195 = arith.mulf %190, %194 : vector<32x128xf32>
    %cst_53 = arith.constant 1.000000e+00 : f32
    %196 = vector.broadcast %cst_53 : f32 to vector<32x128xf32>
    %197 = arith.subf %196, %195 : vector<32x128xf32>
    %cst_54 = arith.constant 0.000000e+00 : f32
    %198 = vector.broadcast %cst_54 : f32 to vector<32x128xf32>
    %199 = arith.cmpf oge, %166, %198 : vector<32x128xf32>
    %cst_55 = arith.constant 0.000000e+00 : f32
    %200 = vector.broadcast %cst_55 : f32 to vector<32x128xf32>
    %201 = arith.subf %200, %197 : vector<32x128xf32>
    %202 = arith.select %199, %197, %201 : vector<32x128xi1>, vector<32x128xf32>
    %cst_56 = arith.constant 5.000000e-01 : f32
    %203 = vector.broadcast %cst_56 : f32 to vector<32x128xf32>
    %204 = arith.mulf %203, %164 : vector<32x128xf32>
    %cst_57 = arith.constant 1.000000e+00 : f32
    %205 = vector.broadcast %cst_57 : f32 to vector<32x128xf32>
    %206 = arith.addf %205, %202 : vector<32x128xf32>
    %207 = arith.mulf %204, %206 : vector<32x128xf32>
    %c127_i32_58 = arith.constant 127 : i32
    %208 = tpu.dynamic_rotate %207 by %c127_i32_58 dim 1 : vector<32x128xf32>, i32 -> vector<32x128xf32>
    %209 = arith.maximumf %207, %208 : vector<32x128xf32>
    %c120_i32_59 = arith.constant 120 : i32
    %210 = tpu.dynamic_rotate %209 by %c120_i32_59 dim 1 : vector<32x128xf32>, i32 -> vector<32x128xf32>
    %211 = arith.maximumf %209, %210 : vector<32x128xf32>
    %212 = arith.truncf %211 : vector<32x128xf32> to vector<32x128xbf16>
    %c0_60 = arith.constant 0 : index
    %c0_61 = arith.constant 0 : index
    %213 = vector.load %arg14[%c0_60, %c0_61] : memref<128x32xbf16, #tpu.memory_space<vmem>>, vector<128x32xbf16>
    %cst_62 = arith.constant dense<0.000000e+00> : vector<32x32xf32>
    %214 = tpu.matmul %212, %213, %cst_62 {dimension_numbers = #tpu.dot_dimension_numbers<[1], [0], [0], [1], [0, 0, 1, 1], [], []>} : vector<32x128xbf16>, vector<128x32xbf16>, vector<32x32xf32> -> vector<32x32xf32>
    %c0_63 = arith.constant 0 : index
    %c0_64 = arith.constant 0 : index
    %c0_65 = arith.constant 0 : index
    %215 = vector.load %arg12[%c0_63, %c0_64, %c0_65] : memref<9x32x32xbf16, #tpu.memory_space<vmem>>, vector<1x32x32xbf16>
    %216 = vector.shape_cast %215 : vector<1x32x32xbf16> to vector<32x32xbf16>
    %c1 = arith.constant 1 : index
    %c0_66 = arith.constant 0 : index
    %c0_67 = arith.constant 0 : index
    %217 = vector.load %arg12[%c1, %c0_66, %c0_67] : memref<9x32x32xbf16, #tpu.memory_space<vmem>>, vector<1x32x32xbf16>
    %218 = vector.shape_cast %217 : vector<1x32x32xbf16> to vector<32x32xbf16>
    %c2 = arith.constant 2 : index
    %c0_68 = arith.constant 0 : index
    %c0_69 = arith.constant 0 : index
    %219 = vector.load %arg12[%c2, %c0_68, %c0_69] : memref<9x32x32xbf16, #tpu.memory_space<vmem>>, vector<1x32x32xbf16>
    %220 = vector.shape_cast %219 : vector<1x32x32xbf16> to vector<32x32xbf16>
    %c3 = arith.constant 3 : index
    %c0_70 = arith.constant 0 : index
    %c0_71 = arith.constant 0 : index
    %221 = vector.load %arg12[%c3, %c0_70, %c0_71] : memref<9x32x32xbf16, #tpu.memory_space<vmem>>, vector<1x32x32xbf16>
    %222 = vector.shape_cast %221 : vector<1x32x32xbf16> to vector<32x32xbf16>
    %c5 = arith.constant 5 : index
    %c0_72 = arith.constant 0 : index
    %c0_73 = arith.constant 0 : index
    %223 = vector.load %arg12[%c5, %c0_72, %c0_73] : memref<9x32x32xbf16, #tpu.memory_space<vmem>>, vector<1x32x32xbf16>
    %224 = vector.shape_cast %223 : vector<1x32x32xbf16> to vector<32x32xbf16>
    %c6 = arith.constant 6 : index
    %c0_74 = arith.constant 0 : index
    %c0_75 = arith.constant 0 : index
    %225 = vector.load %arg12[%c6, %c0_74, %c0_75] : memref<9x32x32xbf16, #tpu.memory_space<vmem>>, vector<1x32x32xbf16>
    %226 = vector.shape_cast %225 : vector<1x32x32xbf16> to vector<32x32xbf16>
    %c7 = arith.constant 7 : index
    %c0_76 = arith.constant 0 : index
    %c0_77 = arith.constant 0 : index
    %227 = vector.load %arg12[%c7, %c0_76, %c0_77] : memref<9x32x32xbf16, #tpu.memory_space<vmem>>, vector<1x32x32xbf16>
    %228 = vector.shape_cast %227 : vector<1x32x32xbf16> to vector<32x32xbf16>
    %c8 = arith.constant 8 : index
    %c0_78 = arith.constant 0 : index
    %c0_79 = arith.constant 0 : index
    %229 = vector.load %arg12[%c8, %c0_78, %c0_79] : memref<9x32x32xbf16, #tpu.memory_space<vmem>>, vector<1x32x32xbf16>
    %230 = vector.shape_cast %229 : vector<1x32x32xbf16> to vector<32x32xbf16>
    %231 = arith.truncf %214 : vector<32x32xf32> to vector<32x32xbf16>
    %cst_80 = arith.constant dense<0.000000e+00> : vector<32x32xf32>
    %232 = tpu.matmul %231, %216, %cst_80 {dimension_numbers = #tpu.dot_dimension_numbers<[1], [0], [0], [1], [0, 0, 1, 1], [], []>} : vector<32x32xbf16>, vector<32x32xbf16>, vector<32x32xf32> -> vector<32x32xf32>
    %cst_81 = arith.constant dense<0.000000e+00> : vector<32x32xf32>
    %233 = tpu.matmul %231, %218, %cst_81 {dimension_numbers = #tpu.dot_dimension_numbers<[1], [0], [0], [1], [0, 0, 1, 1], [], []>} : vector<32x32xbf16>, vector<32x32xbf16>, vector<32x32xf32> -> vector<32x32xf32>
    %cst_82 = arith.constant dense<0.000000e+00> : vector<32x32xf32>
    %234 = tpu.matmul %231, %220, %cst_82 {dimension_numbers = #tpu.dot_dimension_numbers<[1], [0], [0], [1], [0, 0, 1, 1], [], []>} : vector<32x32xbf16>, vector<32x32xbf16>, vector<32x32xf32> -> vector<32x32xf32>
    %cst_83 = arith.constant dense<0.000000e+00> : vector<32x32xf32>
    %235 = tpu.matmul %231, %222, %cst_83 {dimension_numbers = #tpu.dot_dimension_numbers<[1], [0], [0], [1], [0, 0, 1, 1], [], []>} : vector<32x32xbf16>, vector<32x32xbf16>, vector<32x32xf32> -> vector<32x32xf32>
    %cst_84 = arith.constant dense<0.000000e+00> : vector<32x32xf32>
    %236 = tpu.matmul %231, %224, %cst_84 {dimension_numbers = #tpu.dot_dimension_numbers<[1], [0], [0], [1], [0, 0, 1, 1], [], []>} : vector<32x32xbf16>, vector<32x32xbf16>, vector<32x32xf32> -> vector<32x32xf32>
    %cst_85 = arith.constant dense<0.000000e+00> : vector<32x32xf32>
    %237 = tpu.matmul %231, %226, %cst_85 {dimension_numbers = #tpu.dot_dimension_numbers<[1], [0], [0], [1], [0, 0, 1, 1], [], []>} : vector<32x32xbf16>, vector<32x32xbf16>, vector<32x32xf32> -> vector<32x32xf32>
    %cst_86 = arith.constant dense<0.000000e+00> : vector<32x32xf32>
    %238 = tpu.matmul %231, %228, %cst_86 {dimension_numbers = #tpu.dot_dimension_numbers<[1], [0], [0], [1], [0, 0, 1, 1], [], []>} : vector<32x32xbf16>, vector<32x32xbf16>, vector<32x32xf32> -> vector<32x32xf32>
    %cst_87 = arith.constant dense<0.000000e+00> : vector<32x32xf32>
    %239 = tpu.matmul %231, %230, %cst_87 {dimension_numbers = #tpu.dot_dimension_numbers<[1], [0], [0], [1], [0, 0, 1, 1], [], []>} : vector<32x32xbf16>, vector<32x32xbf16>, vector<32x32xf32> -> vector<32x32xf32>
    %240 = tpu.concatenate %232, %233, %234, %235, %214, %236, %237, %238, %239 in 0 : vector<32x32xf32>, vector<32x32xf32>, vector<32x32xf32>, vector<32x32xf32>, vector<32x32xf32>, vector<32x32xf32>, vector<32x32xf32>, vector<32x32xf32>, vector<32x32xf32> -> vector<288x32xf32>
    %241 = arith.truncf %240 : vector<288x32xf32> to vector<288x32xbf16>
    %c0_88 = arith.constant 0 : index
    %c0_89 = arith.constant 0 : index
    %242 = vector.load %arg8[%c0_88, %c0_89] : memref<32x288xbf16, #tpu.memory_space<vmem>>, vector<32x288xbf16>
    %cst_90 = arith.constant dense<0.000000e+00> : vector<32x32xf32>
    %243 = tpu.matmul %242, %241, %cst_90 {dimension_numbers = #tpu.dot_dimension_numbers<[1], [0], [0], [1], [0, 0, 1, 1], [], []>} : vector<32x288xbf16>, vector<288x32xbf16>, vector<32x32xf32> -> vector<32x32xf32>
    %cst_91 = arith.constant dense<0.000000e+00> : vector<32xf32>
    %244 = vector.multi_reduction <add>, %243, %cst_91 [1] : vector<32x32xf32> to vector<32xf32>
    %245 = vector.shape_cast %244 : vector<32xf32> to vector<32x1xf32>
    %cst_92 = arith.constant 3.200000e+01 : f32
    %246 = vector.broadcast %cst_92 : f32 to vector<32x1xf32>
    %247 = arith.divf %245, %246 : vector<32x1xf32>
    %248 = vector.broadcast %247 : vector<32x1xf32> to vector<32x32xf32>
    %249 = arith.subf %243, %248 : vector<32x32xf32>
    %250 = arith.mulf %249, %249 : vector<32x32xf32>
    %cst_93 = arith.constant dense<0.000000e+00> : vector<32xf32>
    %251 = vector.multi_reduction <add>, %250, %cst_93 [1] : vector<32x32xf32> to vector<32xf32>
    %252 = vector.shape_cast %251 : vector<32xf32> to vector<32x1xf32>
    %cst_94 = arith.constant 3.200000e+01 : f32
    %253 = vector.broadcast %cst_94 : f32 to vector<32x1xf32>
    %254 = arith.divf %252, %253 : vector<32x1xf32>
    %255 = vector.broadcast %247 : vector<32x1xf32> to vector<32x32xf32>
    %256 = arith.subf %243, %255 : vector<32x32xf32>
    %cst_95 = arith.constant 1.100000e+00 : f32
    %257 = vector.broadcast %cst_95 : f32 to vector<32x32xf32>
    %258 = arith.mulf %257, %256 : vector<32x32xf32>
    %cst_96 = arith.constant 9.99999974E-6 : f32
    %259 = vector.broadcast %cst_96 : f32 to vector<32x1xf32>
    %260 = arith.addf %254, %259 : vector<32x1xf32>
    %261 = math.rsqrt %260 : vector<32x1xf32>
    %262 = vector.broadcast %261 : vector<32x1xf32> to vector<32x32xf32>
    %263 = arith.mulf %258, %262 : vector<32x32xf32>
    %cst_97 = arith.constant 0.707106769 : f32
    %264 = vector.broadcast %cst_97 : f32 to vector<32x32xf32>
    %265 = arith.mulf %263, %264 : vector<32x32xf32>
    %266 = math.absf %265 : vector<32x32xf32>
    %cst_98 = arith.constant 0.327591091 : f32
    %267 = vector.broadcast %cst_98 : f32 to vector<32x32xf32>
    %268 = arith.mulf %267, %266 : vector<32x32xf32>
    %cst_99 = arith.constant 1.000000e+00 : f32
    %269 = vector.broadcast %cst_99 : f32 to vector<32x32xf32>
    %270 = arith.addf %269, %268 : vector<32x32xf32>
    %271 = tpu.reciprocal %270 {approx = true} : vector<32x32xf32> -> vector<32x32xf32>
    %272 = arith.mulf %270, %271 : vector<32x32xf32>
    %cst_100 = arith.constant 2.000000e+00 : f32
    %273 = vector.broadcast %cst_100 : f32 to vector<32x32xf32>
    %274 = arith.subf %273, %272 : vector<32x32xf32>
    %275 = arith.mulf %271, %274 : vector<32x32xf32>
    %cst_101 = arith.constant 1.06140542 : f32
    %276 = vector.broadcast %cst_101 : f32 to vector<32x32xf32>
    %277 = arith.mulf %276, %275 : vector<32x32xf32>
    %cst_102 = arith.constant 1.45315206 : f32
    %278 = vector.broadcast %cst_102 : f32 to vector<32x32xf32>
    %279 = arith.subf %277, %278 : vector<32x32xf32>
    %280 = arith.mulf %279, %275 : vector<32x32xf32>
    %cst_103 = arith.constant 1.42141378 : f32
    %281 = vector.broadcast %cst_103 : f32 to vector<32x32xf32>
    %282 = arith.addf %280, %281 : vector<32x32xf32>
    %283 = arith.mulf %282, %275 : vector<32x32xf32>
    %cst_104 = arith.constant 0.284496725 : f32
    %284 = vector.broadcast %cst_104 : f32 to vector<32x32xf32>
    %285 = arith.subf %283, %284 : vector<32x32xf32>
    %286 = arith.mulf %285, %275 : vector<32x32xf32>
    %cst_105 = arith.constant 0.254829586 : f32
    %287 = vector.broadcast %cst_105 : f32 to vector<32x32xf32>
    %288 = arith.addf %286, %287 : vector<32x32xf32>
    %289 = arith.mulf %288, %275 : vector<32x32xf32>
    %cst_106 = arith.constant 0.000000e+00 : f32
    %290 = vector.broadcast %cst_106 : f32 to vector<32x32xf32>
    %291 = arith.subf %290, %266 : vector<32x32xf32>
    %292 = arith.mulf %291, %266 : vector<32x32xf32>
    %293 = math.exp %292 : vector<32x32xf32>
    %294 = arith.mulf %289, %293 : vector<32x32xf32>
    %cst_107 = arith.constant 1.000000e+00 : f32
    %295 = vector.broadcast %cst_107 : f32 to vector<32x32xf32>
    %296 = arith.subf %295, %294 : vector<32x32xf32>
    %cst_108 = arith.constant 0.000000e+00 : f32
    %297 = vector.broadcast %cst_108 : f32 to vector<32x32xf32>
    %298 = arith.cmpf oge, %265, %297 : vector<32x32xf32>
    %cst_109 = arith.constant 0.000000e+00 : f32
    %299 = vector.broadcast %cst_109 : f32 to vector<32x32xf32>
    %300 = arith.subf %299, %296 : vector<32x32xf32>
    %301 = arith.select %298, %296, %300 : vector<32x32xi1>, vector<32x32xf32>
    %cst_110 = arith.constant 5.000000e-01 : f32
    %302 = vector.broadcast %cst_110 : f32 to vector<32x32xf32>
    %303 = arith.mulf %302, %263 : vector<32x32xf32>
    %cst_111 = arith.constant 1.000000e+00 : f32
    %304 = vector.broadcast %cst_111 : f32 to vector<32x32xf32>
    %305 = arith.addf %304, %301 : vector<32x32xf32>
    %306 = arith.mulf %303, %305 : vector<32x32xf32>
    %307 = arith.truncf %306 : vector<32x32xf32> to vector<32x32xbf16>
    %cst_112 = arith.constant dense<0.000000e+00> : vector<32x32xf32>
    %308 = tpu.matmul %307, %216, %cst_112 {dimension_numbers = #tpu.dot_dimension_numbers<[1], [0], [0], [1], [0, 0, 1, 1], [], []>} : vector<32x32xbf16>, vector<32x32xbf16>, vector<32x32xf32> -> vector<32x32xf32>
    %cst_113 = arith.constant dense<0.000000e+00> : vector<32x32xf32>
    %309 = tpu.matmul %307, %218, %cst_113 {dimension_numbers = #tpu.dot_dimension_numbers<[1], [0], [0], [1], [0, 0, 1, 1], [], []>} : vector<32x32xbf16>, vector<32x32xbf16>, vector<32x32xf32> -> vector<32x32xf32>
    %cst_114 = arith.constant dense<0.000000e+00> : vector<32x32xf32>
    %310 = tpu.matmul %307, %220, %cst_114 {dimension_numbers = #tpu.dot_dimension_numbers<[1], [0], [0], [1], [0, 0, 1, 1], [], []>} : vector<32x32xbf16>, vector<32x32xbf16>, vector<32x32xf32> -> vector<32x32xf32>
    %cst_115 = arith.constant dense<0.000000e+00> : vector<32x32xf32>
    %311 = tpu.matmul %307, %222, %cst_115 {dimension_numbers = #tpu.dot_dimension_numbers<[1], [0], [0], [1], [0, 0, 1, 1], [], []>} : vector<32x32xbf16>, vector<32x32xbf16>, vector<32x32xf32> -> vector<32x32xf32>
    %cst_116 = arith.constant dense<0.000000e+00> : vector<32x32xf32>
    %312 = tpu.matmul %307, %224, %cst_116 {dimension_numbers = #tpu.dot_dimension_numbers<[1], [0], [0], [1], [0, 0, 1, 1], [], []>} : vector<32x32xbf16>, vector<32x32xbf16>, vector<32x32xf32> -> vector<32x32xf32>
    %cst_117 = arith.constant dense<0.000000e+00> : vector<32x32xf32>
    %313 = tpu.matmul %307, %226, %cst_117 {dimension_numbers = #tpu.dot_dimension_numbers<[1], [0], [0], [1], [0, 0, 1, 1], [], []>} : vector<32x32xbf16>, vector<32x32xbf16>, vector<32x32xf32> -> vector<32x32xf32>
    %cst_118 = arith.constant dense<0.000000e+00> : vector<32x32xf32>
    %314 = tpu.matmul %307, %228, %cst_118 {dimension_numbers = #tpu.dot_dimension_numbers<[1], [0], [0], [1], [0, 0, 1, 1], [], []>} : vector<32x32xbf16>, vector<32x32xbf16>, vector<32x32xf32> -> vector<32x32xf32>
    %cst_119 = arith.constant dense<0.000000e+00> : vector<32x32xf32>
    %315 = tpu.matmul %307, %230, %cst_119 {dimension_numbers = #tpu.dot_dimension_numbers<[1], [0], [0], [1], [0, 0, 1, 1], [], []>} : vector<32x32xbf16>, vector<32x32xbf16>, vector<32x32xf32> -> vector<32x32xf32>
    %316 = tpu.concatenate %308, %309, %310, %311, %306, %312, %313, %314, %315 in 0 : vector<32x32xf32>, vector<32x32xf32>, vector<32x32xf32>, vector<32x32xf32>, vector<32x32xf32>, vector<32x32xf32>, vector<32x32xf32>, vector<32x32xf32>, vector<32x32xf32> -> vector<288x32xf32>
    %317 = arith.truncf %316 : vector<288x32xf32> to vector<288x32xbf16>
    %c0_120 = arith.constant 0 : index
    %c0_121 = arith.constant 0 : index
    %318 = vector.load %arg10[%c0_120, %c0_121] : memref<32x288xbf16, #tpu.memory_space<vmem>>, vector<32x288xbf16>
    %cst_122 = arith.constant dense<0.000000e+00> : vector<32x32xf32>
    %319 = tpu.matmul %318, %317, %cst_122 {dimension_numbers = #tpu.dot_dimension_numbers<[1], [0], [0], [1], [0, 0, 1, 1], [], []>} : vector<32x288xbf16>, vector<288x32xbf16>, vector<32x32xf32> -> vector<32x32xf32>
    %cst_123 = arith.constant dense<0.000000e+00> : vector<32xf32>
    %320 = vector.multi_reduction <add>, %319, %cst_123 [1] : vector<32x32xf32> to vector<32xf32>
    %321 = vector.shape_cast %320 : vector<32xf32> to vector<32x1xf32>
    %cst_124 = arith.constant 3.200000e+01 : f32
    %322 = vector.broadcast %cst_124 : f32 to vector<32x1xf32>
    %323 = arith.divf %321, %322 : vector<32x1xf32>
    %324 = vector.broadcast %323 : vector<32x1xf32> to vector<32x32xf32>
    %325 = arith.subf %319, %324 : vector<32x32xf32>
    %326 = arith.mulf %325, %325 : vector<32x32xf32>
    %cst_125 = arith.constant dense<0.000000e+00> : vector<32xf32>
    %327 = vector.multi_reduction <add>, %326, %cst_125 [1] : vector<32x32xf32> to vector<32xf32>
    %328 = vector.shape_cast %327 : vector<32xf32> to vector<32x1xf32>
    %cst_126 = arith.constant 3.200000e+01 : f32
    %329 = vector.broadcast %cst_126 : f32 to vector<32x1xf32>
    %330 = arith.divf %328, %329 : vector<32x1xf32>
    %331 = vector.broadcast %323 : vector<32x1xf32> to vector<32x32xf32>
    %332 = arith.subf %319, %331 : vector<32x32xf32>
    %cst_127 = arith.constant 1.100000e+00 : f32
    %333 = vector.broadcast %cst_127 : f32 to vector<32x32xf32>
    %334 = arith.mulf %333, %332 : vector<32x32xf32>
    %cst_128 = arith.constant 9.99999974E-6 : f32
    %335 = vector.broadcast %cst_128 : f32 to vector<32x1xf32>
    %336 = arith.addf %330, %335 : vector<32x1xf32>
    %337 = math.rsqrt %336 : vector<32x1xf32>
    %338 = vector.broadcast %337 : vector<32x1xf32> to vector<32x32xf32>
    %339 = arith.mulf %334, %338 : vector<32x32xf32>
    %cst_129 = arith.constant 0.707106769 : f32
    %340 = vector.broadcast %cst_129 : f32 to vector<32x32xf32>
    %341 = arith.mulf %339, %340 : vector<32x32xf32>
    %342 = math.absf %341 : vector<32x32xf32>
    %cst_130 = arith.constant 0.327591091 : f32
    %343 = vector.broadcast %cst_130 : f32 to vector<32x32xf32>
    %344 = arith.mulf %343, %342 : vector<32x32xf32>
    %cst_131 = arith.constant 1.000000e+00 : f32
    %345 = vector.broadcast %cst_131 : f32 to vector<32x32xf32>
    %346 = arith.addf %345, %344 : vector<32x32xf32>
    %347 = tpu.reciprocal %346 {approx = true} : vector<32x32xf32> -> vector<32x32xf32>
    %348 = arith.mulf %346, %347 : vector<32x32xf32>
    %cst_132 = arith.constant 2.000000e+00 : f32
    %349 = vector.broadcast %cst_132 : f32 to vector<32x32xf32>
    %350 = arith.subf %349, %348 : vector<32x32xf32>
    %351 = arith.mulf %347, %350 : vector<32x32xf32>
    %cst_133 = arith.constant 1.06140542 : f32
    %352 = vector.broadcast %cst_133 : f32 to vector<32x32xf32>
    %353 = arith.mulf %352, %351 : vector<32x32xf32>
    %cst_134 = arith.constant 1.45315206 : f32
    %354 = vector.broadcast %cst_134 : f32 to vector<32x32xf32>
    %355 = arith.subf %353, %354 : vector<32x32xf32>
    %356 = arith.mulf %355, %351 : vector<32x32xf32>
    %cst_135 = arith.constant 1.42141378 : f32
    %357 = vector.broadcast %cst_135 : f32 to vector<32x32xf32>
    %358 = arith.addf %356, %357 : vector<32x32xf32>
    %359 = arith.mulf %358, %351 : vector<32x32xf32>
    %cst_136 = arith.constant 0.284496725 : f32
    %360 = vector.broadcast %cst_136 : f32 to vector<32x32xf32>
    %361 = arith.subf %359, %360 : vector<32x32xf32>
    %362 = arith.mulf %361, %351 : vector<32x32xf32>
    %cst_137 = arith.constant 0.254829586 : f32
    %363 = vector.broadcast %cst_137 : f32 to vector<32x32xf32>
    %364 = arith.addf %362, %363 : vector<32x32xf32>
    %365 = arith.mulf %364, %351 : vector<32x32xf32>
    %cst_138 = arith.constant 0.000000e+00 : f32
    %366 = vector.broadcast %cst_138 : f32 to vector<32x32xf32>
    %367 = arith.subf %366, %342 : vector<32x32xf32>
    %368 = arith.mulf %367, %342 : vector<32x32xf32>
    %369 = math.exp %368 : vector<32x32xf32>
    %370 = arith.mulf %365, %369 : vector<32x32xf32>
    %cst_139 = arith.constant 1.000000e+00 : f32
    %371 = vector.broadcast %cst_139 : f32 to vector<32x32xf32>
    %372 = arith.subf %371, %370 : vector<32x32xf32>
    %cst_140 = arith.constant 0.000000e+00 : f32
    %373 = vector.broadcast %cst_140 : f32 to vector<32x32xf32>
    %374 = arith.cmpf oge, %341, %373 : vector<32x32xf32>
    %cst_141 = arith.constant 0.000000e+00 : f32
    %375 = vector.broadcast %cst_141 : f32 to vector<32x32xf32>
    %376 = arith.subf %375, %372 : vector<32x32xf32>
    %377 = arith.select %374, %372, %376 : vector<32x32xi1>, vector<32x32xf32>
    %cst_142 = arith.constant 5.000000e-01 : f32
    %378 = vector.broadcast %cst_142 : f32 to vector<32x32xf32>
    %379 = arith.mulf %378, %339 : vector<32x32xf32>
    %cst_143 = arith.constant 1.000000e+00 : f32
    %380 = vector.broadcast %cst_143 : f32 to vector<32x32xf32>
    %381 = arith.addf %380, %377 : vector<32x32xf32>
    %382 = arith.mulf %379, %381 : vector<32x32xf32>
    %383 = arith.truncf %382 : vector<32x32xf32> to vector<32x32xbf16>
    %cst_144 = arith.constant dense<0.000000e+00> : vector<32x32xf32>
    %384 = tpu.matmul %383, %224, %cst_144 {dimension_numbers = #tpu.dot_dimension_numbers<[1], [0], [0], [1], [0, 0, 1, 1], [], []>} : vector<32x32xbf16>, vector<32x32xbf16>, vector<32x32xf32> -> vector<32x32xf32>
    %385 = arith.maximumf %382, %384 : vector<32x32xf32>
    %386 = arith.truncf %385 : vector<32x32xf32> to vector<32x32xbf16>
    %cst_145 = arith.constant dense<0.000000e+00> : vector<32x32xf32>
    %387 = tpu.matmul %386, %228, %cst_145 {dimension_numbers = #tpu.dot_dimension_numbers<[1], [0], [0], [1], [0, 0, 1, 1], [], []>} : vector<32x32xbf16>, vector<32x32xbf16>, vector<32x32xf32> -> vector<32x32xf32>
    %388 = arith.maximumf %385, %387 : vector<32x32xf32>
    %c0_146 = arith.constant 0 : index
    %c0_147 = arith.constant 0 : index
    %389 = vector.load %arg15[%c0_146, %c0_147] : memref<2x32xbf16, #tpu.memory_space<vmem>>, vector<2x32xbf16>
    %390 = arith.truncf %388 : vector<32x32xf32> to vector<32x32xbf16>
    "tpu.trace_start"() <{level = 10 : i32, message = "bj,cj->bc"}> : () -> ()
    %cst_148 = arith.constant dense<0.000000e+00> : vector<2x32xf32>
    %391 = tpu.matmul %389, %390, %cst_148 {dimension_numbers = #tpu.dot_dimension_numbers<[1], [1], [0], [0], [0, 0, 1, 0], [], []>} : vector<2x32xbf16>, vector<32x32xbf16>, vector<2x32xf32> -> vector<2x32xf32>
    "tpu.trace_stop"() : () -> ()
    %392 = arith.truncf %391 : vector<2x32xf32> to vector<2x32xbf16>
    %c0_149 = arith.constant 0 : index
    %c0_150 = arith.constant 0 : index
    %393 = vector.load %arg16[%c0_149, %c0_150] : memref<32x32xbf16, #tpu.memory_space<vmem>>, vector<32x32xbf16>
    %cst_151 = arith.constant dense<0.000000e+00> : vector<2x32xf32>
    %394 = tpu.matmul %392, %393, %cst_151 {dimension_numbers = #tpu.dot_dimension_numbers<[1], [0], [0], [1], [0, 0, 1, 1], [], []>} : vector<2x32xbf16>, vector<32x32xbf16>, vector<2x32xf32> -> vector<2x32xf32>
    %cst_152 = arith.constant dense<0.000000e+00> : vector<32xf32>
    %395 = vector.multi_reduction <add>, %394, %cst_152 [0] : vector<2x32xf32> to vector<32xf32>
    %396 = vector.shape_cast %395 : vector<32xf32> to vector<1x32xf32>
    %cst_153 = arith.constant 2.000000e+00 : f32
    %397 = vector.broadcast %cst_153 : f32 to vector<1x32xf32>
    %398 = arith.divf %396, %397 : vector<1x32xf32>
    %399 = vector.broadcast %398 : vector<1x32xf32> to vector<2x32xf32>
    %400 = arith.subf %394, %399 : vector<2x32xf32>
    %401 = arith.mulf %400, %400 : vector<2x32xf32>
    %cst_154 = arith.constant dense<0.000000e+00> : vector<32xf32>
    %402 = vector.multi_reduction <add>, %401, %cst_154 [0] : vector<2x32xf32> to vector<32xf32>
    %403 = vector.shape_cast %402 : vector<32xf32> to vector<1x32xf32>
    %cst_155 = arith.constant 2.000000e+00 : f32
    %404 = vector.broadcast %cst_155 : f32 to vector<1x32xf32>
    %405 = arith.divf %403, %404 : vector<1x32xf32>
    %406 = vector.broadcast %398 : vector<1x32xf32> to vector<2x32xf32>
    %407 = arith.subf %394, %406 : vector<2x32xf32>
    %cst_156 = arith.constant 1.100000e+00 : f32
    %408 = vector.broadcast %cst_156 : f32 to vector<2x32xf32>
    %409 = arith.mulf %408, %407 : vector<2x32xf32>
    %cst_157 = arith.constant 9.99999974E-6 : f32
    %410 = vector.broadcast %cst_157 : f32 to vector<1x32xf32>
    %411 = arith.addf %405, %410 : vector<1x32xf32>
    %412 = math.rsqrt %411 : vector<1x32xf32>
    %413 = vector.broadcast %412 : vector<1x32xf32> to vector<2x32xf32>
    %414 = arith.mulf %409, %413 : vector<2x32xf32>
    %cst_158 = arith.constant 0.707106769 : f32
    %415 = vector.broadcast %cst_158 : f32 to vector<2x32xf32>
    %416 = arith.mulf %414, %415 : vector<2x32xf32>
    %417 = math.absf %416 : vector<2x32xf32>
    %cst_159 = arith.constant 0.327591091 : f32
    %418 = vector.broadcast %cst_159 : f32 to vector<2x32xf32>
    %419 = arith.mulf %418, %417 : vector<2x32xf32>
    %cst_160 = arith.constant 1.000000e+00 : f32
    %420 = vector.broadcast %cst_160 : f32 to vector<2x32xf32>
    %421 = arith.addf %420, %419 : vector<2x32xf32>
    %422 = tpu.reciprocal %421 {approx = true} : vector<2x32xf32> -> vector<2x32xf32>
    %423 = arith.mulf %421, %422 : vector<2x32xf32>
    %cst_161 = arith.constant 2.000000e+00 : f32
    %424 = vector.broadcast %cst_161 : f32 to vector<2x32xf32>
    %425 = arith.subf %424, %423 : vector<2x32xf32>
    %426 = arith.mulf %422, %425 : vector<2x32xf32>
    %cst_162 = arith.constant 1.06140542 : f32
    %427 = vector.broadcast %cst_162 : f32 to vector<2x32xf32>
    %428 = arith.mulf %427, %426 : vector<2x32xf32>
    %cst_163 = arith.constant 1.45315206 : f32
    %429 = vector.broadcast %cst_163 : f32 to vector<2x32xf32>
    %430 = arith.subf %428, %429 : vector<2x32xf32>
    %431 = arith.mulf %430, %426 : vector<2x32xf32>
    %cst_164 = arith.constant 1.42141378 : f32
    %432 = vector.broadcast %cst_164 : f32 to vector<2x32xf32>
    %433 = arith.addf %431, %432 : vector<2x32xf32>
    %434 = arith.mulf %433, %426 : vector<2x32xf32>
    %cst_165 = arith.constant 0.284496725 : f32
    %435 = vector.broadcast %cst_165 : f32 to vector<2x32xf32>
    %436 = arith.subf %434, %435 : vector<2x32xf32>
    %437 = arith.mulf %436, %426 : vector<2x32xf32>
    %cst_166 = arith.constant 0.254829586 : f32
    %438 = vector.broadcast %cst_166 : f32 to vector<2x32xf32>
    %439 = arith.addf %437, %438 : vector<2x32xf32>
    %440 = arith.mulf %439, %426 : vector<2x32xf32>
    %cst_167 = arith.constant 0.000000e+00 : f32
    %441 = vector.broadcast %cst_167 : f32 to vector<2x32xf32>
    %442 = arith.subf %441, %417 : vector<2x32xf32>
    %443 = arith.mulf %442, %417 : vector<2x32xf32>
    %444 = math.exp %443 : vector<2x32xf32>
    %445 = arith.mulf %440, %444 : vector<2x32xf32>
    %cst_168 = arith.constant 1.000000e+00 : f32
    %446 = vector.broadcast %cst_168 : f32 to vector<2x32xf32>
    %447 = arith.subf %446, %445 : vector<2x32xf32>
    %cst_169 = arith.constant 0.000000e+00 : f32
    %448 = vector.broadcast %cst_169 : f32 to vector<2x32xf32>
    %449 = arith.cmpf oge, %416, %448 : vector<2x32xf32>
    %cst_170 = arith.constant 0.000000e+00 : f32
    %450 = vector.broadcast %cst_170 : f32 to vector<2x32xf32>
    %451 = arith.subf %450, %447 : vector<2x32xf32>
    %452 = arith.select %449, %447, %451 : vector<2x32xi1>, vector<2x32xf32>
    %cst_171 = arith.constant 5.000000e-01 : f32
    %453 = vector.broadcast %cst_171 : f32 to vector<2x32xf32>
    %454 = arith.mulf %453, %414 : vector<2x32xf32>
    %cst_172 = arith.constant 1.000000e+00 : f32
    %455 = vector.broadcast %cst_172 : f32 to vector<2x32xf32>
    %456 = arith.addf %455, %452 : vector<2x32xf32>
    %457 = arith.mulf %454, %456 : vector<2x32xf32>
    %458 = arith.truncf %457 : vector<2x32xf32> to vector<2x32xbf16>
    %c0_173 = arith.constant 0 : index
    %c0_174 = arith.constant 0 : index
    %459 = vector.load %arg18[%c0_173, %c0_174] : memref<32x16xbf16, #tpu.memory_space<vmem>>, vector<32x16xbf16>
    %cst_175 = arith.constant dense<0.000000e+00> : vector<2x16xf32>
    %460 = tpu.matmul %458, %459, %cst_175 {dimension_numbers = #tpu.dot_dimension_numbers<[1], [0], [0], [1], [0, 0, 1, 1], [], []>} : vector<2x32xbf16>, vector<32x16xbf16>, vector<2x16xf32> -> vector<2x16xf32>
    %c0_176 = arith.constant 0 : index
    %c0_177 = arith.constant 0 : index
    %461 = vector.load %arg19[%c0_176, %c0_177] : memref<1x16xf32, #tpu.memory_space<vmem>>, vector<1x16xf32>
    %462 = vector.broadcast %461 : vector<1x16xf32> to vector<2x16xf32>
    %463 = arith.addf %460, %462 : vector<2x16xf32>
    %c0_178 = arith.constant 0 : index
    %c0_179 = arith.constant 0 : index
    %464 = vector.load %arg20[%c0_178, %c0_179] : memref<2x16xf32, #tpu.memory_space<vmem>>, vector<2x16xf32>
    tpu.vector_store %arg20[%c0_178, %c0_179], %463 {strides = array<i32>} : memref<2x16xf32, #tpu.memory_space<vmem>>, vector<2x16xf32>,
    return
  }
  func.func @transform_0(%arg0: i32) -> (i32, i32) {
    %c0_i32 = arith.constant 0 : i32
    %c0_i32_0 = arith.constant 0 : i32
    %c0_i32_1 = arith.constant 0 : i32
    return %c0_i32, %c0_i32_0 : i32, i32
  }
  func.func @transform_1(%arg0: i32) -> (i32, i32) {
    %c0_i32 = arith.constant 0 : i32
    %c0_i32_0 = arith.constant 0 : i32
    %c0_i32_1 = arith.constant 0 : i32
    return %c0_i32, %c0_i32_0 : i32, i32
  }
  func.func @transform_2(%arg0: i32) -> (i32, i32) {
    %c0_i32 = arith.constant 0 : i32
    %c0_i32_0 = arith.constant 0 : i32
    %c0_i32_1 = arith.constant 0 : i32
    return %c0_i32, %c0_i32_0 : i32, i32
  }
  func.func @transform_3(%arg0: i32) -> (i32, i32) {
    %c0_i32 = arith.constant 0 : i32
    %c0_i32_0 = arith.constant 0 : i32
    %c0_i32_1 = arith.constant 0 : i32
    return %c0_i32, %c0_i32_0 : i32, i32
  }
  func.func @transform_4(%arg0: i32) -> (i32, i32) {
    %c0_i32 = arith.constant 0 : i32
    %c0_i32_0 = arith.constant 0 : i32
    %c0_i32_1 = arith.constant 0 : i32
    return %c0_i32, %c0_i32_0 : i32, i32
  }
  func.func @transform_5(%arg0: i32) -> (i32, i32) {
    %c0_i32 = arith.constant 0 : i32
    %c0_i32_0 = arith.constant 0 : i32
    %c0_i32_1 = arith.constant 0 : i32
    return %c0_i32, %c0_i32_0 : i32, i32
  }
  func.func @transform_6(%arg0: i32) -> (i32, i32) {
    %c0_i32 = arith.constant 0 : i32
    %c0_i32_0 = arith.constant 0 : i32
    %c0_i32_1 = arith.constant 0 : i32
    return %c0_i32, %c0_i32_0 : i32, i32
  }
  func.func @transform_7(%arg0: i32) -> (i32, i32) {
    %c0_i32 = arith.constant 0 : i32
    %c0_i32_0 = arith.constant 0 : i32
    %c0_i32_1 = arith.constant 0 : i32
    return %c0_i32, %c0_i32_0 : i32, i32
  }
  func.func @transform_8(%arg0: i32) -> (i32, i32) {
    %c0_i32 = arith.constant 0 : i32
    %c0_i32_0 = arith.constant 0 : i32
    %c0_i32_1 = arith.constant 0 : i32
    return %c0_i32, %c0_i32_0 : i32, i32
  }
  func.func @transform_9(%arg0: i32) -> (i32, i32) {
    %c0_i32 = arith.constant 0 : i32
    %c0_i32_0 = arith.constant 0 : i32
    %c0_i32_1 = arith.constant 0 : i32
    return %c0_i32, %c0_i32_0 : i32, i32
  }
  func.func @transform_10(%arg0: i32) -> (i32, i32) {
    %c0_i32 = arith.constant 0 : i32
    %c0_i32_0 = arith.constant 0 : i32
    %c0_i32_1 = arith.constant 0 : i32
    return %c0_i32, %c0_i32_0 : i32, i32
  }
  func.func @transform_11(%arg0: i32) -> (i32, i32, i32) {
    %c0_i32 = arith.constant 0 : i32
    %c0_i32_0 = arith.constant 0 : i32
    %c0_i32_1 = arith.constant 0 : i32
    %c0_i32_2 = arith.constant 0 : i32
    return %c0_i32, %c0_i32_0, %c0_i32_1 : i32, i32, i32
  }
  func.func @transform_12(%arg0: i32) -> (i32, i32) {
    %c0_i32 = arith.constant 0 : i32
    %c0_i32_0 = arith.constant 0 : i32
    %c0_i32_1 = arith.constant 0 : i32
    return %c0_i32, %c0_i32_0 : i32, i32
  }
  func.func @transform_13(%arg0: i32) -> (i32, i32) {
    %c0_i32 = arith.constant 0 : i32
    %c0_i32_0 = arith.constant 0 : i32
    %c0_i32_1 = arith.constant 0 : i32
    return %c0_i32, %c0_i32_0 : i32, i32
  }
  func.func @transform_14(%arg0: i32) -> (i32, i32) {
    %c0_i32 = arith.constant 0 : i32
    %c0_i32_0 = arith.constant 0 : i32
    %c0_i32_1 = arith.constant 0 : i32
    return %c0_i32, %c0_i32_0 : i32, i32
  }
  func.func @transform_15(%arg0: i32) -> (i32, i32) {
    %c0_i32 = arith.constant 0 : i32
    %c0_i32_0 = arith.constant 0 : i32
    %c0_i32_1 = arith.constant 0 : i32
    return %c0_i32, %c0_i32_0 : i32, i32
  }
  func.func @transform_16(%arg0: i32) -> (i32, i32) {
    %c0_i32 = arith.constant 0 : i32
    %c0_i32_0 = arith.constant 0 : i32
    %c0_i32_1 = arith.constant 0 : i32
    return %c0_i32, %c0_i32_0 : i32, i32
  }
  func.func @transform_17(%arg0: i32) -> (i32, i32) {
    %c0_i32 = arith.constant 0 : i32
    %c0_i32_0 = arith.constant 0 : i32
    %c0_i32_1 = arith.constant 0 : i32
    return %c0_i32, %c0_i32_0 : i32, i32
  }
  func.func @transform_18(%arg0: i32) -> (i32, i32) {
    %c0_i32 = arith.constant 0 : i32
    %c0_i32_0 = arith.constant 0 : i32
    %c0_i32_1 = arith.constant 0 : i32
    return %c0_i32, %c0_i32_0 : i32, i32
  }
  func.func @transform_19(%arg0: i32) -> (i32, i32) {
    %c0_i32 = arith.constant 0 : i32
    %c0_i32_0 = arith.constant 0 : i32
    %c0_i32_1 = arith.constant 0 : i32
    return %c0_i32, %c0_i32_0 : i32, i32
  }
}

</mosaic_0001>

<llo_original>
// kernel: forward.1
$region0: #{forward.1}
  #allocation0 [shape = 'u32[]', space=smem, size = 0x4, offset = 0x4, fixed_abs, tag = 'smem constant byte address 0x4 - core index']
  #allocation1 [shape = 'u32[144,128]{1,0:T(1,128)}', space=vmem, size = 0x12000, scoped, tag = 'internal scratch']
  %s0 = inlined_call_operand.vmem [shape: f32[8,512], index: 0, kind: input, shape index: {}]
  %s1 = inlined_call_operand.hbm [shape: bf16[16,72], index: 1, kind: input, shape index: {}]
  %s2 = inlined_call_operand.vmem [shape: f32[16,1], index: 2, kind: input, shape index: {}]
  %s3 = inlined_call_operand.hbm [shape: f32[9,512], index: 3, kind: input, shape index: {}]
  %s4 = inlined_call_operand.vmem [shape: bf16[32,144], index: 4, kind: input, shape index: {}]
  %s5 = inlined_call_operand.vmem [shape: f32[32,1], index: 5, kind: input, shape index: {}]
  %s6 = inlined_call_operand.hbm [shape: f32[9,128], index: 6, kind: input, shape index: {}]
  %s7 = inlined_call_operand.hbm [shape: bf16[32,288], index: 7, kind: input, shape index: {}]
  %s8 = inlined_call_operand.vmem [shape: f32[32,1], index: 8, kind: input, shape index: {}]
  %s9 = inlined_call_operand.hbm [shape: bf16[32,288], index: 9, kind: input, shape index: {}]
  %s10 = inlined_call_operand.vmem [shape: f32[32,1], index: 10, kind: input, shape index: {}]
  %s11 = inlined_call_operand.hbm [shape: bf16[9,32,32], index: 11, kind: input, shape index: {}]
  %s12 = inlined_call_operand.vmem [shape: bf16[512,128], index: 12, kind: input, shape index: {}]
  %s13 = inlined_call_operand.hbm [shape: bf16[128,32], index: 13, kind: input, shape index: {}]
  %s14 = inlined_call_operand.vmem [shape: bf16[2,32], index: 14, kind: input, shape index: {}]
  %s15 = inlined_call_operand.hbm [shape: bf16[32,32], index: 15, kind: input, shape index: {}]
  %s16 = inlined_call_operand.vmem [shape: f32[1,32], index: 16, kind: input, shape index: {}]
  %s17 = inlined_call_operand.vmem [shape: bf16[32,16], index: 17, kind: input, shape index: {}]
  %s18 = inlined_call_operand.vmem [shape: f32[1,16], index: 18, kind: input, shape index: {}]
  %s19 = inlined_call_operand.hbm [shape: f32[2,16], index: 19, kind: output, shape index: {}]
  %s20 = sld [smem:[#allocation0]]
  $region118: #{forward.1} parent=0
    _
  %s22 = ssub.s32 1, %s20
  %s23 = scalar_select 0, %s22, %s20
  $region1: #{forward.1} parent=0
    #allocation2 [shape = 'u8[4096]{0}', space=vmem, size = 0x1000, scoped, tag = 'input window, operand 1, single buffered']
    #allocation3 [shape = 's32[1]{0}', space=sflag, size = 0x4, scoped, tag = 'scoped memory for forward.1']
    #allocation4 [shape = 's32[1]{0}', space=sflag, size = 0x4, scoped, tag = 'scoped memory for forward.1']
    #allocation5 [shape = 'u8[32768]{0}', space=vmem, size = 0x8000, scoped, tag = 'input window, operand 3, single buffered']
    #allocation6 [shape = 's32[1]{0}', space=sflag, size = 0x4, scoped, tag = 'scoped memory for forward.1']
    #allocation7 [shape = 'u8[8192]{0}', space=vmem, size = 0x2000, scoped, tag = 'input window, operand 6, single buffered']
    #allocation8 [shape = 'u8[24576]{0}', space=vmem, size = 0x6000, scoped, tag = 'input window, operand 7, single buffered']
    #allocation9 [shape = 's32[1]{0}', space=sflag, size = 0x4, scoped, tag = 'scoped memory for forward.1']
    #allocation10 [shape = 'u8[24576]{0}', space=vmem, size = 0x6000, scoped, tag = 'input window, operand 9, single buffered']
    #allocation11 [shape = 'u8[73728]{0}', space=vmem, size = 0x12000, scoped, tag = 'input window, operand 11, single buffered']
    #allocation12 [shape = 's32[1]{0}', space=sflag, size = 0x4, scoped, tag = 'scoped memory for forward.1']
    #allocation13 [shape = 'u8[32768]{0}', space=vmem, size = 0x8000, scoped, tag = 'input window, operand 13, single buffered']
    #allocation14 [shape = 'u8[8192]{0}', space=vmem, size = 0x2000, scoped, tag = 'input window, operand 15, single buffered']
    #allocation15 [shape = 's32[1]{0}', space=sflag, size = 0x4, scoped, tag = 'scoped memory for forward.1']
    #allocation16 [shape = 'u8[1024]{0}', space=vmem, size = 0x400, scoped, tag = 'output window, operand 0, single buffered']
    %24 = vsyncpa [#allocation3], 0
    %25 = vsyncpa [#allocation6], 0
    %26 = vsyncpa [#allocation9], 0
    %27 = vsyncpa [#allocation12], 0
    %28 = vsyncpa [#allocation15], 0
    %29 = vsyncpa [#allocation4], 0
    // Predicated region
    $region2: #{forward.1} parent=1 // pred_check
      _
    $region3: #{forward.1} parent=1 // pred_check_branch
      %31 = sbr.rel (0) target = $region5
    $region4: #{forward.1} parent=1 // pred_region
      _
    $region5: #{forward.1} parent=1 // pred_fallthru
      _
    // Predicated region
    $region6: #{forward.1} parent=1 // pred_check
      _
    $region7: #{forward.1} parent=1 // pred_check_branch
      %33 = sbr.rel (0) target = $region9
    $region8: #{forward.1} parent=1 // pred_region
      %s35 = ssub.s32 128, 128
      %36 = vsyncadd [#allocation3], %s35
      %s37 = sshll.u32 [#allocation2], 4
      %s38 = int_to_ptr.vmem [resolvable:$true] %s37
      %43 = dma.hbm_to_vmem [thread:$0]  %s1, 128, %s38, [#allocation3], 64, 64, 4
    $region9: #{forward.1} parent=1 // pred_fallthru
      _
    // Predicated region
    $region10: #{forward.1} parent=1 // pred_check
      _
    $region11: #{forward.1} parent=1 // pred_check_branch
      %45 = sbr.rel (0) target = $region13
    $region12: #{forward.1} parent=1 // pred_region
      _
    $region13: #{forward.1} parent=1 // pred_fallthru
      _
    // Predicated region
    $region14: #{forward.1} parent=1 // pred_check
      _
    $region15: #{forward.1} parent=1 // pred_check_branch
      %47 = sbr.rel (0) target = $region17
    $region16: #{forward.1} parent=1 // pred_region
      %s49 = ssub.s32 1024, 1024
      %50 = vsyncadd [#allocation6], %s49
      %s51 = sshll.u32 [#allocation5], 4
      %s52 = int_to_ptr.vmem [resolvable:$true] %s51
      %57 = dma.hbm_to_vmem [thread:$0]  %s3, 1024, %s52, [#allocation6], 512, 512, 32
    $region17: #{forward.1} parent=1 // pred_fallthru
      _
    // Predicated region
    $region18: #{forward.1} parent=1 // pred_check
      _
    $region19: #{forward.1} parent=1 // pred_check_branch
      %59 = sbr.rel (0) target = $region21
    $region20: #{forward.1} parent=1 // pred_region
      _
    $region21: #{forward.1} parent=1 // pred_fallthru
      _
    // Predicated region
    $region22: #{forward.1} parent=1 // pred_check
      _
    $region23: #{forward.1} parent=1 // pred_check_branch
      %61 = sbr.rel (0) target = $region25
    $region24: #{forward.1} parent=1 // pred_region
      _
    $region25: #{forward.1} parent=1 // pred_fallthru
      _
    // Predicated region
    $region26: #{forward.1} parent=1 // pred_check
      _
    $region27: #{forward.1} parent=1 // pred_check_branch
      %63 = sbr.rel (0) target = $region29
    $region28: #{forward.1} parent=1 // pred_region
      %s65 = ssub.s32 256, 256
      %66 = vsyncadd [#allocation6], %s65
      %s67 = sshll.u32 [#allocation7], 4
      %s68 = int_to_ptr.vmem [resolvable:$true] %s67
      %73 = dma.hbm_to_vmem [thread:$0]  %s6, 256, %s68, [#allocation6], 128, 128, 8
    $region29: #{forward.1} parent=1 // pred_fallthru
      _
    // Predicated region
    $region30: #{forward.1} parent=1 // pred_check
      _
    $region31: #{forward.1} parent=1 // pred_check_branch
      %75 = sbr.rel (0) target = $region33
    $region32: #{forward.1} parent=1 // pred_region
      %s77 = ssub.s32 768, 768
      %78 = vsyncadd [#allocation9], %s77
      %s79 = sshll.u32 [#allocation8], 4
      %s80 = int_to_ptr.vmem [resolvable:$true] %s79
      %85 = dma.hbm_to_vmem [thread:$0]  %s7, 768, %s80, [#allocation9], 192, 192, 12
    $region33: #{forward.1} parent=1 // pred_fallthru
      _
    // Predicated region
    $region34: #{forward.1} parent=1 // pred_check
      _
    $region35: #{forward.1} parent=1 // pred_check_branch
      %87 = sbr.rel (0) target = $region37
    $region36: #{forward.1} parent=1 // pred_region
      _
    $region37: #{forward.1} parent=1 // pred_fallthru
      _
    // Predicated region
    $region38: #{forward.1} parent=1 // pred_check
      _
    $region39: #{forward.1} parent=1 // pred_check_branch
      %89 = sbr.rel (0) target = $region41
    $region40: #{forward.1} parent=1 // pred_region
      %s91 = ssub.s32 768, 768
      %92 = vsyncadd [#allocation9], %s91
      %s93 = sshll.u32 [#allocation10], 4
      %s94 = int_to_ptr.vmem [resolvable:$true] %s93
      %99 = dma.hbm_to_vmem [thread:$0]  %s9, 768, %s94, [#allocation9], 192, 192, 12
    $region41: #{forward.1} parent=1 // pred_fallthru
      _
    // Predicated region
    $region42: #{forward.1} parent=1 // pred_check
      _
    $region43: #{forward.1} parent=1 // pred_check_branch
      %101 = sbr.rel (0) target = $region45
    $region44: #{forward.1} parent=1 // pred_region
      _
    $region45: #{forward.1} parent=1 // pred_fallthru
      _
    // Predicated region
    $region46: #{forward.1} parent=1 // pred_check
      _
    $region47: #{forward.1} parent=1 // pred_check_branch
      %103 = sbr.rel (0) target = $region49
    $region48: #{forward.1} parent=1 // pred_region
      %s105 = ssub.s32 2304, 2304
      %106 = vsyncadd [#allocation12], %s105
      %s107 = sshll.u32 [#allocation11], 4
      %s108 = int_to_ptr.vmem [resolvable:$true] %s107
      %113 = dma.hbm_to_vmem [thread:$0]  %s11, 2304, %s108, [#allocation12], 64, 64, 4
    $region49: #{forward.1} parent=1 // pred_fallthru
      _
    // Predicated region
    $region50: #{forward.1} parent=1 // pred_check
      _
    $region51: #{forward.1} parent=1 // pred_check_branch
      %115 = sbr.rel (0) target = $region53
    $region52: #{forward.1} parent=1 // pred_region
      _
    $region53: #{forward.1} parent=1 // pred_fallthru
      _
    // Predicated region
    $region54: #{forward.1} parent=1 // pred_check
      _
    $region55: #{forward.1} parent=1 // pred_check_branch
      %117 = sbr.rel (0) target = $region57
    $region56: #{forward.1} parent=1 // pred_region
      %s119 = ssub.s32 1024, 1024
      %120 = vsyncadd [#allocation12], %s119
      %s121 = sshll.u32 [#allocation13], 4
      %s122 = int_to_ptr.vmem [resolvable:$true] %s121
      %127 = dma.hbm_to_vmem [thread:$0]  %s13, 1024, %s122, [#allocation12], 64, 64, 4
    $region57: #{forward.1} parent=1 // pred_fallthru
      _
    // Predicated region
    $region58: #{forward.1} parent=1 // pred_check
      _
    $region59: #{forward.1} parent=1 // pred_check_branch
      %129 = sbr.rel (0) target = $region61
    $region60: #{forward.1} parent=1 // pred_region
      _
    $region61: #{forward.1} parent=1 // pred_fallthru
      _
    // Predicated region
    $region62: #{forward.1} parent=1 // pred_check
      _
    $region63: #{forward.1} parent=1 // pred_check_branch
      %131 = sbr.rel (0) target = $region65
    $region64: #{forward.1} parent=1 // pred_region
      %s133 = ssub.s32 256, 256
      %134 = vsyncadd [#allocation15], %s133
      %s135 = sshll.u32 [#allocation14], 4
      %s136 = int_to_ptr.vmem [resolvable:$true] %s135
      %141 = dma.hbm_to_vmem [thread:$0]  %s15, 256, %s136, [#allocation15], 64, 64, 4
    $region65: #{forward.1} parent=1 // pred_fallthru
      _
    // Predicated region
    $region66: #{forward.1} parent=1 // pred_check
      _
    $region67: #{forward.1} parent=1 // pred_check_branch
      %143 = sbr.rel (0) target = $region69
    $region68: #{forward.1} parent=1 // pred_region
      _
    $region69: #{forward.1} parent=1 // pred_fallthru
      _
    // Predicated region
    $region70: #{forward.1} parent=1 // pred_check
      _
    $region71: #{forward.1} parent=1 // pred_check_branch
      %145 = sbr.rel (0) target = $region73
    $region72: #{forward.1} parent=1 // pred_region
      _
    $region73: #{forward.1} parent=1 // pred_fallthru
      _
    // Predicated region
    $region74: #{forward.1} parent=1 // pred_check
      _
    $region75: #{forward.1} parent=1 // pred_check_branch
      %147 = sbr.rel (0) target = $region77
    $region76: #{forward.1} parent=1 // pred_region
      _
    $region77: #{forward.1} parent=1 // pred_fallthru
      _
    // Predicated region
    $region78: #{forward.1} parent=1 // pred_check
      _
    $region79: #{forward.1} parent=1 // pred_check_branch
      %149 = sbr.rel (0) target = $region81
    $region80: #{forward.1} parent=1 // pred_region
      %150 = dma.done [#allocation3], 128
    $region81: #{forward.1} parent=1 // pred_fallthru
      _
    // Predicated region
    $region82: #{forward.1} parent=1 // pred_check
      _
    $region83: #{forward.1} parent=1 // pred_check_branch
      %152 = sbr.rel (0) target = $region85
    $region84: #{forward.1} parent=1 // pred_region
      %153 = dma.done [#allocation6], 1024
    $region85: #{forward.1} parent=1 // pred_fallthru
      _
    // Predicated region
    $region86: #{forward.1} parent=1 // pred_check
      _
    $region87: #{forward.1} parent=1 // pred_check_branch
      %155 = sbr.rel (0) target = $region89
    $region88: #{forward.1} parent=1 // pred_region
      %156 = dma.done [#allocation6], 256
    $region89: #{forward.1} parent=1 // pred_fallthru
      _
    // Predicated region
    $region90: #{forward.1} parent=1 // pred_check
      _
    $region91: #{forward.1} parent=1 // pred_check_branch
      %158 = sbr.rel (0) target = $region93
    $region92: #{forward.1} parent=1 // pred_region
      %159 = dma.done [#allocation9], 768
    $region93: #{forward.1} parent=1 // pred_fallthru
      _
    // Predicated region
    $region94: #{forward.1} parent=1 // pred_check
      _
    $region95: #{forward.1} parent=1 // pred_check_branch
      %161 = sbr.rel (0) target = $region97
    $region96: #{forward.1} parent=1 // pred_region
      %162 = dma.done [#allocation9], 768
    $region97: #{forward.1} parent=1 // pred_fallthru
      _
    // Predicated region
    $region98: #{forward.1} parent=1 // pred_check
      _
    $region99: #{forward.1} parent=1 // pred_check_branch
      %164 = sbr.rel (0) target = $region101
    $region100: #{forward.1} parent=1 // pred_region
      %165 = dma.done [#allocation12], 2304
    $region101: #{forward.1} parent=1 // pred_fallthru
      _
    // Predicated region
    $region102: #{forward.1} parent=1 // pred_check
      _
    $region103: #{forward.1} parent=1 // pred_check_branch
      %167 = sbr.rel (0) target = $region105
    $region104: #{forward.1} parent=1 // pred_region
      %168 = dma.done [#allocation12], 1024
    $region105: #{forward.1} parent=1 // pred_fallthru
      _
    // Predicated region
    $region106: #{forward.1} parent=1 // pred_check
      _
    $region107: #{forward.1} parent=1 // pred_check_branch
      %170 = sbr.rel (0) target = $region109
    $region108: #{forward.1} parent=1 // pred_region
      %171 = dma.done [#allocation15], 256
    $region109: #{forward.1} parent=1 // pred_fallthru
      _
    %v173 = vld [vmem:[%s0] sm:$0xff]
    %v174 = vld [vmem:[%s0 + $0x8] sm:$0xff]
    %v175 = vld [vmem:[%s0 + $0x10] sm:$0xff]
    %v176 = vld [vmem:[%s0 + $0x18] sm:$0xff]
    %v177 = vld [vmem:[#allocation5] sm:$0xff]
    %v178 = vld [vmem:[#allocation5 + $0x8] sm:$0xff]
    %v179 = vld [vmem:[#allocation5 + $0x10] sm:$0xff]
    %v180 = vld [vmem:[#allocation5 + $0x18] sm:$0xff]
    %v181 = vld [vmem:[#allocation5 + $0x20] sm:$0x1]
    %v182 = vld [vmem:[#allocation5 + $0x28] sm:$0x1]
    %v183 = vld [vmem:[#allocation5 + $0x30] sm:$0x1]
    %v184 = vld [vmem:[#allocation5 + $0x38] sm:$0x1]
    %185 = vrot.lane.b32.xlu0 %v173, 17
    %v186 = vpop.permute.xlu0 %185
    %187 = vrot.lane.b32.xlu0 %v174, 17
    %v188 = vpop.permute.xlu0 %187
    %189 = vrot.lane.b32.xlu0 %v175, 17
    %v190 = vpop.permute.xlu0 %189
    %191 = vrot.lane.b32.xlu0 %v176, 17
    %v192 = vpop.permute.xlu0 %191
    %v193 = vlaneseq
    %v194 = vand.u32 %v193, 127
    %vm195 = vcmp.lt.s32.totalorder %v194, 17
    %v196 = vsel %vm195, %v190, %v192
    %v197 = vsel %vm195, %v188, %v190
    %v198 = vsel %vm195, %v186, %v188
    %v199 = vsel %vm195, %v192, %v186
    %v200 = vlaneseq
    %v201 = vshrl.u32 %v200, 7
    %v202 = vsub.s32 0, %v201
    %v203 = vrot.slane %v177, %v202
    %v204 = vlaneseq
    %v205 = vshrl.u32 %v204, 7
    %v206 = vsub.s32 0, %v205
    %v207 = vrot.slane %v178, %v206
    %v208 = vlaneseq
    %v209 = vshrl.u32 %v208, 7
    %v210 = vsub.s32 0, %v209
    %v211 = vrot.slane %v179, %v210
    %v212 = vlaneseq
    %v213 = vshrl.u32 %v212, 7
    %v214 = vsub.s32 0, %v213
    %v215 = vrot.slane %v180, %v214
    %v216 = vmul.f32 %v199, %v203
    %v217 = vmul.f32 %v198, %v207
    %v218 = vmul.f32 %v197, %v211
    %v219 = vmul.f32 %v196, %v215
    %220 = vrot.lane.b32.xlu0 %v173, 16
    %v221 = vpop.permute.xlu0 %220
    %222 = vrot.lane.b32.xlu0 %v174, 16
    %v223 = vpop.permute.xlu0 %222
    %224 = vrot.lane.b32.xlu0 %v175, 16
    %v225 = vpop.permute.xlu0 %224
    %226 = vrot.lane.b32.xlu0 %v176, 16
    %v227 = vpop.permute.xlu0 %226
    %vm228 = vcmp.lt.s32.totalorder %v194, 16
    %v229 = vsel %vm228, %v225, %v227
    %v230 = vsel %vm228, %v223, %v225
    %v231 = vsel %vm228, %v221, %v223
    %v232 = vsel %vm228, %v227, %v221
    %v233 = vlaneseq
    %v234 = vshrl.u32 %v233, 7
    %v235 = vsub.s32 1, %v234
    %v236 = vrot.slane %v177, %v235
    %v237 = vlaneseq
    %v238 = vshrl.u32 %v237, 7
    %v239 = vsub.s32 1, %v238
    %v240 = vrot.slane %v178, %v239
    %v241 = vlaneseq
    %v242 = vshrl.u32 %v241, 7
    %v243 = vsub.s32 1, %v242
    %v244 = vrot.slane %v179, %v243
    %v245 = vlaneseq
    %v246 = vshrl.u32 %v245, 7
    %v247 = vsub.s32 1, %v246
    %v248 = vrot.slane %v180, %v247
    %v249 = vmul.f32 %v232, %v236
    %v250 = vmul.f32 %v231, %v240
    %v251 = vmul.f32 %v230, %v244
    %v252 = vmul.f32 %v229, %v248
    %253 = vrot.lane.b32.xlu0 %v173, 15
    %v254 = vpop.permute.xlu0 %253
    %255 = vrot.lane.b32.xlu0 %v174, 15
    %v256 = vpop.permute.xlu0 %255
    %257 = vrot.lane.b32.xlu0 %v175, 15
    %v258 = vpop.permute.xlu0 %257
    %259 = vrot.lane.b32.xlu0 %v176, 15
    %v260 = vpop.permute.xlu0 %259
    %vm261 = vcmp.lt.s32.totalorder %v194, 15
    %v262 = vsel %vm261, %v258, %v260
    %v263 = vsel %vm261, %v256, %v258
    %v264 = vsel %vm261, %v254, %v256
    %v265 = vsel %vm261, %v260, %v254
    %v266 = vlaneseq
    %v267 = vshrl.u32 %v266, 7
    %v268 = vsub.s32 2, %v267
    %v269 = vrot.slane %v177, %v268
    %v270 = vlaneseq
    %v271 = vshrl.u32 %v270, 7
    %v272 = vsub.s32 2, %v271
    %v273 = vrot.slane %v178, %v272
    %v274 = vlaneseq
    %v275 = vshrl.u32 %v274, 7
    %v276 = vsub.s32 2, %v275
    %v277 = vrot.slane %v179, %v276
    %v278 = vlaneseq
    %v279 = vshrl.u32 %v278, 7
    %v280 = vsub.s32 2, %v279
    %v281 = vrot.slane %v180, %v280
    %v282 = vmul.f32 %v265, %v269
    %v283 = vmul.f32 %v264, %v273
    %v284 = vmul.f32 %v263, %v277
    %v285 = vmul.f32 %v262, %v281
    %286 = vrot.lane.b32.xlu0 %v173, 1
    %v287 = vpop.permute.xlu0 %286
    %288 = vrot.lane.b32.xlu0 %v174, 1
    %v289 = vpop.permute.xlu0 %288
    %290 = vrot.lane.b32.xlu0 %v175, 1
    %v291 = vpop.permute.xlu0 %290
    %292 = vrot.lane.b32.xlu0 %v176, 1
    %v293 = vpop.permute.xlu0 %292
    %vm294 = vcmp.lt.s32.totalorder %v194, 1
    %v295 = vsel %vm294, %v291, %v293
    %v296 = vsel %vm294, %v289, %v291
    %v297 = vsel %vm294, %v287, %v289
    %v298 = vsel %vm294, %v293, %v287
    %v299 = vlaneseq
    %v300 = vshrl.u32 %v299, 7
    %v301 = vsub.s32 3, %v300
    %v302 = vrot.slane %v177, %v301
    %v303 = vlaneseq
    %v304 = vshrl.u32 %v303, 7
    %v305 = vsub.s32 3, %v304
    %v306 = vrot.slane %v178, %v305
    %v307 = vlaneseq
    %v308 = vshrl.u32 %v307, 7
    %v309 = vsub.s32 3, %v308
    %v310 = vrot.slane %v179, %v309
    %v311 = vlaneseq
    %v312 = vshrl.u32 %v311, 7
    %v313 = vsub.s32 3, %v312
    %v314 = vrot.slane %v180, %v313
    %v315 = vmul.f32 %v298, %v302
    %v316 = vmul.f32 %v297, %v306
    %v317 = vmul.f32 %v296, %v310
    %v318 = vmul.f32 %v295, %v314
    %319 = vrot.lane.b32.xlu0 %v173, 127
    %v320 = vpop.permute.xlu0 %319
    %321 = vrot.lane.b32.xlu0 %v174, 127
    %v322 = vpop.permute.xlu0 %321
    %323 = vrot.lane.b32.xlu0 %v175, 127
    %v324 = vpop.permute.xlu0 %323
    %325 = vrot.lane.b32.xlu0 %v176, 127
    %v326 = vpop.permute.xlu0 %325
    %vm327 = vcmp.lt.s32.totalorder %v194, 127
    %v328 = vsel %vm327, %v324, %v326
    %v329 = vsel %vm327, %v322, %v324
    %v330 = vsel %vm327, %v320, %v322
    %v331 = vsel %vm327, %v326, %v320
    %v332 = vlaneseq
    %v333 = vshrl.u32 %v332, 7
    %v334 = vsub.s32 5, %v333
    %v335 = vrot.slane %v177, %v334
    %v336 = vlaneseq
    %v337 = vshrl.u32 %v336, 7
    %v338 = vsub.s32 5, %v337
    %v339 = vrot.slane %v178, %v338
    %v340 = vlaneseq
    %v341 = vshrl.u32 %v340, 7
    %v342 = vsub.s32 5, %v341
    %v343 = vrot.slane %v179, %v342
    %v344 = vlaneseq
    %v345 = vshrl.u32 %v344, 7
    %v346 = vsub.s32 5, %v345
    %v347 = vrot.slane %v180, %v346
    %v348 = vmul.f32 %v330, %v335
    %v349 = vmul.f32 %v329, %v339
    %v350 = vmul.f32 %v328, %v343
    %v351 = vmul.f32 %v331, %v347
    %352 = vrot.lane.b32.xlu0 %v173, 113
    %v353 = vpop.permute.xlu0 %352
    %354 = vrot.lane.b32.xlu0 %v174, 113
    %v355 = vpop.permute.xlu0 %354
    %356 = vrot.lane.b32.xlu0 %v175, 113
    %v357 = vpop.permute.xlu0 %356
    %358 = vrot.lane.b32.xlu0 %v176, 113
    %v359 = vpop.permute.xlu0 %358
    %vm360 = vcmp.lt.s32.totalorder %v194, 113
    %v361 = vsel %vm360, %v357, %v359
    %v362 = vsel %vm360, %v355, %v357
    %v363 = vsel %vm360, %v353, %v355
    %v364 = vsel %vm360, %v359, %v353
    %v365 = vlaneseq
    %v366 = vshrl.u32 %v365, 7
    %v367 = vsub.s32 6, %v366
    %v368 = vrot.slane %v177, %v367
    %v369 = vlaneseq
    %v370 = vshrl.u32 %v369, 7
    %v371 = vsub.s32 6, %v370
    %v372 = vrot.slane %v178, %v371
    %v373 = vlaneseq
    %v374 = vshrl.u32 %v373, 7
    %v375 = vsub.s32 6, %v374
    %v376 = vrot.slane %v179, %v375
    %v377 = vlaneseq
    %v378 = vshrl.u32 %v377, 7
    %v379 = vsub.s32 6, %v378
    %v380 = vrot.slane %v180, %v379
    %v381 = vmul.f32 %v363, %v368
    %v382 = vmul.f32 %v362, %v372
    %v383 = vmul.f32 %v361, %v376
    %v384 = vmul.f32 %v364, %v380
    %385 = vrot.lane.b32.xlu0 %v173, 112
    %v386 = vpop.permute.xlu0 %385
    %387 = vrot.lane.b32.xlu0 %v174, 112
    %v388 = vpop.permute.xlu0 %387
    %389 = vrot.lane.b32.xlu0 %v175, 112
    %v390 = vpop.permute.xlu0 %389
    %391 = vrot.lane.b32.xlu0 %v176, 112
    %v392 = vpop.permute.xlu0 %391
    %vm393 = vcmp.lt.s32.totalorder %v194, 112
    %v394 = vsel %vm393, %v390, %v392
    %v395 = vsel %vm393, %v388, %v390
    %v396 = vsel %vm393, %v386, %v388
    %v397 = vsel %vm393, %v392, %v386
    %v398 = vlaneseq
    %v399 = vshrl.u32 %v398, 7
    %v400 = vsub.s32 7, %v399
    %v401 = vrot.slane %v177, %v400
    %v402 = vlaneseq
    %v403 = vshrl.u32 %v402, 7
    %v404 = vsub.s32 7, %v403
    %v405 = vrot.slane %v178, %v404
    %v406 = vlaneseq
    %v407 = vshrl.u32 %v406, 7
    %v408 = vsub.s32 7, %v407
    %v409 = vrot.slane %v179, %v408
    %v410 = vlaneseq
    %v411 = vshrl.u32 %v410, 7
    %v412 = vsub.s32 7, %v411
    %v413 = vrot.slane %v180, %v412
    %v414 = vmul.f32 %v396, %v401
    %v415 = vmul.f32 %v395, %v405
    %v416 = vmul.f32 %v394, %v409
    %v417 = vmul.f32 %v397, %v413
    %418 = vrot.lane.b32.xlu0 %v173, 111
    %v419 = vpop.permute.xlu0 %418
    %420 = vrot.lane.b32.xlu0 %v174, 111
    %v421 = vpop.permute.xlu0 %420
    %422 = vrot.lane.b32.xlu0 %v175, 111
    %v423 = vpop.permute.xlu0 %422
    %424 = vrot.lane.b32.xlu0 %v176, 111
    %v425 = vpop.permute.xlu0 %424
    %vm426 = vcmp.lt.s32.totalorder %v194, 111
    %v427 = vsel %vm426, %v423, %v425
    %v428 = vsel %vm426, %v421, %v423
    %v429 = vsel %vm426, %v419, %v421
    %v430 = vsel %vm426, %v425, %v419
    %v431 = vlaneseq
    %v432 = vshrl.u32 %v431, 7
    %v433 = vsub.s32 0, %v432
    %v434 = vrot.slane %v181, %v433
    %v435 = vlaneseq
    %v436 = vshrl.u32 %v435, 7
    %v437 = vsub.s32 0, %v436
    %v438 = vrot.slane %v182, %v437
    %v439 = vlaneseq
    %v440 = vshrl.u32 %v439, 7
    %v441 = vsub.s32 0, %v440
    %v442 = vrot.slane %v183, %v441
    %v443 = vlaneseq
    %v444 = vshrl.u32 %v443, 7
    %v445 = vsub.s32 0, %v444
    %v446 = vrot.slane %v184, %v445
    %v447 = vmul.f32 %v429, %v434
    %v448 = vmul.f32 %v428, %v438
    %v449 = vmul.f32 %v427, %v442
    %v450 = vmul.f32 %v430, %v446
    %v451 = vpack.c.bf16 %v249, %v216
    %v452 = vpack.c.bf16 %v250, %v217
    %v453 = vpack.c.bf16 %v251, %v218
    %v454 = vpack.c.bf16 %v252, %v219
    %v455 = vpack.c.bf16 %v315, %v282
    %v456 = vpack.c.bf16 %v316, %v283
    %v457 = vpack.c.bf16 %v317, %v284
    %v458 = vpack.c.bf16 %v318, %v285
    %v459 = vpack.c.bf16 %v348, %v173
    %v460 = vpack.c.bf16 %v349, %v174
    %v461 = vpack.c.bf16 %v350, %v175
    %v462 = vpack.c.bf16 %v351, %v176
    %v463 = vpack.c.bf16 %v414, %v381
    %v464 = vpack.c.bf16 %v415, %v382
    %v465 = vpack.c.bf16 %v416, %v383
    %v466 = vpack.c.bf16 %v417, %v384
    %v467 = vpack.c.bf16 %v447, %v447
    %v468 = vpack.c.bf16 %v448, %v448
    %v469 = vpack.c.bf16 %v449, %v449
    %v470 = vpack.c.bf16 %v450, %v450
    %v471 = vld [vmem:[#allocation2] sm:$0xf]
    %v472 = vld [vmem:[#allocation2 + $0x4] sm:$0xf]
    %v475 = vunpack.c.l.b16 %v471
    %v476 = vunpack.c.l.b16 %v472
    %v477 = vpack.c.b16 %v476, %v475
    %vm478 = vcmask 588800
    %v480 = vsel %vm478, %v477, 0
    %vm482 = vcmask 1043456
    %v484 = vsel %vm482, %v467, 0
    %v487 = vsel %vm482, %v468, 0
    %v490 = vsel %vm482, %v469, 0
    %v493 = vsel %vm482, %v470, 0
    %495 = vmatprep.subr.bf16.mxu0 %v452
    %496 = vmatpush1.bf16.msra.mxu0 %v451
    %497 = vmatprep.subr.bf16.mxu0 %v456
    %498 = vmatpush1.bf16.msra.mxu0 %v455
    %499 = vmatprep.subr.bf16.mxu0 %v460
    %500 = vmatpush1.bf16.msra.mxu0 %v459
    %501 = vmatprep.subr.bf16.mxu0 %v464
    %502 = vmatpush1.bf16.msra.mxu0 %v463
    %503 = vmatprep.subr.bf16.mxu0 %v487
    %504 = vmatpush1.bf16.msra.mxu0 %v484
    %505 = vmatprep.subr.bf16.mxu0 0
    %506 = vmatpush1.bf16.msra.mxu0 0
    %507 = vmatprep.subr.bf16.mxu0 0
    %508 = vmatpush1.bf16.msra.mxu0 0
    %509 = vmatprep.subr.bf16.mxu0 0
    %510 = vmatpush1.bf16.msra.mxu0 0
    %511 = vmatprep.subr.bf16.mxu0 0
    %512 = vmatpush1.bf16.msra.mxu0 0
    %513 = vmatprep.subr.bf16.mxu0 0
    %514 = vmatpush1.bf16.msra.mxu0 0
    %515 = vmatprep.subr.bf16.mxu0 0
    %516 = vmatpush1.bf16.msra.mxu0 0
    %517 = vmatprep.subr.bf16.mxu0 0
    %518 = vmatpush1.bf16.msra.mxu0 0
    %519 = vmatprep.subr.bf16.mxu0 0
    %520 = vmatpush1.bf16.msra.mxu0 0
    %521 = vmatprep.subr.bf16.mxu0 0
    %522 = vmatpush1.bf16.msra.mxu0 0
    %523 = vmatprep.subr.bf16.mxu0 0
    %524 = vmatpush1.bf16.msra.mxu0 0
    %525 = vmatprep.subr.bf16.mxu0 0
    %526 = vmatpush1.bf16.msra.mxu0 0
    %527 = vmatprep.mubr.bf16.mxu0 0
    %528 = vmatmul.mubr.bf16.gmra.mrb[0].mxu0 %v480
    %v529 = vpop.f32.mrb[0].mxu0
    %v530 = vadd.f32 0.0, %v529
    %v531 = vpop.f32.mrb[0].mxu0
    %v532 = vadd.f32 0.0, %v531
    %v533 = vpop.f32.mrb[0].mxu0
    %v534 = vadd.f32 0.0, %v533
    %v535 = vpop.f32.mrb[0].mxu0
    %v536 = vadd.f32 0.0, %v535
    %537 = vdwg.mxu0
    %538 = vmatprep.subr.bf16.mxu0 %v454
    %539 = vmatpush1.bf16.msra.mxu0 %v453
    %540 = vmatprep.subr.bf16.mxu0 %v458
    %541 = vmatpush1.bf16.msra.mxu0 %v457
    %542 = vmatprep.subr.bf16.mxu0 %v462
    %543 = vmatpush1.bf16.msra.mxu0 %v461
    %544 = vmatprep.subr.bf16.mxu0 %v466
    %545 = vmatpush1.bf16.msra.mxu0 %v465
    %546 = vmatprep.subr.bf16.mxu0 %v493
    %547 = vmatpush1.bf16.msra.mxu0 %v490
    %548 = vmatprep.subr.bf16.mxu0 0
    %549 = vmatpush1.bf16.msra.mxu0 0
    %550 = vmatprep.subr.bf16.mxu0 0
    %551 = vmatpush1.bf16.msra.mxu0 0
    %552 = vmatprep.subr.bf16.mxu0 0
    %553 = vmatpush1.bf16.msra.mxu0 0
    %554 = vmatprep.subr.bf16.mxu0 0
    %555 = vmatpush1.bf16.msra.mxu0 0
    %556 = vmatprep.subr.bf16.mxu0 0
    %557 = vmatpush1.bf16.msra.mxu0 0
    %558 = vmatprep.subr.bf16.mxu0 0
    %559 = vmatpush1.bf16.msra.mxu0 0
    %560 = vmatprep.subr.bf16.mxu0 0
    %561 = vmatpush1.bf16.msra.mxu0 0
    %562 = vmatprep.subr.bf16.mxu0 0
    %563 = vmatpush1.bf16.msra.mxu0 0
    %564 = vmatprep.subr.bf16.mxu0 0
    %565 = vmatpush1.bf16.msra.mxu0 0
    %566 = vmatprep.subr.bf16.mxu0 0
    %567 = vmatpush1.bf16.msra.mxu0 0
    %568 = vmatprep.subr.bf16.mxu0 0
    %569 = vmatpush1.bf16.msra.mxu0 0
    %570 = vmatprep.mubr.bf16.mxu0 0
    %571 = vmatmul.mubr.bf16.gmra.mrb[0].mxu0 %v480
    %v572 = vpop.f32.mrb[0].mxu0
    %v573 = vadd.f32 0.0, %v572
    %v574 = vpop.f32.mrb[0].mxu0
    %v575 = vadd.f32 0.0, %v574
    %v576 = vpop.f32.mrb[0].mxu0
    %v577 = vadd.f32 0.0, %v576
    %v578 = vpop.f32.mrb[0].mxu0
    %v579 = vadd.f32 0.0, %v578
    %580 = vdwg.mxu0
    %v581 = vadd.f32 %v530, %v532
    %v582 = vadd.f32 %v581, %v573
    %v583 = vadd.f32 %v582, %v575
    %584 = vadd.xlane.f32.xlu0 %v583
    %v585 = vpop.xlane.xlu0 %584
    %v586 = vadd.f32 %v534, %v536
    %v587 = vadd.f32 %v586, %v577
    %v588 = vadd.f32 %v587, %v579
    %589 = vadd.xlane.f32.xlu0 %v588
    %v590 = vpop.xlane.xlu0 %589
    %v591 = vrcp.pop 512.0
    %v592 = vmul.f32 %v585, %v591
    %v593 = vmul.f32 %v590, %v591
    %v594 = vsub.f32 %v530, %v592
    %v595 = vsub.f32 %v532, %v592
    %v596 = vsub.f32 %v573, %v592
    %v597 = vsub.f32 %v575, %v592
    %v598 = vsub.f32 %v534, %v593
    %v599 = vsub.f32 %v536, %v593
    %v600 = vsub.f32 %v577, %v593
    %v601 = vsub.f32 %v579, %v593
    %v602 = vmul.f32 %v594, %v594
    %v603 = vmul.f32 %v595, %v595
    %v604 = vmul.f32 %v596, %v596
    %v605 = vmul.f32 %v597, %v597
    %v606 = vmul.f32 %v598, %v598
    %v607 = vmul.f32 %v599, %v599
    %v608 = vmul.f32 %v600, %v600
    %v609 = vmul.f32 %v601, %v601
    %v610 = vadd.f32 %v602, %v603
    %v611 = vadd.f32 %v610, %v604
    %v612 = vadd.f32 %v611, %v605
    %613 = vadd.xlane.f32.xlu0 %v612
    %v614 = vpop.xlane.xlu0 %613
    %v615 = vadd.f32 %v606, %v607
    %v616 = vadd.f32 %v615, %v608
    %v617 = vadd.f32 %v616, %v609
    %618 = vadd.xlane.f32.xlu0 %v617
    %v619 = vpop.xlane.xlu0 %618
    %v620 = vmul.f32 %v614, %v591
    %v621 = vmul.f32 %v619, %v591
    %v622 = vmul.f32 %v594, 1.1
    %v623 = vmul.f32 %v595, 1.1
    %v624 = vmul.f32 %v596, 1.1
    %v625 = vmul.f32 %v597, 1.1
    %v626 = vmul.f32 %v598, 1.1
    %v627 = vmul.f32 %v599, 1.1
    %v628 = vmul.f32 %v600, 1.1
    %v629 = vmul.f32 %v601, 1.1
    %v630 = vadd.f32 %v620, 1e-05
    %v631 = vadd.f32 %v621, 1e-05
    %v632 = vrsqrt.pop %v630
    %v633 = vrsqrt.pop %v631
    %v634 = vmul.f32 %v622, %v632
    %v635 = vmul.f32 %v623, %v632
    %v636 = vmul.f32 %v624, %v632
    %v637 = vmul.f32 %v625, %v632
    %v638 = vmul.f32 %v626, %v633
    %v639 = vmul.f32 %v627, %v633
    %v640 = vmul.f32 %v628, %v633
    %v641 = vmul.f32 %v629, %v633
    %v642 = vmul.f32 %v634, 0.70710677
    %v643 = vmul.f32 %v635, 0.70710677
    %v644 = vmul.f32 %v636, 0.70710677
    %v645 = vmul.f32 %v637, 0.70710677
    %v646 = vmul.f32 %v638, 0.70710677
    %v647 = vmul.f32 %v639, 0.70710677
    %v648 = vmul.f32 %v640, 0.70710677
    %v649 = vmul.f32 %v641, 0.70710677
    %v650 = vand.u32 2147483647, %v642
    %v651 = vand.u32 2147483647, %v643
    %v652 = vand.u32 2147483647, %v644
    %v653 = vand.u32 2147483647, %v645
    %v654 = vand.u32 2147483647, %v646
    %v655 = vand.u32 2147483647, %v647
    %v656 = vand.u32 2147483647, %v648
    %v657 = vand.u32 2147483647, %v649
    %v658 = vmul.f32 %v650, 0.3275911
    %v659 = vmul.f32 %v651, 0.3275911
    %v660 = vmul.f32 %v652, 0.3275911
    %v661 = vmul.f32 %v653, 0.3275911
    %v662 = vmul.f32 %v654, 0.3275911
    %v663 = vmul.f32 %v655, 0.3275911
    %v664 = vmul.f32 %v656, 0.3275911
    %v665 = vmul.f32 %v657, 0.3275911
    %v666 = vadd.f32 %v658, 1.0
    %v667 = vadd.f32 %v659, 1.0
    %v668 = vadd.f32 %v660, 1.0
    %v669 = vadd.f32 %v661, 1.0
    %v670 = vadd.f32 %v662, 1.0
    %v671 = vadd.f32 %v663, 1.0
    %v672 = vadd.f32 %v664, 1.0
    %v673 = vadd.f32 %v665, 1.0
    %v674 = vrcp.pop %v666
    %v675 = vrcp.pop %v667
    %v676 = vrcp.pop %v668
    %v677 = vrcp.pop %v669
    %v678 = vrcp.pop %v670
    %v679 = vrcp.pop %v671
    %v680 = vrcp.pop %v672
    %v681 = vrcp.pop %v673
    %v682 = vmul.f32 %v666, %v674
    %v683 = vmul.f32 %v667, %v675
    %v684 = vmul.f32 %v668, %v676
    %v685 = vmul.f32 %v669, %v677
    %v686 = vmul.f32 %v670, %v678
    %v687 = vmul.f32 %v671, %v679
    %v688 = vmul.f32 %v672, %v680
    %v689 = vmul.f32 %v673, %v681
    %v690 = vsub.f32 2.0, %v682
    %v691 = vsub.f32 2.0, %v683
    %v692 = vsub.f32 2.0, %v684
    %v693 = vsub.f32 2.0, %v685
    %v694 = vsub.f32 2.0, %v686
    %v695 = vsub.f32 2.0, %v687
    %v696 = vsub.f32 2.0, %v688
    %v697 = vsub.f32 2.0, %v689
    %v698 = vmul.f32 %v674, %v690
    %v699 = vmul.f32 %v675, %v691
    %v700 = vmul.f32 %v676, %v692
    %v701 = vmul.f32 %v677, %v693
    %v702 = vmul.f32 %v678, %v694
    %v703 = vmul.f32 %v679, %v695
    %v704 = vmul.f32 %v680, %v696
    %v705 = vmul.f32 %v681, %v697
    %v706 = vmul.f32 %v698, 1.0614054
    %v707 = vmul.f32 %v699, 1.0614054
    %v708 = vmul.f32 %v700, 1.0614054
    %v709 = vmul.f32 %v701, 1.0614054
    %v710 = vmul.f32 %v702, 1.0614054
    %v711 = vmul.f32 %v703, 1.0614054
    %v712 = vmul.f32 %v704, 1.0614054
    %v713 = vmul.f32 %v705, 1.0614054
    %v714 = vsub.f32 %v706, 1.4531521
    %v715 = vsub.f32 %v707, 1.4531521
    %v716 = vsub.f32 %v708, 1.4531521
    %v717 = vsub.f32 %v709, 1.4531521
    %v718 = vsub.f32 %v710, 1.4531521
    %v719 = vsub.f32 %v711, 1.4531521
    %v720 = vsub.f32 %v712, 1.4531521
    %v721 = vsub.f32 %v713, 1.4531521
    %v722 = vmul.f32 %v714, %v698
    %v723 = vmul.f32 %v715, %v699
    %v724 = vmul.f32 %v716, %v700
    %v725 = vmul.f32 %v717, %v701
    %v726 = vmul.f32 %v718, %v702
    %v727 = vmul.f32 %v719, %v703
    %v728 = vmul.f32 %v720, %v704
    %v729 = vmul.f32 %v721, %v705
    %v730 = vadd.f32 %v722, 1.4214138
    %v731 = vadd.f32 %v723, 1.4214138
    %v732 = vadd.f32 %v724, 1.4214138
    %v733 = vadd.f32 %v725, 1.4214138
    %v734 = vadd.f32 %v726, 1.4214138
    %v735 = vadd.f32 %v727, 1.4214138
    %v736 = vadd.f32 %v728, 1.4214138
    %v737 = vadd.f32 %v729, 1.4214138
    %v738 = vmul.f32 %v730, %v698
    %v739 = vmul.f32 %v731, %v699
    %v740 = vmul.f32 %v732, %v700
    %v741 = vmul.f32 %v733, %v701
    %v742 = vmul.f32 %v734, %v702
    %v743 = vmul.f32 %v735, %v703
    %v744 = vmul.f32 %v736, %v704
    %v745 = vmul.f32 %v737, %v705
    %v746 = vsub.f32 %v738, 0.28449672
    %v747 = vsub.f32 %v739, 0.28449672
    %v748 = vsub.f32 %v740, 0.28449672
    %v749 = vsub.f32 %v741, 0.28449672
    %v750 = vsub.f32 %v742, 0.28449672
    %v751 = vsub.f32 %v743, 0.28449672
    %v752 = vsub.f32 %v744, 0.28449672
    %v753 = vsub.f32 %v745, 0.28449672
    %v754 = vmul.f32 %v746, %v698
    %v755 = vmul.f32 %v747, %v699
    %v756 = vmul.f32 %v748, %v700
    %v757 = vmul.f32 %v749, %v701
    %v758 = vmul.f32 %v750, %v702
    %v759 = vmul.f32 %v751, %v703
    %v760 = vmul.f32 %v752, %v704
    %v761 = vmul.f32 %v753, %v705
    %v762 = vadd.f32 %v754, 0.2548296
    %v763 = vadd.f32 %v755, 0.2548296
    %v764 = vadd.f32 %v756, 0.2548296
    %v765 = vadd.f32 %v757, 0.2548296
    %v766 = vadd.f32 %v758, 0.2548296
    %v767 = vadd.f32 %v759, 0.2548296
    %v768 = vadd.f32 %v760, 0.2548296
    %v769 = vadd.f32 %v761, 0.2548296
    %v770 = vmul.f32 %v762, %v698
    %v771 = vmul.f32 %v763, %v699
    %v772 = vmul.f32 %v764, %v700
    %v773 = vmul.f32 %v765, %v701
    %v774 = vmul.f32 %v766, %v702
    %v775 = vmul.f32 %v767, %v703
    %v776 = vmul.f32 %v768, %v704
    %v777 = vmul.f32 %v769, %v705
    %v778 = vsub.f32 0.0, %v650
    %v779 = vsub.f32 0.0, %v651
    %v780 = vsub.f32 0.0, %v652
    %v781 = vsub.f32 0.0, %v653
    %v782 = vsub.f32 0.0, %v654
    %v783 = vsub.f32 0.0, %v655
    %v784 = vsub.f32 0.0, %v656
    %v785 = vsub.f32 0.0, %v657
    %v786 = vmul.f32 %v778, %v650
    %v787 = vmul.f32 %v779, %v651
    %v788 = vmul.f32 %v780, %v652
    %v789 = vmul.f32 %v781, %v653
    %v790 = vmul.f32 %v782, %v654
    %v791 = vmul.f32 %v783, %v655
    %v792 = vmul.f32 %v784, %v656
    %v793 = vmul.f32 %v785, %v657
    %v794 = vmul.f32 %v786, 1.442695
    %v795 = vpow.pop %v794
    %v796 = vmul.f32 %v787, 1.442695
    %v797 = vpow.pop %v796
    %v798 = vmul.f32 %v788, 1.442695
    %v799 = vpow.pop %v798
    %v800 = vmul.f32 %v789, 1.442695
    %v801 = vpow.pop %v800
    %v802 = vmul.f32 %v790, 1.442695
    %v803 = vpow.pop %v802
    %v804 = vmul.f32 %v791, 1.442695
    %v805 = vpow.pop %v804
    %v806 = vmul.f32 %v792, 1.442695
    %v807 = vpow.pop %v806
    %v808 = vmul.f32 %v793, 1.442695
    %v809 = vpow.pop %v808
    %v810 = vmul.f32 %v770, %v795
    %v811 = vmul.f32 %v771, %v797
    %v812 = vmul.f32 %v772, %v799
    %v813 = vmul.f32 %v773, %v801
    %v814 = vmul.f32 %v774, %v803
    %v815 = vmul.f32 %v775, %v805
    %v816 = vmul.f32 %v776, %v807
    %v817 = vmul.f32 %v777, %v809
    %v818 = vsub.f32 1.0, %v810
    %v819 = vsub.f32 1.0, %v811
    %v820 = vsub.f32 1.0, %v812
    %v821 = vsub.f32 1.0, %v813
    %v822 = vsub.f32 1.0, %v814
    %v823 = vsub.f32 1.0, %v815
    %v824 = vsub.f32 1.0, %v816
    %v825 = vsub.f32 1.0, %v817
    %vm826 = vcmp.ge.f32.partialorder %v642, 0.0
    %vm827 = vcmp.ge.f32.partialorder %v643, 0.0
    %vm828 = vcmp.ge.f32.partialorder %v644, 0.0
    %vm829 = vcmp.ge.f32.partialorder %v645, 0.0
    %vm830 = vcmp.ge.f32.partialorder %v646, 0.0
    %vm831 = vcmp.ge.f32.partialorder %v647, 0.0
    %vm832 = vcmp.ge.f32.partialorder %v648, 0.0
    %vm833 = vcmp.ge.f32.partialorder %v649, 0.0
    %v834 = vsub.f32 0.0, %v818
    %v835 = vsub.f32 0.0, %v819
    %v836 = vsub.f32 0.0, %v820
    %v837 = vsub.f32 0.0, %v821
    %v838 = vsub.f32 0.0, %v822
    %v839 = vsub.f32 0.0, %v823
    %v840 = vsub.f32 0.0, %v824
    %v841 = vsub.f32 0.0, %v825
    %v842 = vsel %vm826, %v818, %v834
    %v843 = vsel %vm827, %v819, %v835
    %v844 = vsel %vm828, %v820, %v836
    %v845 = vsel %vm829, %v821, %v837
    %v846 = vsel %vm830, %v822, %v838
    %v847 = vsel %vm831, %v823, %v839
    %v848 = vsel %vm832, %v824, %v840
    %v849 = vsel %vm833, %v825, %v841
    %v850 = vmul.f32 %v634, 0.5
    %v851 = vmul.f32 %v635, 0.5
    %v852 = vmul.f32 %v636, 0.5
    %v853 = vmul.f32 %v637, 0.5
    %v854 = vmul.f32 %v638, 0.5
    %v855 = vmul.f32 %v639, 0.5
    %v856 = vmul.f32 %v640, 0.5
    %v857 = vmul.f32 %v641, 0.5
    %v858 = vadd.f32 %v842, 1.0
    %v859 = vadd.f32 %v843, 1.0
    %v860 = vadd.f32 %v844, 1.0
    %v861 = vadd.f32 %v845, 1.0
    %v862 = vadd.f32 %v846, 1.0
    %v863 = vadd.f32 %v847, 1.0
    %v864 = vadd.f32 %v848, 1.0
    %v865 = vadd.f32 %v849, 1.0
    %v866 = vmul.f32 %v850, %v858
    %v867 = vmul.f32 %v851, %v859
    %v868 = vmul.f32 %v852, %v860
    %v869 = vmul.f32 %v853, %v861
    %v870 = vmul.f32 %v854, %v862
    %v871 = vmul.f32 %v855, %v863
    %v872 = vmul.f32 %v856, %v864
    %v873 = vmul.f32 %v857, %v865
    %874 = vrot.lane.b32.xlu0 %v866, 127
    %v875 = vpop.permute.xlu0 %874
    %876 = vrot.lane.b32.xlu0 %v870, 127
    %v877 = vpop.permute.xlu0 %876
    %878 = vrot.lane.b32.xlu0 %v867, 127
    %v879 = vpop.permute.xlu0 %878
    %880 = vrot.lane.b32.xlu0 %v871, 127
    %v881 = vpop.permute.xlu0 %880
    %882 = vrot.lane.b32.xlu0 %v868, 127
    %v883 = vpop.permute.xlu0 %882
    %884 = vrot.lane.b32.xlu0 %v872, 127
    %v885 = vpop.permute.xlu0 %884
    %886 = vrot.lane.b32.xlu0 %v869, 127
    %v887 = vpop.permute.xlu0 %886
    %888 = vrot.lane.b32.xlu0 %v873, 127
    %v889 = vpop.permute.xlu0 %888
    %v890 = vsel %vm327, %v883, %v887
    %v891 = vsel %vm327, %v885, %v889
    %v892 = vsel %vm327, %v879, %v883
    %v893 = vsel %vm327, %v881, %v885
    %v894 = vsel %vm327, %v875, %v879
    %v895 = vsel %vm327, %v877, %v881
    %v896 = vsel %vm327, %v887, %v875
    %v897 = vsel %vm327, %v889, %v877
    %v898 = vmax.f32 %v866, %v894
    %v899 = vmax.f32 %v867, %v892
    %v900 = vmax.f32 %v868, %v890
    %v901 = vmax.f32 %v869, %v896
    %v902 = vmax.f32 %v870, %v895
    %v903 = vmax.f32 %v871, %v893
    %v904 = vmax.f32 %v872, %v891
    %v905 = vmax.f32 %v873, %v897
    %906 = vrot.lane.b32.xlu0 %v898, 112
    %v907 = vpop.permute.xlu0 %906
    %908 = vrot.lane.b32.xlu0 %v902, 112
    %v909 = vpop.permute.xlu0 %908
    %910 = vrot.lane.b32.xlu0 %v899, 112
    %v911 = vpop.permute.xlu0 %910
    %912 = vrot.lane.b32.xlu0 %v903, 112
    %v913 = vpop.permute.xlu0 %912
    %914 = vrot.lane.b32.xlu0 %v900, 112
    %v915 = vpop.permute.xlu0 %914
    %916 = vrot.lane.b32.xlu0 %v904, 112
    %v917 = vpop.permute.xlu0 %916
    %918 = vrot.lane.b32.xlu0 %v901, 112
    %v919 = vpop.permute.xlu0 %918
    %920 = vrot.lane.b32.xlu0 %v905, 112
    %v921 = vpop.permute.xlu0 %920
    %v922 = vsel %vm393, %v915, %v919
    %v923 = vsel %vm393, %v917, %v921
    %v924 = vsel %vm393, %v911, %v915
    %v925 = vsel %vm393, %v913, %v917
    %v926 = vsel %vm393, %v907, %v911
    %v927 = vsel %vm393, %v909, %v913
    %v928 = vsel %vm393, %v919, %v907
    %v929 = vsel %vm393, %v921, %v909
    %v930 = vmax.f32 %v898, %v926
    %v931 = vmax.f32 %v899, %v924
    %v932 = vmax.f32 %v900, %v922
    %v933 = vmax.f32 %v901, %v928
    %v934 = vmax.f32 %v902, %v927
    %v935 = vmax.f32 %v903, %v925
    %v936 = vmax.f32 %v904, %v923
    %v937 = vmax.f32 %v905, %v929
    %v938 = vpack.c.bf16 %v934, %v930
    %v939 = vpack.c.bf16 %v935, %v931
    %v940 = vpack.c.bf16 %v936, %v932
    %v941 = vpack.c.bf16 %v937, %v933
    %v942 = vld [vmem:[%s12] sm:$0xf]
    %v943 = vld [vmem:[%s12 + $0x4] sm:$0xf]
    %v944 = vld [vmem:[%s12 + $0x8] sm:$0xf]
    %v945 = vld [vmem:[%s12 + $0xc] sm:$0xf]
    %v946 = vld [vmem:[%s12 + $0x10] sm:$0xf]
    %v947 = vld [vmem:[%s12 + $0x14] sm:$0xf]
    %v948 = vld [vmem:[%s12 + $0x18] sm:$0xf]
    %v949 = vld [vmem:[%s12 + $0x1c] sm:$0xf]
    %v950 = vld [vmem:[%s12 + $0x20] sm:$0xf]
    %v951 = vld [vmem:[%s12 + $0x24] sm:$0xf]
    %v952 = vld [vmem:[%s12 + $0x28] sm:$0xf]
    %v953 = vld [vmem:[%s12 + $0x2c] sm:$0xf]
    %v954 = vld [vmem:[%s12 + $0x30] sm:$0xf]
    %v955 = vld [vmem:[%s12 + $0x34] sm:$0xf]
    %v956 = vld [vmem:[%s12 + $0x38] sm:$0xf]
    %v957 = vld [vmem:[%s12 + $0x3c] sm:$0xf]
    %v958 = vld [vmem:[%s12 + $0x40] sm:$0xf]
    %v959 = vld [vmem:[%s12 + $0x44] sm:$0xf]
    %v960 = vld [vmem:[%s12 + $0x48] sm:$0xf]
    %v961 = vld [vmem:[%s12 + $0x4c] sm:$0xf]
    %v962 = vld [vmem:[%s12 + $0x50] sm:$0xf]
    %v963 = vld [vmem:[%s12 + $0x54] sm:$0xf]
    %v964 = vld [vmem:[%s12 + $0x58] sm:$0xf]
    %v965 = vld [vmem:[%s12 + $0x5c] sm:$0xf]
    %v966 = vld [vmem:[%s12 + $0x60] sm:$0xf]
    %v967 = vld [vmem:[%s12 + $0x64] sm:$0xf]
    %v968 = vld [vmem:[%s12 + $0x68] sm:$0xf]
    %v969 = vld [vmem:[%s12 + $0x6c] sm:$0xf]
    %v970 = vld [vmem:[%s12 + $0x70] sm:$0xf]
    %v971 = vld [vmem:[%s12 + $0x74] sm:$0xf]
    %v972 = vld [vmem:[%s12 + $0x78] sm:$0xf]
    %v973 = vld [vmem:[%s12 + $0x7c] sm:$0xf]
    %v974 = vld [vmem:[%s12 + $0x80] sm:$0xf]
    %v975 = vld [vmem:[%s12 + $0x84] sm:$0xf]
    %v976 = vld [vmem:[%s12 + $0x88] sm:$0xf]
    %v977 = vld [vmem:[%s12 + $0x8c] sm:$0xf]
    %v978 = vld [vmem:[%s12 + $0x90] sm:$0xf]
    %v979 = vld [vmem:[%s12 + $0x94] sm:$0xf]
    %v980 = vld [vmem:[%s12 + $0x98] sm:$0xf]
    %v981 = vld [vmem:[%s12 + $0x9c] sm:$0xf]
    %v982 = vld [vmem:[%s12 + $0xa0] sm:$0xf]
    %v983 = vld [vmem:[%s12 + $0xa4] sm:$0xf]
    %v984 = vld [vmem:[%s12 + $0xa8] sm:$0xf]
    %v985 = vld [vmem:[%s12 + $0xac] sm:$0xf]
    %v986 = vld [vmem:[%s12 + $0xb0] sm:$0xf]
    %v987 = vld [vmem:[%s12 + $0xb4] sm:$0xf]
    %v988 = vld [vmem:[%s12 + $0xb8] sm:$0xf]
    %v989 = vld [vmem:[%s12 + $0xbc] sm:$0xf]
    %v990 = vld [vmem:[%s12 + $0xc0] sm:$0xf]
    %v991 = vld [vmem:[%s12 + $0xc4] sm:$0xf]
    %v992 = vld [vmem:[%s12 + $0xc8] sm:$0xf]
    %v993 = vld [vmem:[%s12 + $0xcc] sm:$0xf]
    %v994 = vld [vmem:[%s12 + $0xd0] sm:$0xf]
    %v995 = vld [vmem:[%s12 + $0xd4] sm:$0xf]
    %v996 = vld [vmem:[%s12 + $0xd8] sm:$0xf]
    %v997 = vld [vmem:[%s12 + $0xdc] sm:$0xf]
    %v998 = vld [vmem:[%s12 + $0xe0] sm:$0xf]
    %v999 = vld [vmem:[%s12 + $0xe4] sm:$0xf]
    %v1000 = vld [vmem:[%s12 + $0xe8] sm:$0xf]
    %v1001 = vld [vmem:[%s12 + $0xec] sm:$0xf]
    %v1002 = vld [vmem:[%s12 + $0xf0] sm:$0xf]
    %v1003 = vld [vmem:[%s12 + $0xf4] sm:$0xf]
    %v1004 = vld [vmem:[%s12 + $0xf8] sm:$0xf]
    %v1005 = vld [vmem:[%s12 + $0xfc] sm:$0xf]
    %v1070 = vunpack.c.l.b16 %v942
    %v1071 = vunpack.c.l.b16 %v943
    %v1072 = vunpack.c.l.b16 %v944
    %v1073 = vunpack.c.l.b16 %v945
    %v1074 = vunpack.c.l.b16 %v946
    %v1075 = vunpack.c.l.b16 %v947
    %v1076 = vunpack.c.l.b16 %v948
    %v1077 = vunpack.c.l.b16 %v949
    %v1078 = vunpack.c.l.b16 %v950
    %v1079 = vunpack.c.l.b16 %v951
    %v1080 = vunpack.c.l.b16 %v952
    %v1081 = vunpack.c.l.b16 %v953
    %v1082 = vunpack.c.l.b16 %v954
    %v1083 = vunpack.c.l.b16 %v955
    %v1084 = vunpack.c.l.b16 %v956
    %v1085 = vunpack.c.l.b16 %v957
    %v1086 = vunpack.c.l.b16 %v958
    %v1087 = vunpack.c.l.b16 %v959
    %v1088 = vunpack.c.l.b16 %v960
    %v1089 = vunpack.c.l.b16 %v961
    %v1090 = vunpack.c.l.b16 %v962
    %v1091 = vunpack.c.l.b16 %v963
    %v1092 = vunpack.c.l.b16 %v964
    %v1093 = vunpack.c.l.b16 %v965
    %v1094 = vunpack.c.l.b16 %v966
    %v1095 = vunpack.c.l.b16 %v967
    %v1096 = vunpack.c.l.b16 %v968
    %v1097 = vunpack.c.l.b16 %v969
    %v1098 = vunpack.c.l.b16 %v970
    %v1099 = vunpack.c.l.b16 %v971
    %v1100 = vunpack.c.l.b16 %v972
    %v1101 = vunpack.c.l.b16 %v973
    %v1102 = vunpack.c.l.b16 %v974
    %v1103 = vunpack.c.l.b16 %v975
    %v1104 = vunpack.c.l.b16 %v976
    %v1105 = vunpack.c.l.b16 %v977
    %v1106 = vunpack.c.l.b16 %v978
    %v1107 = vunpack.c.l.b16 %v979
    %v1108 = vunpack.c.l.b16 %v980
    %v1109 = vunpack.c.l.b16 %v981
    %v1110 = vunpack.c.l.b16 %v982
    %v1111 = vunpack.c.l.b16 %v983
    %v1112 = vunpack.c.l.b16 %v984
    %v1113 = vunpack.c.l.b16 %v985
    %v1114 = vunpack.c.l.b16 %v986
    %v1115 = vunpack.c.l.b16 %v987
    %v1116 = vunpack.c.l.b16 %v988
    %v1117 = vunpack.c.l.b16 %v989
    %v1118 = vunpack.c.l.b16 %v990
    %v1119 = vunpack.c.l.b16 %v991
    %v1120 = vunpack.c.l.b16 %v992
    %v1121 = vunpack.c.l.b16 %v993
    %v1122 = vunpack.c.l.b16 %v994
    %v1123 = vunpack.c.l.b16 %v995
    %v1124 = vunpack.c.l.b16 %v996
    %v1125 = vunpack.c.l.b16 %v997
    %v1126 = vunpack.c.l.b16 %v998
    %v1127 = vunpack.c.l.b16 %v999
    %v1128 = vunpack.c.l.b16 %v1000
    %v1129 = vunpack.c.l.b16 %v1001
    %v1130 = vunpack.c.l.b16 %v1002
    %v1131 = vunpack.c.l.b16 %v1003
    %v1132 = vunpack.c.l.b16 %v1004
    %v1133 = vunpack.c.l.b16 %v1005
    %v1134 = vpack.c.b16 %v1071, %v1070
    %v1135 = vpack.c.b16 %v1073, %v1072
    %v1136 = vpack.c.b16 %v1075, %v1074
    %v1137 = vpack.c.b16 %v1077, %v1076
    %v1138 = vpack.c.b16 %v1079, %v1078
    %v1139 = vpack.c.b16 %v1081, %v1080
    %v1140 = vpack.c.b16 %v1083, %v1082
    %v1141 = vpack.c.b16 %v1085, %v1084
    %v1142 = vpack.c.b16 %v1087, %v1086
    %v1143 = vpack.c.b16 %v1089, %v1088
    %v1144 = vpack.c.b16 %v1091, %v1090
    %v1145 = vpack.c.b16 %v1093, %v1092
    %v1146 = vpack.c.b16 %v1095, %v1094
    %v1147 = vpack.c.b16 %v1097, %v1096
    %v1148 = vpack.c.b16 %v1099, %v1098
    %v1149 = vpack.c.b16 %v1101, %v1100
    %v1150 = vpack.c.b16 %v1103, %v1102
    %v1151 = vpack.c.b16 %v1105, %v1104
    %v1152 = vpack.c.b16 %v1107, %v1106
    %v1153 = vpack.c.b16 %v1109, %v1108
    %v1154 = vpack.c.b16 %v1111, %v1110
    %v1155 = vpack.c.b16 %v1113, %v1112
    %v1156 = vpack.c.b16 %v1115, %v1114
    %v1157 = vpack.c.b16 %v1117, %v1116
    %v1158 = vpack.c.b16 %v1119, %v1118
    %v1159 = vpack.c.b16 %v1121, %v1120
    %v1160 = vpack.c.b16 %v1123, %v1122
    %v1161 = vpack.c.b16 %v1125, %v1124
    %v1162 = vpack.c.b16 %v1127, %v1126
    %v1163 = vpack.c.b16 %v1129, %v1128
    %v1164 = vpack.c.b16 %v1131, %v1130
    %v1165 = vpack.c.b16 %v1133, %v1132
    %1198 = vmatprep.subr.bf16.mxu0 0
    %1199 = vmatpush1.bf16.msra.mxu0 %v1134
    %1200 = vmatprep.subr.bf16.mxu0 0
    %1201 = vmatpush1.bf16.msra.mxu0 %v1135
    %1202 = vmatprep.subr.bf16.mxu0 0
    %1203 = vmatpush1.bf16.msra.mxu0 %v1136
    %1204 = vmatprep.subr.bf16.mxu0 0
    %1205 = vmatpush1.bf16.msra.mxu0 %v1137
    %1206 = vmatprep.subr.bf16.mxu0 0
    %1207 = vmatpush1.bf16.msra.mxu0 %v1138
    %1208 = vmatprep.subr.bf16.mxu0 0
    %1209 = vmatpush1.bf16.msra.mxu0 %v1139
    %1210 = vmatprep.subr.bf16.mxu0 0
    %1211 = vmatpush1.bf16.msra.mxu0 %v1140
    %1212 = vmatprep.subr.bf16.mxu0 0
    %1213 = vmatpush1.bf16.msra.mxu0 %v1141
    %1214 = vmatprep.subr.bf16.mxu0 0
    %1215 = vmatpush1.bf16.msra.mxu0 %v1142
    %1216 = vmatprep.subr.bf16.mxu0 0
    %1217 = vmatpush1.bf16.msra.mxu0 %v1143
    %1218 = vmatprep.subr.bf16.mxu0 0
    %1219 = vmatpush1.bf16.msra.mxu0 %v1144
    %1220 = vmatprep.subr.bf16.mxu0 0
    %1221 = vmatpush1.bf16.msra.mxu0 %v1145
    %1222 = vmatprep.subr.bf16.mxu0 0
    %1223 = vmatpush1.bf16.msra.mxu0 %v1146
    %1224 = vmatprep.subr.bf16.mxu0 0
    %1225 = vmatpush1.bf16.msra.mxu0 %v1147
    %1226 = vmatprep.subr.bf16.mxu0 0
    %1227 = vmatpush1.bf16.msra.mxu0 %v1148
    %1228 = vmatprep.subr.bf16.mxu0 0
    %1229 = vmatpush1.bf16.msra.mxu0 %v1149
    %1230 = vmatprep.mubr.bf16.mxu0 %v939
    %1231 = vmatmul.mubr.bf16.gmra.mrb[0].mxu0 %v938
    %v1232 = vpop.f32.mrb[0].mxu0
    %v1233 = vadd.f32 0.0, %v1232
    %v1234 = vpop.f32.mrb[0].mxu0
    %v1235 = vpop.f32.mrb[0].mxu0
    %v1236 = vadd.f32 0.0, %v1235
    %v1237 = vpop.f32.mrb[0].mxu0
    %1238 = vdwg.mxu0
    %1239 = vmatprep.subr.bf16.mxu0 0
    %1240 = vmatpush1.bf16.msra.mxu0 %v1150
    %1241 = vmatprep.subr.bf16.mxu0 0
    %1242 = vmatpush1.bf16.msra.mxu0 %v1151
    %1243 = vmatprep.subr.bf16.mxu0 0
    %1244 = vmatpush1.bf16.msra.mxu0 %v1152
    %1245 = vmatprep.subr.bf16.mxu0 0
    %1246 = vmatpush1.bf16.msra.mxu0 %v1153
    %1247 = vmatprep.subr.bf16.mxu0 0
    %1248 = vmatpush1.bf16.msra.mxu0 %v1154
    %1249 = vmatprep.subr.bf16.mxu0 0
    %1250 = vmatpush1.bf16.msra.mxu0 %v1155
    %1251 = vmatprep.subr.bf16.mxu0 0
    %1252 = vmatpush1.bf16.msra.mxu0 %v1156
    %1253 = vmatprep.subr.bf16.mxu0 0
    %1254 = vmatpush1.bf16.msra.mxu0 %v1157
    %1255 = vmatprep.subr.bf16.mxu0 0
    %1256 = vmatpush1.bf16.msra.mxu0 %v1158
    %1257 = vmatprep.subr.bf16.mxu0 0
    %1258 = vmatpush1.bf16.msra.mxu0 %v1159
    %1259 = vmatprep.subr.bf16.mxu0 0
    %1260 = vmatpush1.bf16.msra.mxu0 %v1160
    %1261 = vmatprep.subr.bf16.mxu0 0
    %1262 = vmatpush1.bf16.msra.mxu0 %v1161
    %1263 = vmatprep.subr.bf16.mxu0 0
    %1264 = vmatpush1.bf16.msra.mxu0 %v1162
    %1265 = vmatprep.subr.bf16.mxu0 0
    %1266 = vmatpush1.bf16.msra.mxu0 %v1163
    %1267 = vmatprep.subr.bf16.mxu0 0
    %1268 = vmatpush1.bf16.msra.mxu0 %v1164
    %1269 = vmatprep.subr.bf16.mxu0 0
    %1270 = vmatpush1.bf16.msra.mxu0 %v1165
    %1271 = vmatprep.mubr.bf16.mxu0 %v941
    %1272 = vmatmul.mubr.bf16.gmra.mrb[0].mxu0 %v940
    %v1273 = vpop.f32.mrb[0].mxu0
    %v1274 = vadd.f32 %v1233, %v1273
    %v1275 = vpop.f32.mrb[0].mxu0
    %v1276 = vpop.f32.mrb[0].mxu0
    %v1277 = vadd.f32 %v1236, %v1276
    %v1278 = vpop.f32.mrb[0].mxu0
    %1279 = vdwg.mxu0
    %v1280 = vld [vmem:[#allocation7] sm:$0xff]
    %v1281 = vld [vmem:[#allocation7 + $0x8] sm:$0x1]
    %1282 = vrot.lane.b32.xlu0 %v1274, 9
    %v1283 = vpop.permute.xlu0 %1282
    %1284 = vrot.lane.b32.xlu0 %v1277, 9
    %v1285 = vpop.permute.xlu0 %1284
    %v1286 = vlaneseq
    %v1287 = vshrl.u32 %v1286, 7
    %v1288 = vsub.s32 0, %v1287
    %v1289 = vrot.slane %v1280, %v1288
    %v1290 = vmul.f32 %v1283, %v1289
    %v1291 = vmul.f32 %v1285, %v1289
    %1292 = vrot.lane.b32.xlu0 %v1274, 8
    %v1293 = vpop.permute.xlu0 %1292
    %1294 = vrot.lane.b32.xlu0 %v1277, 8
    %v1295 = vpop.permute.xlu0 %1294
    %v1296 = vlaneseq
    %v1297 = vshrl.u32 %v1296, 7
    %v1298 = vsub.s32 1, %v1297
    %v1299 = vrot.slane %v1280, %v1298
    %v1300 = vmul.f32 %v1293, %v1299
    %v1301 = vmul.f32 %v1295, %v1299
    %1302 = vrot.lane.b32.xlu0 %v1274, 7
    %v1303 = vpop.permute.xlu0 %1302
    %1304 = vrot.lane.b32.xlu0 %v1277, 7
    %v1305 = vpop.permute.xlu0 %1304
    %v1306 = vlaneseq
    %v1307 = vshrl.u32 %v1306, 7
    %v1308 = vsub.s32 2, %v1307
    %v1309 = vrot.slane %v1280, %v1308
    %v1310 = vmul.f32 %v1303, %v1309
    %v1311 = vmul.f32 %v1305, %v1309
    %1312 = vrot.lane.b32.xlu0 %v1274, 1
    %v1313 = vpop.permute.xlu0 %1312
    %1314 = vrot.lane.b32.xlu0 %v1277, 1
    %v1315 = vpop.permute.xlu0 %1314
    %v1316 = vlaneseq
    %v1317 = vshrl.u32 %v1316, 7
    %v1318 = vsub.s32 3, %v1317
    %v1319 = vrot.slane %v1280, %v1318
    %v1320 = vmul.f32 %v1313, %v1319
    %v1321 = vmul.f32 %v1315, %v1319
    %1322 = vrot.lane.b32.xlu0 %v1274, 127
    %v1323 = vpop.permute.xlu0 %1322
    %1324 = vrot.lane.b32.xlu0 %v1277, 127
    %v1325 = vpop.permute.xlu0 %1324
    %v1326 = vlaneseq
    %v1327 = vshrl.u32 %v1326, 7
    %v1328 = vsub.s32 5, %v1327
    %v1329 = vrot.slane %v1280, %v1328
    %v1330 = vmul.f32 %v1323, %v1329
    %v1331 = vmul.f32 %v1325, %v1329
    %1332 = vrot.lane.b32.xlu0 %v1274, 121
    %v1333 = vpop.permute.xlu0 %1332
    %1334 = vrot.lane.b32.xlu0 %v1277, 121
    %v1335 = vpop.permute.xlu0 %1334
    %v1336 = vlaneseq
    %v1337 = vshrl.u32 %v1336, 7
    %v1338 = vsub.s32 6, %v1337
    %v1339 = vrot.slane %v1280, %v1338
    %v1340 = vmul.f32 %v1333, %v1339
    %v1341 = vmul.f32 %v1335, %v1339
    %1342 = vrot.lane.b32.xlu0 %v1274, 120
    %v1343 = vpop.permute.xlu0 %1342
    %1344 = vrot.lane.b32.xlu0 %v1277, 120
    %v1345 = vpop.permute.xlu0 %1344
    %v1346 = vlaneseq
    %v1347 = vshrl.u32 %v1346, 7
    %v1348 = vsub.s32 7, %v1347
    %v1349 = vrot.slane %v1280, %v1348
    %v1350 = vmul.f32 %v1343, %v1349
    %v1351 = vmul.f32 %v1345, %v1349
    %1352 = vrot.lane.b32.xlu0 %v1274, 119
    %v1353 = vpop.permute.xlu0 %1352
    %1354 = vrot.lane.b32.xlu0 %v1277, 119
    %v1355 = vpop.permute.xlu0 %1354
    %v1356 = vlaneseq
    %v1357 = vshrl.u32 %v1356, 7
    %v1358 = vsub.s32 0, %v1357
    %v1359 = vrot.slane %v1281, %v1358
    %v1360 = vmul.f32 %v1353, %v1359
    %v1361 = vmul.f32 %v1355, %v1359
    %v1362 = vpack.c.bf16 %v1291, %v1290
    %v1363 = vpack.c.bf16 %v1301, %v1300
    %v1364 = vpack.c.bf16 %v1311, %v1310
    %v1365 = vpack.c.bf16 %v1321, %v1320
    %v1366 = vpack.c.bf16 %v1277, %v1274
    %v1367 = vpack.c.bf16 %v1331, %v1330
    %v1368 = vpack.c.bf16 %v1341, %v1340
    %v1369 = vpack.c.bf16 %v1351, %v1350
    %v1370 = vpack.c.bf16 %v1361, %v1360
    %v1371 = vld [vmem:[%s4] sm:$0xff]
    %v1372 = vld [vmem:[%s4 + $0x8] sm:$0xff]
    %v1373 = vld [vmem:[%s4 + $0x10] sm:$0xff]
    %v1374 = vld [vmem:[%s4 + $0x18] sm:$0xff]
    %v1379 = vunpack.c.l.b16 %v1371
    %v1380 = vunpack.c.h.b16 %v1371
    %v1381 = vunpack.c.l.b16 %v1372
    %v1382 = vunpack.c.h.b16 %v1372
    %v1383 = vunpack.c.l.b16 %v1373
    %v1384 = vunpack.c.h.b16 %v1373
    %v1385 = vunpack.c.l.b16 %v1374
    %v1386 = vunpack.c.h.b16 %v1374
    %v1387 = vpack.c.b16 %v1381, %v1379
    %v1388 = vpack.c.b16 %v1382, %v1380
    %v1389 = vpack.c.b16 %v1385, %v1383
    %v1390 = vpack.c.b16 %v1386, %v1384
    %vm1393 = vcmask 130048
    %v1395 = vsel %vm1393, %v1388, 0
    %v1398 = vsel %vm1393, %v1390, 0
    %1400 = vmatprep.subr.bf16.mxu0 0
    %1401 = vmatpush1.bf16.msra.mxu0 %v1362
    %1402 = vmatprep.subr.bf16.mxu0 0
    %1403 = vmatpush1.bf16.msra.mxu0 %v1363
    %1404 = vmatprep.subr.bf16.mxu0 0
    %1405 = vmatpush1.bf16.msra.mxu0 %v1364
    %1406 = vmatprep.subr.bf16.mxu0 0
    %1407 = vmatpush1.bf16.msra.mxu0 %v1365
    %1408 = vmatprep.subr.bf16.mxu0 0
    %1409 = vmatpush1.bf16.msra.mxu0 %v1366
    %1410 = vmatprep.subr.bf16.mxu0 0
    %1411 = vmatpush1.bf16.msra.mxu0 %v1367
    %1412 = vmatprep.subr.bf16.mxu0 0
    %1413 = vmatpush1.bf16.msra.mxu0 %v1368
    %1414 = vmatprep.subr.bf16.mxu0 0
    %1415 = vmatpush1.bf16.msra.mxu0 %v1369
    %1416 = vmatprep.subr.bf16.mxu0 0
    %1417 = vmatpush1.bf16.msra.mxu0 %v1370
    %1418 = vmatprep.subr.bf16.mxu0 0
    %1419 = vmatpush1.bf16.msra.mxu0 0
    %1420 = vmatprep.subr.bf16.mxu0 0
    %1421 = vmatpush1.bf16.msra.mxu0 0
    %1422 = vmatprep.subr.bf16.mxu0 0
    %1423 = vmatpush1.bf16.msra.mxu0 0
    %1424 = vmatprep.subr.bf16.mxu0 0
    %1425 = vmatpush1.bf16.msra.mxu0 0
    %1426 = vmatprep.subr.bf16.mxu0 0
    %1427 = vmatpush1.bf16.msra.mxu0 0
    %1428 = vmatprep.subr.bf16.mxu0 0
    %1429 = vmatpush1.bf16.msra.mxu0 0
    %1430 = vmatprep.subr.bf16.mxu0 0
    %1431 = vmatpush1.bf16.msra.mxu0 0
    %1432 = vmatprep.mubr.bf16.mxu0 %v1395
    %1433 = vmatmul.mubr.bf16.gmra.mrb[0].mxu0 %v1387
    %v1434 = vpop.f32.mrb[0].mxu0
    %v1435 = vadd.f32 0.0, %v1434
    %v1436 = vpop.f32.mrb[0].mxu0
    %v1437 = vpop.f32.mrb[0].mxu0
    %v1438 = vadd.f32 0.0, %v1437
    %v1439 = vpop.f32.mrb[0].mxu0
    %1440 = vmatprep.mubr.bf16.mxu0 %v1398
    %1441 = vmatmul.mubr.bf16.gmra.mrb[0].mxu0 %v1389
    %v1442 = vpop.f32.mrb[0].mxu0
    %v1443 = vadd.f32 0.0, %v1442
    %v1444 = vpop.f32.mrb[0].mxu0
    %v1445 = vpop.f32.mrb[0].mxu0
    %v1446 = vadd.f32 0.0, %v1445
    %v1447 = vpop.f32.mrb[0].mxu0
    %1448 = vdwg.mxu0
    %1449 = vadd.xlane.f32.xlu0 %v1435
    %v1450 = vpop.xlane.xlu0 %1449
    %1451 = vadd.xlane.f32.xlu0 %v1438
    %v1452 = vpop.xlane.xlu0 %1451
    %1453 = vadd.xlane.f32.xlu0 %v1443
    %v1454 = vpop.xlane.xlu0 %1453
    %1455 = vadd.xlane.f32.xlu0 %v1446
    %v1456 = vpop.xlane.xlu0 %1455
    %v1457 = vrcp.pop 128.0
    %v1458 = vmul.f32 %v1450, %v1457
    %v1459 = vmul.f32 %v1452, %v1457
    %v1460 = vmul.f32 %v1454, %v1457
    %v1461 = vmul.f32 %v1456, %v1457
    %v1462 = vsub.f32 %v1435, %v1458
    %v1463 = vsub.f32 %v1438, %v1459
    %v1464 = vsub.f32 %v1443, %v1460
    %v1465 = vsub.f32 %v1446, %v1461
    %v1466 = vmul.f32 %v1462, %v1462
    %v1467 = vmul.f32 %v1463, %v1463
    %v1468 = vmul.f32 %v1464, %v1464
    %v1469 = vmul.f32 %v1465, %v1465
    %1470 = vadd.xlane.f32.xlu0 %v1466
    %v1471 = vpop.xlane.xlu0 %1470
    %1472 = vadd.xlane.f32.xlu0 %v1467
    %v1473 = vpop.xlane.xlu0 %1472
    %1474 = vadd.xlane.f32.xlu0 %v1468
    %v1475 = vpop.xlane.xlu0 %1474
    %1476 = vadd.xlane.f32.xlu0 %v1469
    %v1477 = vpop.xlane.xlu0 %1476
    %v1478 = vmul.f32 %v1471, %v1457
    %v1479 = vmul.f32 %v1473, %v1457
    %v1480 = vmul.f32 %v1475, %v1457
    %v1481 = vmul.f32 %v1477, %v1457
    %v1482 = vmul.f32 %v1462, 1.1
    %v1483 = vmul.f32 %v1463, 1.1
    %v1484 = vmul.f32 %v1464, 1.1
    %v1485 = vmul.f32 %v1465, 1.1
    %v1486 = vadd.f32 %v1478, 1e-05
    %v1487 = vadd.f32 %v1479, 1e-05
    %v1488 = vadd.f32 %v1480, 1e-05
    %v1489 = vadd.f32 %v1481, 1e-05
    %v1490 = vrsqrt.pop %v1486
    %v1491 = vrsqrt.pop %v1487
    %v1492 = vrsqrt.pop %v1488
    %v1493 = vrsqrt.pop %v1489
    %v1494 = vmul.f32 %v1482, %v1490
    %v1495 = vmul.f32 %v1483, %v1491
    %v1496 = vmul.f32 %v1484, %v1492
    %v1497 = vmul.f32 %v1485, %v1493
    %v1498 = vmul.f32 %v1494, 0.70710677
    %v1499 = vmul.f32 %v1495, 0.70710677
    %v1500 = vmul.f32 %v1496, 0.70710677
    %v1501 = vmul.f32 %v1497, 0.70710677
    %v1502 = vand.u32 2147483647, %v1498
    %v1503 = vand.u32 2147483647, %v1499
    %v1504 = vand.u32 2147483647, %v1500
    %v1505 = vand.u32 2147483647, %v1501
    %v1506 = vmul.f32 %v1502, 0.3275911
    %v1507 = vmul.f32 %v1503, 0.3275911
    %v1508 = vmul.f32 %v1504, 0.3275911
    %v1509 = vmul.f32 %v1505, 0.3275911
    %v1510 = vadd.f32 %v1506, 1.0
    %v1511 = vadd.f32 %v1507, 1.0
    %v1512 = vadd.f32 %v1508, 1.0
    %v1513 = vadd.f32 %v1509, 1.0
    %v1514 = vrcp.pop %v1510
    %v1515 = vrcp.pop %v1511
    %v1516 = vrcp.pop %v1512
    %v1517 = vrcp.pop %v1513
    %v1518 = vmul.f32 %v1510, %v1514
    %v1519 = vmul.f32 %v1511, %v1515
    %v1520 = vmul.f32 %v1512, %v1516
    %v1521 = vmul.f32 %v1513, %v1517
    %v1522 = vsub.f32 2.0, %v1518
    %v1523 = vsub.f32 2.0, %v1519
    %v1524 = vsub.f32 2.0, %v1520
    %v1525 = vsub.f32 2.0, %v1521
    %v1526 = vmul.f32 %v1514, %v1522
    %v1527 = vmul.f32 %v1515, %v1523
    %v1528 = vmul.f32 %v1516, %v1524
    %v1529 = vmul.f32 %v1517, %v1525
    %v1530 = vmul.f32 %v1526, 1.0614054
    %v1531 = vmul.f32 %v1527, 1.0614054
    %v1532 = vmul.f32 %v1528, 1.0614054
    %v1533 = vmul.f32 %v1529, 1.0614054
    %v1534 = vsub.f32 %v1530, 1.4531521
    %v1535 = vsub.f32 %v1531, 1.4531521
    %v1536 = vsub.f32 %v1532, 1.4531521
    %v1537 = vsub.f32 %v1533, 1.4531521
    %v1538 = vmul.f32 %v1534, %v1526
    %v1539 = vmul.f32 %v1535, %v1527
    %v1540 = vmul.f32 %v1536, %v1528
    %v1541 = vmul.f32 %v1537, %v1529
    %v1542 = vadd.f32 %v1538, 1.4214138
    %v1543 = vadd.f32 %v1539, 1.4214138
    %v1544 = vadd.f32 %v1540, 1.4214138
    %v1545 = vadd.f32 %v1541, 1.4214138
    %v1546 = vmul.f32 %v1542, %v1526
    %v1547 = vmul.f32 %v1543, %v1527
    %v1548 = vmul.f32 %v1544, %v1528
    %v1549 = vmul.f32 %v1545, %v1529
    %v1550 = vsub.f32 %v1546, 0.28449672
    %v1551 = vsub.f32 %v1547, 0.28449672
    %v1552 = vsub.f32 %v1548, 0.28449672
    %v1553 = vsub.f32 %v1549, 0.28449672
    %v1554 = vmul.f32 %v1550, %v1526
    %v1555 = vmul.f32 %v1551, %v1527
    %v1556 = vmul.f32 %v1552, %v1528
    %v1557 = vmul.f32 %v1553, %v1529
    %v1558 = vadd.f32 %v1554, 0.2548296
    %v1559 = vadd.f32 %v1555, 0.2548296
    %v1560 = vadd.f32 %v1556, 0.2548296
    %v1561 = vadd.f32 %v1557, 0.2548296
    %v1562 = vmul.f32 %v1558, %v1526
    %v1563 = vmul.f32 %v1559, %v1527
    %v1564 = vmul.f32 %v1560, %v1528
    %v1565 = vmul.f32 %v1561, %v1529
    %v1566 = vsub.f32 0.0, %v1502
    %v1567 = vsub.f32 0.0, %v1503
    %v1568 = vsub.f32 0.0, %v1504
    %v1569 = vsub.f32 0.0, %v1505
    %v1570 = vmul.f32 %v1566, %v1502
    %v1571 = vmul.f32 %v1567, %v1503
    %v1572 = vmul.f32 %v1568, %v1504
    %v1573 = vmul.f32 %v1569, %v1505
    %v1574 = vmul.f32 %v1570, 1.442695
    %v1575 = vpow.pop %v1574
    %v1576 = vmul.f32 %v1571, 1.442695
    %v1577 = vpow.pop %v1576
    %v1578 = vmul.f32 %v1572, 1.442695
    %v1579 = vpow.pop %v1578
    %v1580 = vmul.f32 %v1573, 1.442695
    %v1581 = vpow.pop %v1580
    %v1582 = vmul.f32 %v1562, %v1575
    %v1583 = vmul.f32 %v1563, %v1577
    %v1584 = vmul.f32 %v1564, %v1579
    %v1585 = vmul.f32 %v1565, %v1581
    %v1586 = vsub.f32 1.0, %v1582
    %v1587 = vsub.f32 1.0, %v1583
    %v1588 = vsub.f32 1.0, %v1584
    %v1589 = vsub.f32 1.0, %v1585
    %vm1590 = vcmp.ge.f32.partialorder %v1498, 0.0
    %vm1591 = vcmp.ge.f32.partialorder %v1499, 0.0
    %vm1592 = vcmp.ge.f32.partialorder %v1500, 0.0
    %vm1593 = vcmp.ge.f32.partialorder %v1501, 0.0
    %v1594 = vsub.f32 0.0, %v1586
    %v1595 = vsub.f32 0.0, %v1587
    %v1596 = vsub.f32 0.0, %v1588
    %v1597 = vsub.f32 0.0, %v1589
    %v1598 = vsel %vm1590, %v1586, %v1594
    %v1599 = vsel %vm1591, %v1587, %v1595
    %v1600 = vsel %vm1592, %v1588, %v1596
    %v1601 = vsel %vm1593, %v1589, %v1597
    %v1602 = vmul.f32 %v1494, 0.5
    %v1603 = vmul.f32 %v1495, 0.5
    %v1604 = vmul.f32 %v1496, 0.5
    %v1605 = vmul.f32 %v1497, 0.5
    %v1606 = vadd.f32 %v1598, 1.0
    %v1607 = vadd.f32 %v1599, 1.0
    %v1608 = vadd.f32 %v1600, 1.0
    %v1609 = vadd.f32 %v1601, 1.0
    %v1610 = vmul.f32 %v1602, %v1606
    %v1611 = vmul.f32 %v1603, %v1607
    %v1612 = vmul.f32 %v1604, %v1608
    %v1613 = vmul.f32 %v1605, %v1609
    %1614 = vrot.lane.b32.xlu0 %v1610, 127
    %v1615 = vpop.permute.xlu0 %1614
    %1616 = vrot.lane.b32.xlu0 %v1611, 127
    %v1617 = vpop.permute.xlu0 %1616
    %1618 = vrot.lane.b32.xlu0 %v1612, 127
    %v1619 = vpop.permute.xlu0 %1618
    %1620 = vrot.lane.b32.xlu0 %v1613, 127
    %v1621 = vpop.permute.xlu0 %1620
    %v1622 = vmax.f32 %v1610, %v1615
    %v1623 = vmax.f32 %v1611, %v1617
    %v1624 = vmax.f32 %v1612, %v1619
    %v1625 = vmax.f32 %v1613, %v1621
    %1626 = vrot.lane.b32.xlu0 %v1622, 120
    %v1627 = vpop.permute.xlu0 %1626
    %1628 = vrot.lane.b32.xlu0 %v1623, 120
    %v1629 = vpop.permute.xlu0 %1628
    %1630 = vrot.lane.b32.xlu0 %v1624, 120
    %v1631 = vpop.permute.xlu0 %1630
    %1632 = vrot.lane.b32.xlu0 %v1625, 120
    %v1633 = vpop.permute.xlu0 %1632
    %v1634 = vmax.f32 %v1622, %v1627
    %v1635 = vmax.f32 %v1623, %v1629
    %v1636 = vmax.f32 %v1624, %v1631
    %v1637 = vmax.f32 %v1625, %v1633
    %v1638 = vpack.c.bf16 %v1635, %v1634
    %v1639 = vpack.c.bf16 %v1637, %v1636
    %v1640 = vld [vmem:[#allocation13] sm:$0xf]
    %v1641 = vld [vmem:[#allocation13 + $0x4] sm:$0xf]
    %v1642 = vld [vmem:[#allocation13 + $0x8] sm:$0xf]
    %v1643 = vld [vmem:[#allocation13 + $0xc] sm:$0xf]
    %v1644 = vld [vmem:[#allocation13 + $0x10] sm:$0xf]
    %v1645 = vld [vmem:[#allocation13 + $0x14] sm:$0xf]
    %v1646 = vld [vmem:[#allocation13 + $0x18] sm:$0xf]
    %v1647 = vld [vmem:[#allocation13 + $0x1c] sm:$0xf]
    %v1648 = vld [vmem:[#allocation13 + $0x20] sm:$0xf]
    %v1649 = vld [vmem:[#allocation13 + $0x24] sm:$0xf]
    %v1650 = vld [vmem:[#allocation13 + $0x28] sm:$0xf]
    %v1651 = vld [vmem:[#allocation13 + $0x2c] sm:$0xf]
    %v1652 = vld [vmem:[#allocation13 + $0x30] sm:$0xf]
    %v1653 = vld [vmem:[#allocation13 + $0x34] sm:$0xf]
    %v1654 = vld [vmem:[#allocation13 + $0x38] sm:$0xf]
    %v1655 = vld [vmem:[#allocation13 + $0x3c] sm:$0xf]
    %v1672 = vunpack.c.l.b16 %v1640
    %v1673 = vunpack.c.l.b16 %v1641
    %v1674 = vunpack.c.l.b16 %v1642
    %v1675 = vunpack.c.l.b16 %v1643
    %v1676 = vunpack.c.l.b16 %v1644
    %v1677 = vunpack.c.l.b16 %v1645
    %v1678 = vunpack.c.l.b16 %v1646
    %v1679 = vunpack.c.l.b16 %v1647
    %v1680 = vunpack.c.l.b16 %v1648
    %v1681 = vunpack.c.l.b16 %v1649
    %v1682 = vunpack.c.l.b16 %v1650
    %v1683 = vunpack.c.l.b16 %v1651
    %v1684 = vunpack.c.l.b16 %v1652
    %v1685 = vunpack.c.l.b16 %v1653
    %v1686 = vunpack.c.l.b16 %v1654
    %v1687 = vunpack.c.l.b16 %v1655
    %v1688 = vpack.c.b16 %v1673, %v1672
    %v1689 = vpack.c.b16 %v1675, %v1674
    %v1690 = vpack.c.b16 %v1677, %v1676
    %v1691 = vpack.c.b16 %v1679, %v1678
    %v1692 = vpack.c.b16 %v1681, %v1680
    %v1693 = vpack.c.b16 %v1683, %v1682
    %v1694 = vpack.c.b16 %v1685, %v1684
    %v1695 = vpack.c.b16 %v1687, %v1686
    %1704 = vmatprep.subr.bf16.mxu0 0
    %1705 = vmatpush1.bf16.msra.mxu0 %v1688
    %1706 = vmatprep.subr.bf16.mxu0 0
    %1707 = vmatpush1.bf16.msra.mxu0 %v1689
    %1708 = vmatprep.subr.bf16.mxu0 0
    %1709 = vmatpush1.bf16.msra.mxu0 %v1690
    %1710 = vmatprep.subr.bf16.mxu0 0
    %1711 = vmatpush1.bf16.msra.mxu0 %v1691
    %1712 = vmatprep.subr.bf16.mxu0 0
    %1713 = vmatpush1.bf16.msra.mxu0 %v1692
    %1714 = vmatprep.subr.bf16.mxu0 0
    %1715 = vmatpush1.bf16.msra.mxu0 %v1693
    %1716 = vmatprep.subr.bf16.mxu0 0
    %1717 = vmatpush1.bf16.msra.mxu0 %v1694
    %1718 = vmatprep.subr.bf16.mxu0 0
    %1719 = vmatpush1.bf16.msra.mxu0 %v1695
    %1720 = vmatprep.subr.bf16.mxu0 0
    %1721 = vmatpush1.bf16.msra.mxu0 0
    %1722 = vmatprep.subr.bf16.mxu0 0
    %1723 = vmatpush1.bf16.msra.mxu0 0
    %1724 = vmatprep.subr.bf16.mxu0 0
    %1725 = vmatpush1.bf16.msra.mxu0 0
    %1726 = vmatprep.subr.bf16.mxu0 0
    %1727 = vmatpush1.bf16.msra.mxu0 0
    %1728 = vmatprep.subr.bf16.mxu0 0
    %1729 = vmatpush1.bf16.msra.mxu0 0
    %1730 = vmatprep.subr.bf16.mxu0 0
    %1731 = vmatpush1.bf16.msra.mxu0 0
    %1732 = vmatprep.subr.bf16.mxu0 0
    %1733 = vmatpush1.bf16.msra.mxu0 0
    %1734 = vmatprep.subr.bf16.mxu0 0
    %1735 = vmatpush1.bf16.msra.mxu0 0
    %1736 = vmatprep.mubr.bf16.mxu0 0
    %1737 = vmatmul.mubr.bf16.gmra.mrb[0].mxu0 %v1638
    %v1738 = vpop.f32.mrb[0].mxu0
    %v1739 = vadd.f32 0.0, %v1738
    %v1740 = vpop.f32.mrb[0].mxu0
    %v1741 = vpop.f32.mrb[0].mxu0
    %v1742 = vadd.f32 0.0, %v1741
    %v1743 = vpop.f32.mrb[0].mxu0
    %1744 = vmatprep.mubr.bf16.mxu0 0
    %1745 = vmatmul.mubr.bf16.gmra.mrb[0].mxu0 %v1639
    %v1746 = vpop.f32.mrb[0].mxu0
    %v1747 = vadd.f32 0.0, %v1746
    %v1748 = vpop.f32.mrb[0].mxu0
    %v1749 = vpop.f32.mrb[0].mxu0
    %v1750 = vadd.f32 0.0, %v1749
    %v1751 = vpop.f32.mrb[0].mxu0
    %1752 = vdwg.mxu0
    %v1753 = vld [vmem:[#allocation11] sm:$0xf]
    %v1754 = vld [vmem:[#allocation11 + $0x4] sm:$0xf]
    %v1755 = vld [vmem:[#allocation11 + $0x8] sm:$0xf]
    %v1756 = vld [vmem:[#allocation11 + $0xc] sm:$0xf]
    %s1757 = scalar_lea.vmem [#allocation11], 16
    %v1758 = vld [vmem:[%s1757] sm:$0xf]
    %v1759 = vld [vmem:[%s1757 + $0x4] sm:$0xf]
    %v1760 = vld [vmem:[%s1757 + $0x8] sm:$0xf]
    %v1761 = vld [vmem:[%s1757 + $0xc] sm:$0xf]
    %s1762 = scalar_lea.vmem [#allocation11], 32
    %v1763 = vld [vmem:[%s1762] sm:$0xf]
    %v1764 = vld [vmem:[%s1762 + $0x4] sm:$0xf]
    %v1765 = vld [vmem:[%s1762 + $0x8] sm:$0xf]
    %v1766 = vld [vmem:[%s1762 + $0xc] sm:$0xf]
    %s1767 = scalar_lea.vmem [#allocation11], 48
    %v1768 = vld [vmem:[%s1767] sm:$0xf]
    %v1769 = vld [vmem:[%s1767 + $0x4] sm:$0xf]
    %v1770 = vld [vmem:[%s1767 + $0x8] sm:$0xf]
    %v1771 = vld [vmem:[%s1767 + $0xc] sm:$0xf]
    %s1772 = scalar_lea.vmem [#allocation11], 80
    %v1773 = vld [vmem:[%s1772] sm:$0xf]
    %v1774 = vld [vmem:[%s1772 + $0x4] sm:$0xf]
    %v1775 = vld [vmem:[%s1772 + $0x8] sm:$0xf]
    %v1776 = vld [vmem:[%s1772 + $0xc] sm:$0xf]
    %s1777 = scalar_lea.vmem [#allocation11], 96
    %v1778 = vld [vmem:[%s1777] sm:$0xf]
    %v1779 = vld [vmem:[%s1777 + $0x4] sm:$0xf]
    %v1780 = vld [vmem:[%s1777 + $0x8] sm:$0xf]
    %v1781 = vld [vmem:[%s1777 + $0xc] sm:$0xf]
    %s1782 = scalar_lea.vmem [#allocation11], 112
    %v1783 = vld [vmem:[%s1782] sm:$0xf]
    %v1784 = vld [vmem:[%s1782 + $0x4] sm:$0xf]
    %v1785 = vld [vmem:[%s1782 + $0x8] sm:$0xf]
    %v1786 = vld [vmem:[%s1782 + $0xc] sm:$0xf]
    %s1787 = scalar_lea.vmem [#allocation11], 128
    %v1788 = vld [vmem:[%s1787] sm:$0xf]
    %v1789 = vld [vmem:[%s1787 + $0x4] sm:$0xf]
    %v1790 = vld [vmem:[%s1787 + $0x8] sm:$0xf]
    %v1791 = vld [vmem:[%s1787 + $0xc] sm:$0xf]
    %v1792 = vpack.c.bf16 %v1742, %v1739
    %v1793 = vpack.c.bf16 %v1750, %v1747
    %v1798 = vunpack.c.l.b16 %v1753
    %v1799 = vunpack.c.l.b16 %v1754
    %v1800 = vunpack.c.l.b16 %v1755
    %v1801 = vunpack.c.l.b16 %v1756
    %v1802 = vpack.c.b16 %v1799, %v1798
    %v1803 = vpack.c.b16 %v1801, %v1800
    %vm1806 = vcmask 261120
    %v1808 = vsel %vm1806, %v1792, 0
    %v1811 = vsel %vm1806, %v1793, 0
    %1813 = vmatprep.subr.bf16.mxu0 0
    %1814 = vmatpush1.bf16.msra.mxu0 %v1802
    %1815 = vmatprep.subr.bf16.mxu0 0
    %1816 = vmatpush1.bf16.msra.mxu0 %v1803
    %1817 = vmatprep.subr.bf16.mxu0 0
    %1818 = vmatpush1.bf16.msra.mxu0 0
    %1819 = vmatprep.subr.bf16.mxu0 0
    %1820 = vmatpush1.bf16.msra.mxu0 0
    %1821 = vmatprep.subr.bf16.mxu0 0
    %1822 = vmatpush1.bf16.msra.mxu0 0
    %1823 = vmatprep.subr.bf16.mxu0 0
    %1824 = vmatpush1.bf16.msra.mxu0 0
    %1825 = vmatprep.subr.bf16.mxu0 0
    %1826 = vmatpush1.bf16.msra.mxu0 0
    %1827 = vmatprep.subr.bf16.mxu0 0
    %1828 = vmatpush1.bf16.msra.mxu0 0
    %1829 = vmatprep.subr.bf16.mxu0 0
    %1830 = vmatpush1.bf16.msra.mxu0 0
    %1831 = vmatprep.subr.bf16.mxu0 0
    %1832 = vmatpush1.bf16.msra.mxu0 0
    %1833 = vmatprep.subr.bf16.mxu0 0
    %1834 = vmatpush1.bf16.msra.mxu0 0
    %1835 = vmatprep.subr.bf16.mxu0 0
    %1836 = vmatpush1.bf16.msra.mxu0 0
    %1837 = vmatprep.subr.bf16.mxu0 0
    %1838 = vmatpush1.bf16.msra.mxu0 0
    %1839 = vmatprep.subr.bf16.mxu0 0
    %1840 = vmatpush1.bf16.msra.mxu0 0
    %1841 = vmatprep.subr.bf16.mxu0 0
    %1842 = vmatpush1.bf16.msra.mxu0 0
    %1843 = vmatprep.subr.bf16.mxu0 0
    %1844 = vmatpush1.bf16.msra.mxu0 0
    %1845 = vmatprep.mubr.bf16.mxu0 0
    %1846 = vmatmul.mubr.bf16.gmra.mrb[0].mxu0 %v1808
    %v1847 = vpop.f32.mrb[0].mxu0
    %v1848 = vadd.f32 0.0, %v1847
    %v1849 = vpop.f32.mrb[0].mxu0
    %v1850 = vpop.f32.mrb[0].mxu0
    %v1851 = vadd.f32 0.0, %v1850
    %v1852 = vpop.f32.mrb[0].mxu0
    %1853 = vmatprep.mubr.bf16.mxu0 0
    %1854 = vmatmul.mubr.bf16.gmra.mrb[0].mxu0 %v1811
    %v1855 = vpop.f32.mrb[0].mxu0
    %v1856 = vadd.f32 0.0, %v1855
    %v1857 = vpop.f32.mrb[0].mxu0
    %v1858 = vpop.f32.mrb[0].mxu0
    %v1859 = vadd.f32 0.0, %v1858
    %v1860 = vpop.f32.mrb[0].mxu0
    %1861 = vdwg.mxu0
    %v1866 = vunpack.c.l.b16 %v1758
    %v1867 = vunpack.c.l.b16 %v1759
    %v1868 = vunpack.c.l.b16 %v1760
    %v1869 = vunpack.c.l.b16 %v1761
    %v1870 = vpack.c.b16 %v1867, %v1866
    %v1871 = vpack.c.b16 %v1869, %v1868
    %1874 = vmatprep.subr.bf16.mxu0 0
    %1875 = vmatpush1.bf16.msra.mxu0 %v1870
    %1876 = vmatprep.subr.bf16.mxu0 0
    %1877 = vmatpush1.bf16.msra.mxu0 %v1871
    %1878 = vmatprep.subr.bf16.mxu0 0
    %1879 = vmatpush1.bf16.msra.mxu0 0
    %1880 = vmatprep.subr.bf16.mxu0 0
    %1881 = vmatpush1.bf16.msra.mxu0 0
    %1882 = vmatprep.subr.bf16.mxu0 0
    %1883 = vmatpush1.bf16.msra.mxu0 0
    %1884 = vmatprep.subr.bf16.mxu0 0
    %1885 = vmatpush1.bf16.msra.mxu0 0
    %1886 = vmatprep.subr.bf16.mxu0 0
    %1887 = vmatpush1.bf16.msra.mxu0 0
    %1888 = vmatprep.subr.bf16.mxu0 0
    %1889 = vmatpush1.bf16.msra.mxu0 0
    %1890 = vmatprep.subr.bf16.mxu0 0
    %1891 = vmatpush1.bf16.msra.mxu0 0
    %1892 = vmatprep.subr.bf16.mxu0 0
    %1893 = vmatpush1.bf16.msra.mxu0 0
    %1894 = vmatprep.subr.bf16.mxu0 0
    %1895 = vmatpush1.bf16.msra.mxu0 0
    %1896 = vmatprep.subr.bf16.mxu0 0
    %1897 = vmatpush1.bf16.msra.mxu0 0
    %1898 = vmatprep.subr.bf16.mxu0 0
    %1899 = vmatpush1.bf16.msra.mxu0 0
    %1900 = vmatprep.subr.bf16.mxu0 0
    %1901 = vmatpush1.bf16.msra.mxu0 0
    %1902 = vmatprep.subr.bf16.mxu0 0
    %1903 = vmatpush1.bf16.msra.mxu0 0
    %1904 = vmatprep.subr.bf16.mxu0 0
    %1905 = vmatpush1.bf16.msra.mxu0 0
    %1906 = vmatprep.mubr.bf16.mxu0 0
    %1907 = vmatmul.mubr.bf16.gmra.mrb[0].mxu0 %v1808
    %v1908 = vpop.f32.mrb[0].mxu0
    %v1909 = vadd.f32 0.0, %v1908
    %v1910 = vpop.f32.mrb[0].mxu0
    %v1911 = vpop.f32.mrb[0].mxu0
    %v1912 = vadd.f32 0.0, %v1911
    %v1913 = vpop.f32.mrb[0].mxu0
    %1914 = vmatprep.mubr.bf16.mxu0 0
    %1915 = vmatmul.mubr.bf16.gmra.mrb[0].mxu0 %v1811
    %v1916 = vpop.f32.mrb[0].mxu0
    %v1917 = vadd.f32 0.0, %v1916
    %v1918 = vpop.f32.mrb[0].mxu0
    %v1919 = vpop.f32.mrb[0].mxu0
    %v1920 = vadd.f32 0.0, %v1919
    %v1921 = vpop.f32.mrb[0].mxu0
    %1922 = vdwg.mxu0
    %v1927 = vunpack.c.l.b16 %v1763
    %v1928 = vunpack.c.l.b16 %v1764
    %v1929 = vunpack.c.l.b16 %v1765
    %v1930 = vunpack.c.l.b16 %v1766
    %v1931 = vpack.c.b16 %v1928, %v1927
    %v1932 = vpack.c.b16 %v1930, %v1929
    %1935 = vmatprep.subr.bf16.mxu0 0
    %1936 = vmatpush1.bf16.msra.mxu0 %v1931
    %1937 = vmatprep.subr.bf16.mxu0 0
    %1938 = vmatpush1.bf16.msra.mxu0 %v1932
    %1939 = vmatprep.subr.bf16.mxu0 0
    %1940 = vmatpush1.bf16.msra.mxu0 0
    %1941 = vmatprep.subr.bf16.mxu0 0
    %1942 = vmatpush1.bf16.msra.mxu0 0
    %1943 = vmatprep.subr.bf16.mxu0 0
    %1944 = vmatpush1.bf16.msra.mxu0 0
    %1945 = vmatprep.subr.bf16.mxu0 0
    %1946 = vmatpush1.bf16.msra.mxu0 0
    %1947 = vmatprep.subr.bf16.mxu0 0
    %1948 = vmatpush1.bf16.msra.mxu0 0
    %1949 = vmatprep.subr.bf16.mxu0 0
    %1950 = vmatpush1.bf16.msra.mxu0 0
    %1951 = vmatprep.subr.bf16.mxu0 0
    %1952 = vmatpush1.bf16.msra.mxu0 0
    %1953 = vmatprep.subr.bf16.mxu0 0
    %1954 = vmatpush1.bf16.msra.mxu0 0
    %1955 = vmatprep.subr.bf16.mxu0 0
    %1956 = vmatpush1.bf16.msra.mxu0 0
    %1957 = vmatprep.subr.bf16.mxu0 0
    %1958 = vmatpush1.bf16.msra.mxu0 0
    %1959 = vmatprep.subr.bf16.mxu0 0
    %1960 = vmatpush1.bf16.msra.mxu0 0
    %1961 = vmatprep.subr.bf16.mxu0 0
    %1962 = vmatpush1.bf16.msra.mxu0 0
    %1963 = vmatprep.subr.bf16.mxu0 0
    %1964 = vmatpush1.bf16.msra.mxu0 0
    %1965 = vmatprep.subr.bf16.mxu0 0
    %1966 = vmatpush1.bf16.msra.mxu0 0
    %1967 = vmatprep.mubr.bf16.mxu0 0
    %1968 = vmatmul.mubr.bf16.gmra.mrb[0].mxu0 %v1808
    %v1969 = vpop.f32.mrb[0].mxu0
    %v1970 = vadd.f32 0.0, %v1969
    %v1971 = vpop.f32.mrb[0].mxu0
    %v1972 = vpop.f32.mrb[0].mxu0
    %v1973 = vadd.f32 0.0, %v1972
    %v1974 = vpop.f32.mrb[0].mxu0
    %1975 = vmatprep.mubr.bf16.mxu0 0
    %1976 = vmatmul.mubr.bf16.gmra.mrb[0].mxu0 %v1811
    %v1977 = vpop.f32.mrb[0].mxu0
    %v1978 = vadd.f32 0.0, %v1977
    %v1979 = vpop.f32.mrb[0].mxu0
    %v1980 = vpop.f32.mrb[0].mxu0
    %v1981 = vadd.f32 0.0, %v1980
    %v1982 = vpop.f32.mrb[0].mxu0
    %1983 = vdwg.mxu0
    %v1988 = vunpack.c.l.b16 %v1768
    %v1989 = vunpack.c.l.b16 %v1769
    %v1990 = vunpack.c.l.b16 %v1770
    %v1991 = vunpack.c.l.b16 %v1771
    %v1992 = vpack.c.b16 %v1989, %v1988
    %v1993 = vpack.c.b16 %v1991, %v1990
    %1996 = vmatprep.subr.bf16.mxu0 0
    %1997 = vmatpush1.bf16.msra.mxu0 %v1992
    %1998 = vmatprep.subr.bf16.mxu0 0
    %1999 = vmatpush1.bf16.msra.mxu0 %v1993
    %2000 = vmatprep.subr.bf16.mxu0 0
    %2001 = vmatpush1.bf16.msra.mxu0 0
    %2002 = vmatprep.subr.bf16.mxu0 0
    %2003 = vmatpush1.bf16.msra.mxu0 0
    %2004 = vmatprep.subr.bf16.mxu0 0
    %2005 = vmatpush1.bf16.msra.mxu0 0
    %2006 = vmatprep.subr.bf16.mxu0 0
    %2007 = vmatpush1.bf16.msra.mxu0 0
    %2008 = vmatprep.subr.bf16.mxu0 0
    %2009 = vmatpush1.bf16.msra.mxu0 0
    %2010 = vmatprep.subr.bf16.mxu0 0
    %2011 = vmatpush1.bf16.msra.mxu0 0
    %2012 = vmatprep.subr.bf16.mxu0 0
    %2013 = vmatpush1.bf16.msra.mxu0 0
    %2014 = vmatprep.subr.bf16.mxu0 0
    %2015 = vmatpush1.bf16.msra.mxu0 0
    %2016 = vmatprep.subr.bf16.mxu0 0
    %2017 = vmatpush1.bf16.msra.mxu0 0
    %2018 = vmatprep.subr.bf16.mxu0 0
    %2019 = vmatpush1.bf16.msra.mxu0 0
    %2020 = vmatprep.subr.bf16.mxu0 0
    %2021 = vmatpush1.bf16.msra.mxu0 0
    %2022 = vmatprep.subr.bf16.mxu0 0
    %2023 = vmatpush1.bf16.msra.mxu0 0
    %2024 = vmatprep.subr.bf16.mxu0 0
    %2025 = vmatpush1.bf16.msra.mxu0 0
    %2026 = vmatprep.subr.bf16.mxu0 0
    %2027 = vmatpush1.bf16.msra.mxu0 0
    %2028 = vmatprep.mubr.bf16.mxu0 0
    %2029 = vmatmul.mubr.bf16.gmra.mrb[0].mxu0 %v1808
    %v2030 = vpop.f32.mrb[0].mxu0
    %v2031 = vadd.f32 0.0, %v2030
    %v2032 = vpop.f32.mrb[0].mxu0
    %v2033 = vpop.f32.mrb[0].mxu0
    %v2034 = vadd.f32 0.0, %v2033
    %v2035 = vpop.f32.mrb[0].mxu0
    %2036 = vmatprep.mubr.bf16.mxu0 0
    %2037 = vmatmul.mubr.bf16.gmra.mrb[0].mxu0 %v1811
    %v2038 = vpop.f32.mrb[0].mxu0
    %v2039 = vadd.f32 0.0, %v2038
    %v2040 = vpop.f32.mrb[0].mxu0
    %v2041 = vpop.f32.mrb[0].mxu0
    %v2042 = vadd.f32 0.0, %v2041
    %v2043 = vpop.f32.mrb[0].mxu0
    %2044 = vdwg.mxu0
    %v2049 = vunpack.c.l.b16 %v1773
    %v2050 = vunpack.c.l.b16 %v1774
    %v2051 = vunpack.c.l.b16 %v1775
    %v2052 = vunpack.c.l.b16 %v1776
    %v2053 = vpack.c.b16 %v2050, %v2049
    %v2054 = vpack.c.b16 %v2052, %v2051
    %2057 = vmatprep.subr.bf16.mxu0 0
    %2058 = vmatpush1.bf16.msra.mxu0 %v2053
    %2059 = vmatprep.subr.bf16.mxu0 0
    %2060 = vmatpush1.bf16.msra.mxu0 %v2054
    %2061 = vmatprep.subr.bf16.mxu0 0
    %2062 = vmatpush1.bf16.msra.mxu0 0
    %2063 = vmatprep.subr.bf16.mxu0 0
    %2064 = vmatpush1.bf16.msra.mxu0 0
    %2065 = vmatprep.subr.bf16.mxu0 0
    %2066 = vmatpush1.bf16.msra.mxu0 0
    %2067 = vmatprep.subr.bf16.mxu0 0
    %2068 = vmatpush1.bf16.msra.mxu0 0
    %2069 = vmatprep.subr.bf16.mxu0 0
    %2070 = vmatpush1.bf16.msra.mxu0 0
    %2071 = vmatprep.subr.bf16.mxu0 0
    %2072 = vmatpush1.bf16.msra.mxu0 0
    %2073 = vmatprep.subr.bf16.mxu0 0
    %2074 = vmatpush1.bf16.msra.mxu0 0
    %2075 = vmatprep.subr.bf16.mxu0 0
    %2076 = vmatpush1.bf16.msra.mxu0 0
    %2077 = vmatprep.subr.bf16.mxu0 0
    %2078 = vmatpush1.bf16.msra.mxu0 0
    %2079 = vmatprep.subr.bf16.mxu0 0
    %2080 = vmatpush1.bf16.msra.mxu0 0
    %2081 = vmatprep.subr.bf16.mxu0 0
    %2082 = vmatpush1.bf16.msra.mxu0 0
    %2083 = vmatprep.subr.bf16.mxu0 0
    %2084 = vmatpush1.bf16.msra.mxu0 0
    %2085 = vmatprep.subr.bf16.mxu0 0
    %2086 = vmatpush1.bf16.msra.mxu0 0
    %2087 = vmatprep.subr.bf16.mxu0 0
    %2088 = vmatpush1.bf16.msra.mxu0 0
    %2089 = vmatprep.mubr.bf16.mxu0 0
    %2090 = vmatmul.mubr.bf16.gmra.mrb[0].mxu0 %v1808
    %v2091 = vpop.f32.mrb[0].mxu0
    %v2092 = vadd.f32 0.0, %v2091
    %v2093 = vpop.f32.mrb[0].mxu0
    %v2094 = vpop.f32.mrb[0].mxu0
    %v2095 = vadd.f32 0.0, %v2094
    %v2096 = vpop.f32.mrb[0].mxu0
    %2097 = vmatprep.mubr.bf16.mxu0 0
    %2098 = vmatmul.mubr.bf16.gmra.mrb[0].mxu0 %v1811
    %v2099 = vpop.f32.mrb[0].mxu0
    %v2100 = vadd.f32 0.0, %v2099
    %v2101 = vpop.f32.mrb[0].mxu0
    %v2102 = vpop.f32.mrb[0].mxu0
    %v2103 = vadd.f32 0.0, %v2102
    %v2104 = vpop.f32.mrb[0].mxu0
    %2105 = vdwg.mxu0
    %v2110 = vunpack.c.l.b16 %v1778
    %v2111 = vunpack.c.l.b16 %v1779
    %v2112 = vunpack.c.l.b16 %v1780
    %v2113 = vunpack.c.l.b16 %v1781
    %v2114 = vpack.c.b16 %v2111, %v2110
    %v2115 = vpack.c.b16 %v2113, %v2112
    %2118 = vmatprep.subr.bf16.mxu0 0
    %2119 = vmatpush1.bf16.msra.mxu0 %v2114
    %2120 = vmatprep.subr.bf16.mxu0 0
    %2121 = vmatpush1.bf16.msra.mxu0 %v2115
    %2122 = vmatprep.subr.bf16.mxu0 0
    %2123 = vmatpush1.bf16.msra.mxu0 0
    %2124 = vmatprep.subr.bf16.mxu0 0
    %2125 = vmatpush1.bf16.msra.mxu0 0
    %2126 = vmatprep.subr.bf16.mxu0 0
    %2127 = vmatpush1.bf16.msra.mxu0 0
    %2128 = vmatprep.subr.bf16.mxu0 0
    %2129 = vmatpush1.bf16.msra.mxu0 0
    %2130 = vmatprep.subr.bf16.mxu0 0
    %2131 = vmatpush1.bf16.msra.mxu0 0
    %2132 = vmatprep.subr.bf16.mxu0 0
    %2133 = vmatpush1.bf16.msra.mxu0 0
    %2134 = vmatprep.subr.bf16.mxu0 0
    %2135 = vmatpush1.bf16.msra.mxu0 0
    %2136 = vmatprep.subr.bf16.mxu0 0
    %2137 = vmatpush1.bf16.msra.mxu0 0
    %2138 = vmatprep.subr.bf16.mxu0 0
    %2139 = vmatpush1.bf16.msra.mxu0 0
    %2140 = vmatprep.subr.bf16.mxu0 0
    %2141 = vmatpush1.bf16.msra.mxu0 0
    %2142 = vmatprep.subr.bf16.mxu0 0
    %2143 = vmatpush1.bf16.msra.mxu0 0
    %2144 = vmatprep.subr.bf16.mxu0 0
    %2145 = vmatpush1.bf16.msra.mxu0 0
    %2146 = vmatprep.subr.bf16.mxu0 0
    %2147 = vmatpush1.bf16.msra.mxu0 0
    %2148 = vmatprep.subr.bf16.mxu0 0
    %2149 = vmatpush1.bf16.msra.mxu0 0
    %2150 = vmatprep.mubr.bf16.mxu0 0
    %2151 = vmatmul.mubr.bf16.gmra.mrb[0].mxu0 %v1808
    %v2152 = vpop.f32.mrb[0].mxu0
    %v2153 = vadd.f32 0.0, %v2152
    %v2154 = vpop.f32.mrb[0].mxu0
    %v2155 = vpop.f32.mrb[0].mxu0
    %v2156 = vadd.f32 0.0, %v2155
    %v2157 = vpop.f32.mrb[0].mxu0
    %2158 = vmatprep.mubr.bf16.mxu0 0
    %2159 = vmatmul.mubr.bf16.gmra.mrb[0].mxu0 %v1811
    %v2160 = vpop.f32.mrb[0].mxu0
    %v2161 = vadd.f32 0.0, %v2160
    %v2162 = vpop.f32.mrb[0].mxu0
    %v2163 = vpop.f32.mrb[0].mxu0
    %v2164 = vadd.f32 0.0, %v2163
    %v2165 = vpop.f32.mrb[0].mxu0
    %2166 = vdwg.mxu0
    %v2171 = vunpack.c.l.b16 %v1783
    %v2172 = vunpack.c.l.b16 %v1784
    %v2173 = vunpack.c.l.b16 %v1785
    %v2174 = vunpack.c.l.b16 %v1786
    %v2175 = vpack.c.b16 %v2172, %v2171
    %v2176 = vpack.c.b16 %v2174, %v2173
    %2179 = vmatprep.subr.bf16.mxu0 0
    %2180 = vmatpush1.bf16.msra.mxu0 %v2175
    %2181 = vmatprep.subr.bf16.mxu0 0
    %2182 = vmatpush1.bf16.msra.mxu0 %v2176
    %2183 = vmatprep.subr.bf16.mxu0 0
    %2184 = vmatpush1.bf16.msra.mxu0 0
    %2185 = vmatprep.subr.bf16.mxu0 0
    %2186 = vmatpush1.bf16.msra.mxu0 0
    %2187 = vmatprep.subr.bf16.mxu0 0
    %2188 = vmatpush1.bf16.msra.mxu0 0
    %2189 = vmatprep.subr.bf16.mxu0 0
    %2190 = vmatpush1.bf16.msra.mxu0 0
    %2191 = vmatprep.subr.bf16.mxu0 0
    %2192 = vmatpush1.bf16.msra.mxu0 0
    %2193 = vmatprep.subr.bf16.mxu0 0
    %2194 = vmatpush1.bf16.msra.mxu0 0
    %2195 = vmatprep.subr.bf16.mxu0 0
    %2196 = vmatpush1.bf16.msra.mxu0 0
    %2197 = vmatprep.subr.bf16.mxu0 0
    %2198 = vmatpush1.bf16.msra.mxu0 0
    %2199 = vmatprep.subr.bf16.mxu0 0
    %2200 = vmatpush1.bf16.msra.mxu0 0
    %2201 = vmatprep.subr.bf16.mxu0 0
    %2202 = vmatpush1.bf16.msra.mxu0 0
    %2203 = vmatprep.subr.bf16.mxu0 0
    %2204 = vmatpush1.bf16.msra.mxu0 0
    %2205 = vmatprep.subr.bf16.mxu0 0
    %2206 = vmatpush1.bf16.msra.mxu0 0
    %2207 = vmatprep.subr.bf16.mxu0 0
    %2208 = vmatpush1.bf16.msra.mxu0 0
    %2209 = vmatprep.subr.bf16.mxu0 0
    %2210 = vmatpush1.bf16.msra.mxu0 0
    %2211 = vmatprep.mubr.bf16.mxu0 0
    %2212 = vmatmul.mubr.bf16.gmra.mrb[0].mxu0 %v1808
    %v2213 = vpop.f32.mrb[0].mxu0
    %v2214 = vadd.f32 0.0, %v2213
    %v2215 = vpop.f32.mrb[0].mxu0
    %v2216 = vpop.f32.mrb[0].mxu0
    %v2217 = vadd.f32 0.0, %v2216
    %v2218 = vpop.f32.mrb[0].mxu0
    %2219 = vmatprep.mubr.bf16.mxu0 0
    %2220 = vmatmul.mubr.bf16.gmra.mrb[0].mxu0 %v1811
    %v2221 = vpop.f32.mrb[0].mxu0
    %v2222 = vadd.f32 0.0, %v2221
    %v2223 = vpop.f32.mrb[0].mxu0
    %v2224 = vpop.f32.mrb[0].mxu0
    %v2225 = vadd.f32 0.0, %v2224
    %v2226 = vpop.f32.mrb[0].mxu0
    %2227 = vdwg.mxu0
    %v2232 = vunpack.c.l.b16 %v1788
    %v2233 = vunpack.c.l.b16 %v1789
    %v2234 = vunpack.c.l.b16 %v1790
    %v2235 = vunpack.c.l.b16 %v1791
    %v2236 = vpack.c.b16 %v2233, %v2232
    %v2237 = vpack.c.b16 %v2235, %v2234
    %2240 = vmatprep.subr.bf16.mxu0 0
    %2241 = vmatpush1.bf16.msra.mxu0 %v2236
    %2242 = vmatprep.subr.bf16.mxu0 0
    %2243 = vmatpush1.bf16.msra.mxu0 %v2237
    %2244 = vmatprep.subr.bf16.mxu0 0
    %2245 = vmatpush1.bf16.msra.mxu0 0
    %2246 = vmatprep.subr.bf16.mxu0 0
    %2247 = vmatpush1.bf16.msra.mxu0 0
    %2248 = vmatprep.subr.bf16.mxu0 0
    %2249 = vmatpush1.bf16.msra.mxu0 0
    %2250 = vmatprep.subr.bf16.mxu0 0
    %2251 = vmatpush1.bf16.msra.mxu0 0
    %2252 = vmatprep.subr.bf16.mxu0 0
    %2253 = vmatpush1.bf16.msra.mxu0 0
    %2254 = vmatprep.subr.bf16.mxu0 0
    %2255 = vmatpush1.bf16.msra.mxu0 0
    %2256 = vmatprep.subr.bf16.mxu0 0
    %2257 = vmatpush1.bf16.msra.mxu0 0
    %2258 = vmatprep.subr.bf16.mxu0 0
    %2259 = vmatpush1.bf16.msra.mxu0 0
    %2260 = vmatprep.subr.bf16.mxu0 0
    %2261 = vmatpush1.bf16.msra.mxu0 0
    %2262 = vmatprep.subr.bf16.mxu0 0
    %2263 = vmatpush1.bf16.msra.mxu0 0
    %2264 = vmatprep.subr.bf16.mxu0 0
    %2265 = vmatpush1.bf16.msra.mxu0 0
    %2266 = vmatprep.subr.bf16.mxu0 0
    %2267 = vmatpush1.bf16.msra.mxu0 0
    %2268 = vmatprep.subr.bf16.mxu0 0
    %2269 = vmatpush1.bf16.msra.mxu0 0
    %2270 = vmatprep.subr.bf16.mxu0 0
    %2271 = vmatpush1.bf16.msra.mxu0 0
    %2272 = vmatprep.mubr.bf16.mxu0 0
    %2273 = vmatmul.mubr.bf16.gmra.mrb[0].mxu0 %v1808
    %v2274 = vpop.f32.mrb[0].mxu0
    %v2275 = vadd.f32 0.0, %v2274
    %v2276 = vpop.f32.mrb[0].mxu0
    %v2277 = vpop.f32.mrb[0].mxu0
    %v2278 = vadd.f32 0.0, %v2277
    %v2279 = vpop.f32.mrb[0].mxu0
    %2280 = vmatprep.mubr.bf16.mxu0 0
    %2281 = vmatmul.mubr.bf16.gmra.mrb[0].mxu0 %v1811
    %v2282 = vpop.f32.mrb[0].mxu0
    %v2283 = vadd.f32 0.0, %v2282
    %v2284 = vpop.f32.mrb[0].mxu0
    %v2285 = vpop.f32.mrb[0].mxu0
    %v2286 = vadd.f32 0.0, %v2285
    %v2287 = vpop.f32.mrb[0].mxu0
    %2288 = vdwg.mxu0
    %v2289 = vpack.c.bf16 %v1851, %v1848
    %v2290 = vpack.c.bf16 %v1859, %v1856
    %v2291 = vpack.c.bf16 %v1912, %v1909
    %v2292 = vpack.c.bf16 %v1920, %v1917
    %v2293 = vpack.c.bf16 %v1973, %v1970
    %v2294 = vpack.c.bf16 %v1981, %v1978
    %v2295 = vpack.c.bf16 %v2034, %v2031
    %v2296 = vpack.c.bf16 %v2042, %v2039
    %v2297 = vpack.c.bf16 %v2095, %v2092
    %v2298 = vpack.c.bf16 %v2103, %v2100
    %v2299 = vpack.c.bf16 %v2156, %v2153
    %v2300 = vpack.c.bf16 %v2164, %v2161
    %v2301 = vpack.c.bf16 %v2217, %v2214
    %v2302 = vpack.c.bf16 %v2225, %v2222
    %v2303 = vpack.c.bf16 %v2278, %v2275
    %v2304 = vpack.c.bf16 %v2286, %v2283
    %v2305 = vld [vmem:[#allocation8] sm:$0xff]
    %v2306 = vld [vmem:[#allocation8 + $0x8] sm:$0xf]
    %v2307 = vld [vmem:[#allocation8 + $0xc] sm:$0xff]
    %v2308 = vld [vmem:[#allocation8 + $0x14] sm:$0xf]
    %v2309 = vld [vmem:[#allocation8 + $0x18] sm:$0xff]
    %v2310 = vld [vmem:[#allocation8 + $0x20] sm:$0xf]
    %v2311 = vld [vmem:[#allocation8 + $0x24] sm:$0xff]
    %v2312 = vld [vmem:[#allocation8 + $0x2c] sm:$0xf]
    %v2321 = vunpack.c.l.b16 %v2305
    %v2322 = vunpack.c.h.b16 %v2305
    %v2323 = vunpack.c.l.b16 %v2306
    %v2324 = vunpack.c.l.b16 %v2307
    %v2325 = vunpack.c.h.b16 %v2307
    %v2326 = vunpack.c.l.b16 %v2308
    %v2327 = vunpack.c.l.b16 %v2309
    %v2328 = vunpack.c.h.b16 %v2309
    %v2329 = vunpack.c.l.b16 %v2310
    %v2330 = vunpack.c.l.b16 %v2311
    %v2331 = vunpack.c.h.b16 %v2311
    %v2332 = vunpack.c.l.b16 %v2312
    %v2333 = vpack.c.b16 %v2324, %v2321
    %v2334 = vpack.c.b16 %v2325, %v2322
    %v2335 = vpack.c.b16 %v2326, %v2323
    %v2336 = vpack.c.b16 %v2330, %v2327
    %v2337 = vpack.c.b16 %v2331, %v2328
    %v2338 = vpack.c.b16 %v2332, %v2329
    %v2344 = vsel %vm1806, %v2335, 0
    %v2347 = vsel %vm1806, %v2338, 0
    %2349 = vmatprep.subr.bf16.mxu0 0
    %2350 = vmatpush1.bf16.msra.mxu0 %v2289
    %2351 = vmatprep.subr.bf16.mxu0 0
    %2352 = vmatpush1.bf16.msra.mxu0 %v2290
    %2353 = vmatprep.subr.bf16.mxu0 0
    %2354 = vmatpush1.bf16.msra.mxu0 %v2291
    %2355 = vmatprep.subr.bf16.mxu0 0
    %2356 = vmatpush1.bf16.msra.mxu0 %v2292
    %2357 = vmatprep.subr.bf16.mxu0 0
    %2358 = vmatpush1.bf16.msra.mxu0 %v2293
    %2359 = vmatprep.subr.bf16.mxu0 0
    %2360 = vmatpush1.bf16.msra.mxu0 %v2294
    %2361 = vmatprep.subr.bf16.mxu0 0
    %2362 = vmatpush1.bf16.msra.mxu0 %v2295
    %2363 = vmatprep.subr.bf16.mxu0 0
    %2364 = vmatpush1.bf16.msra.mxu0 %v2296
    %2365 = vmatprep.subr.bf16.mxu0 0
    %2366 = vmatpush1.bf16.msra.mxu0 %v1792
    %2367 = vmatprep.subr.bf16.mxu0 0
    %2368 = vmatpush1.bf16.msra.mxu0 %v1793
    %2369 = vmatprep.subr.bf16.mxu0 0
    %2370 = vmatpush1.bf16.msra.mxu0 %v2297
    %2371 = vmatprep.subr.bf16.mxu0 0
    %2372 = vmatpush1.bf16.msra.mxu0 %v2298
    %2373 = vmatprep.subr.bf16.mxu0 0
    %2374 = vmatpush1.bf16.msra.mxu0 %v2299
    %2375 = vmatprep.subr.bf16.mxu0 0
    %2376 = vmatpush1.bf16.msra.mxu0 %v2300
    %2377 = vmatprep.subr.bf16.mxu0 0
    %2378 = vmatpush1.bf16.msra.mxu0 %v2301
    %2379 = vmatprep.subr.bf16.mxu0 0
    %2380 = vmatpush1.bf16.msra.mxu0 %v2302
    %2381 = vmatprep.mubr.bf16.mxu0 %v2334
    %2382 = vmatmul.mubr.bf16.gmra.mrb[0].mxu0 %v2333
    %v2383 = vpop.f32.mrb[0].mxu0
    %v2384 = vadd.f32 0.0, %v2383
    %v2385 = vpop.f32.mrb[0].mxu0
    %v2386 = vpop.f32.mrb[0].mxu0
    %v2387 = vadd.f32 0.0, %v2386
    %v2388 = vpop.f32.mrb[0].mxu0
    %2389 = vmatprep.mubr.bf16.mxu0 %v2337
    %2390 = vmatmul.mubr.bf16.gmra.mrb[0].mxu0 %v2336
    %v2391 = vpop.f32.mrb[0].mxu0
    %v2392 = vadd.f32 0.0, %v2391
    %v2393 = vpop.f32.mrb[0].mxu0
    %v2394 = vpop.f32.mrb[0].mxu0
    %v2395 = vadd.f32 0.0, %v2394
    %v2396 = vpop.f32.mrb[0].mxu0
    %2397 = vdwg.mxu0
    %2398 = vmatprep.subr.bf16.mxu0 0
    %2399 = vmatpush1.bf16.msra.mxu0 %v2303
    %2400 = vmatprep.subr.bf16.mxu0 0
    %2401 = vmatpush1.bf16.msra.mxu0 %v2304
    %2402 = vmatprep.subr.bf16.mxu0 0
    %2403 = vmatpush1.bf16.msra.mxu0 0
    %2404 = vmatprep.subr.bf16.mxu0 0
    %2405 = vmatpush1.bf16.msra.mxu0 0
    %2406 = vmatprep.subr.bf16.mxu0 0
    %2407 = vmatpush1.bf16.msra.mxu0 0
    %2408 = vmatprep.subr.bf16.mxu0 0
    %2409 = vmatpush1.bf16.msra.mxu0 0
    %2410 = vmatprep.subr.bf16.mxu0 0
    %2411 = vmatpush1.bf16.msra.mxu0 0
    %2412 = vmatprep.subr.bf16.mxu0 0
    %2413 = vmatpush1.bf16.msra.mxu0 0
    %2414 = vmatprep.subr.bf16.mxu0 0
    %2415 = vmatpush1.bf16.msra.mxu0 0
    %2416 = vmatprep.subr.bf16.mxu0 0
    %2417 = vmatpush1.bf16.msra.mxu0 0
    %2418 = vmatprep.subr.bf16.mxu0 0
    %2419 = vmatpush1.bf16.msra.mxu0 0
    %2420 = vmatprep.subr.bf16.mxu0 0
    %2421 = vmatpush1.bf16.msra.mxu0 0
    %2422 = vmatprep.subr.bf16.mxu0 0
    %2423 = vmatpush1.bf16.msra.mxu0 0
    %2424 = vmatprep.subr.bf16.mxu0 0
    %2425 = vmatpush1.bf16.msra.mxu0 0
    %2426 = vmatprep.subr.bf16.mxu0 0
    %2427 = vmatpush1.bf16.msra.mxu0 0
    %2428 = vmatprep.subr.bf16.mxu0 0
    %2429 = vmatpush1.bf16.msra.mxu0 0
    %2430 = vmatprep.mubr.bf16.mxu0 0
    %2431 = vmatmul.mubr.bf16.gmra.mrb[0].mxu0 %v2344
    %v2432 = vpop.f32.mrb[0].mxu0
    %v2433 = vadd.f32 %v2384, %v2432
    %v2434 = vpop.f32.mrb[0].mxu0
    %v2435 = vpop.f32.mrb[0].mxu0
    %v2436 = vadd.f32 %v2387, %v2435
    %v2437 = vpop.f32.mrb[0].mxu0
    %2438 = vmatprep.mubr.bf16.mxu0 0
    %2439 = vmatmul.mubr.bf16.gmra.mrb[0].mxu0 %v2347
    %v2440 = vpop.f32.mrb[0].mxu0
    %v2441 = vadd.f32 %v2392, %v2440
    %v2442 = vpop.f32.mrb[0].mxu0
    %v2443 = vpop.f32.mrb[0].mxu0
    %v2444 = vadd.f32 %v2395, %v2443
    %v2445 = vpop.f32.mrb[0].mxu0
    %2446 = vdwg.mxu0
    %v2447 = vsel %vm1806, %v2433, 0.0
    %2448 = vadd.xlane.f32.xlu0 %v2447
    %v2449 = vpop.xlane.xlu0 %2448
    %v2450 = vsel %vm1806, %v2436, 0.0
    %2451 = vadd.xlane.f32.xlu0 %v2450
    %v2452 = vpop.xlane.xlu0 %2451
    %v2453 = vsel %vm1806, %v2441, 0.0
    %2454 = vadd.xlane.f32.xlu0 %v2453
    %v2455 = vpop.xlane.xlu0 %2454
    %v2456 = vsel %vm1806, %v2444, 0.0
    %2457 = vadd.xlane.f32.xlu0 %v2456
    %v2458 = vpop.xlane.xlu0 %2457
    %v2459 = vrcp.pop 32.0
    %v2460 = vmul.f32 %v2449, %v2459
    %v2461 = vmul.f32 %v2452, %v2459
    %v2462 = vmul.f32 %v2455, %v2459
    %v2463 = vmul.f32 %v2458, %v2459
    %v2464 = vsub.f32 %v2433, %v2460
    %v2465 = vsub.f32 %v2436, %v2461
    %v2466 = vsub.f32 %v2441, %v2462
    %v2467 = vsub.f32 %v2444, %v2463
    %v2468 = vmul.f32 %v2464, %v2464
    %v2469 = vmul.f32 %v2465, %v2465
    %v2470 = vmul.f32 %v2466, %v2466
    %v2471 = vmul.f32 %v2467, %v2467
    %v2472 = vsel %vm1806, %v2468, 0.0
    %2473 = vadd.xlane.f32.xlu0 %v2472
    %v2474 = vpop.xlane.xlu0 %2473
    %v2475 = vsel %vm1806, %v2469, 0.0
    %2476 = vadd.xlane.f32.xlu0 %v2475
    %v2477 = vpop.xlane.xlu0 %2476
    %v2478 = vsel %vm1806, %v2470, 0.0
    %2479 = vadd.xlane.f32.xlu0 %v2478
    %v2480 = vpop.xlane.xlu0 %2479
    %v2481 = vsel %vm1806, %v2471, 0.0
    %2482 = vadd.xlane.f32.xlu0 %v2481
    %v2483 = vpop.xlane.xlu0 %2482
    %v2484 = vmul.f32 %v2474, %v2459
    %v2485 = vmul.f32 %v2477, %v2459
    %v2486 = vmul.f32 %v2480, %v2459
    %v2487 = vmul.f32 %v2483, %v2459
    %v2488 = vmul.f32 %v2464, 1.1
    %v2489 = vmul.f32 %v2465, 1.1
    %v2490 = vmul.f32 %v2466, 1.1
    %v2491 = vmul.f32 %v2467, 1.1
    %v2492 = vadd.f32 %v2484, 1e-05
    %v2493 = vadd.f32 %v2485, 1e-05
    %v2494 = vadd.f32 %v2486, 1e-05
    %v2495 = vadd.f32 %v2487, 1e-05
    %v2496 = vrsqrt.pop %v2492
    %v2497 = vrsqrt.pop %v2493
    %v2498 = vrsqrt.pop %v2494
    %v2499 = vrsqrt.pop %v2495
    %v2500 = vmul.f32 %v2488, %v2496
    %v2501 = vmul.f32 %v2489, %v2497
    %v2502 = vmul.f32 %v2490, %v2498
    %v2503 = vmul.f32 %v2491, %v2499
    %v2504 = vmul.f32 %v2500, 0.70710677
    %v2505 = vmul.f32 %v2501, 0.70710677
    %v2506 = vmul.f32 %v2502, 0.70710677
    %v2507 = vmul.f32 %v2503, 0.70710677
    %v2508 = vand.u32 2147483647, %v2504
    %v2509 = vand.u32 2147483647, %v2505
    %v2510 = vand.u32 2147483647, %v2506
    %v2511 = vand.u32 2147483647, %v2507
    %v2512 = vmul.f32 %v2508, 0.3275911
    %v2513 = vmul.f32 %v2509, 0.3275911
    %v2514 = vmul.f32 %v2510, 0.3275911
    %v2515 = vmul.f32 %v2511, 0.3275911
    %v2516 = vadd.f32 %v2512, 1.0
    %v2517 = vadd.f32 %v2513, 1.0
    %v2518 = vadd.f32 %v2514, 1.0
    %v2519 = vadd.f32 %v2515, 1.0
    %v2520 = vrcp.pop %v2516
    %v2521 = vrcp.pop %v2517
    %v2522 = vrcp.pop %v2518
    %v2523 = vrcp.pop %v2519
    %v2524 = vmul.f32 %v2516, %v2520
    %v2525 = vmul.f32 %v2517, %v2521
    %v2526 = vmul.f32 %v2518, %v2522
    %v2527 = vmul.f32 %v2519, %v2523
    %v2528 = vsub.f32 2.0, %v2524
    %v2529 = vsub.f32 2.0, %v2525
    %v2530 = vsub.f32 2.0, %v2526
    %v2531 = vsub.f32 2.0, %v2527
    %v2532 = vmul.f32 %v2520, %v2528
    %v2533 = vmul.f32 %v2521, %v2529
    %v2534 = vmul.f32 %v2522, %v2530
    %v2535 = vmul.f32 %v2523, %v2531
    %v2536 = vmul.f32 %v2532, 1.0614054
    %v2537 = vmul.f32 %v2533, 1.0614054
    %v2538 = vmul.f32 %v2534, 1.0614054
    %v2539 = vmul.f32 %v2535, 1.0614054
    %v2540 = vsub.f32 %v2536, 1.4531521
    %v2541 = vsub.f32 %v2537, 1.4531521
    %v2542 = vsub.f32 %v2538, 1.4531521
    %v2543 = vsub.f32 %v2539, 1.4531521
    %v2544 = vmul.f32 %v2540, %v2532
    %v2545 = vmul.f32 %v2541, %v2533
    %v2546 = vmul.f32 %v2542, %v2534
    %v2547 = vmul.f32 %v2543, %v2535
    %v2548 = vadd.f32 %v2544, 1.4214138
    %v2549 = vadd.f32 %v2545, 1.4214138
    %v2550 = vadd.f32 %v2546, 1.4214138
    %v2551 = vadd.f32 %v2547, 1.4214138
    %v2552 = vmul.f32 %v2548, %v2532
    %v2553 = vmul.f32 %v2549, %v2533
    %v2554 = vmul.f32 %v2550, %v2534
    %v2555 = vmul.f32 %v2551, %v2535
    %v2556 = vsub.f32 %v2552, 0.28449672
    %v2557 = vsub.f32 %v2553, 0.28449672
    %v2558 = vsub.f32 %v2554, 0.28449672
    %v2559 = vsub.f32 %v2555, 0.28449672
    %v2560 = vmul.f32 %v2556, %v2532
    %v2561 = vmul.f32 %v2557, %v2533
    %v2562 = vmul.f32 %v2558, %v2534
    %v2563 = vmul.f32 %v2559, %v2535
    %v2564 = vadd.f32 %v2560, 0.2548296
    %v2565 = vadd.f32 %v2561, 0.2548296
    %v2566 = vadd.f32 %v2562, 0.2548296
    %v2567 = vadd.f32 %v2563, 0.2548296
    %v2568 = vmul.f32 %v2564, %v2532
    %v2569 = vmul.f32 %v2565, %v2533
    %v2570 = vmul.f32 %v2566, %v2534
    %v2571 = vmul.f32 %v2567, %v2535
    %v2572 = vsub.f32 0.0, %v2508
    %v2573 = vsub.f32 0.0, %v2509
    %v2574 = vsub.f32 0.0, %v2510
    %v2575 = vsub.f32 0.0, %v2511
    %v2576 = vmul.f32 %v2572, %v2508
    %v2577 = vmul.f32 %v2573, %v2509
    %v2578 = vmul.f32 %v2574, %v2510
    %v2579 = vmul.f32 %v2575, %v2511
    %v2580 = vmul.f32 %v2576, 1.442695
    %v2581 = vpow.pop %v2580
    %v2582 = vmul.f32 %v2577, 1.442695
    %v2583 = vpow.pop %v2582
    %v2584 = vmul.f32 %v2578, 1.442695
    %v2585 = vpow.pop %v2584
    %v2586 = vmul.f32 %v2579, 1.442695
    %v2587 = vpow.pop %v2586
    %v2588 = vmul.f32 %v2568, %v2581
    %v2589 = vmul.f32 %v2569, %v2583
    %v2590 = vmul.f32 %v2570, %v2585
    %v2591 = vmul.f32 %v2571, %v2587
    %v2592 = vsub.f32 1.0, %v2588
    %v2593 = vsub.f32 1.0, %v2589
    %v2594 = vsub.f32 1.0, %v2590
    %v2595 = vsub.f32 1.0, %v2591
    %vm2596 = vcmp.ge.f32.partialorder %v2504, 0.0
    %vm2597 = vcmp.ge.f32.partialorder %v2505, 0.0
    %vm2598 = vcmp.ge.f32.partialorder %v2506, 0.0
    %vm2599 = vcmp.ge.f32.partialorder %v2507, 0.0
    %v2600 = vsub.f32 0.0, %v2592
    %v2601 = vsub.f32 0.0, %v2593
    %v2602 = vsub.f32 0.0, %v2594
    %v2603 = vsub.f32 0.0, %v2595
    %v2604 = vsel %vm2596, %v2592, %v2600
    %v2605 = vsel %vm2597, %v2593, %v2601
    %v2606 = vsel %vm2598, %v2594, %v2602
    %v2607 = vsel %vm2599, %v2595, %v2603
    %v2608 = vmul.f32 %v2500, 0.5
    %v2609 = vmul.f32 %v2501, 0.5
    %v2610 = vmul.f32 %v2502, 0.5
    %v2611 = vmul.f32 %v2503, 0.5
    %v2612 = vadd.f32 %v2604, 1.0
    %v2613 = vadd.f32 %v2605, 1.0
    %v2614 = vadd.f32 %v2606, 1.0
    %v2615 = vadd.f32 %v2607, 1.0
    %v2616 = vmul.f32 %v2608, %v2612
    %v2617 = vmul.f32 %v2609, %v2613
    %v2618 = vmul.f32 %v2610, %v2614
    %v2619 = vmul.f32 %v2611, %v2615
    %v2620 = vpack.c.bf16 %v2617, %v2616
    %v2621 = vpack.c.bf16 %v2619, %v2618
    %v2623 = vsel %vm1806, %v2620, 0
    %v2626 = vsel %vm1806, %v2621, 0
    %2628 = vmatprep.subr.bf16.mxu0 0
    %2629 = vmatpush1.bf16.msra.mxu0 %v1802
    %2630 = vmatprep.subr.bf16.mxu0 0
    %2631 = vmatpush1.bf16.msra.mxu0 %v1803
    %2632 = vmatprep.subr.bf16.mxu0 0
    %2633 = vmatpush1.bf16.msra.mxu0 0
    %2634 = vmatprep.subr.bf16.mxu0 0
    %2635 = vmatpush1.bf16.msra.mxu0 0
    %2636 = vmatprep.subr.bf16.mxu0 0
    %2637 = vmatpush1.bf16.msra.mxu0 0
    %2638 = vmatprep.subr.bf16.mxu0 0
    %2639 = vmatpush1.bf16.msra.mxu0 0
    %2640 = vmatprep.subr.bf16.mxu0 0
    %2641 = vmatpush1.bf16.msra.mxu0 0
    %2642 = vmatprep.subr.bf16.mxu0 0
    %2643 = vmatpush1.bf16.msra.mxu0 0
    %2644 = vmatprep.subr.bf16.mxu0 0
    %2645 = vmatpush1.bf16.msra.mxu0 0
    %2646 = vmatprep.subr.bf16.mxu0 0
    %2647 = vmatpush1.bf16.msra.mxu0 0
    %2648 = vmatprep.subr.bf16.mxu0 0
    %2649 = vmatpush1.bf16.msra.mxu0 0
    %2650 = vmatprep.subr.bf16.mxu0 0
    %2651 = vmatpush1.bf16.msra.mxu0 0
    %2652 = vmatprep.subr.bf16.mxu0 0
    %2653 = vmatpush1.bf16.msra.mxu0 0
    %2654 = vmatprep.subr.bf16.mxu0 0
    %2655 = vmatpush1.bf16.msra.mxu0 0
    %2656 = vmatprep.subr.bf16.mxu0 0
    %2657 = vmatpush1.bf16.msra.mxu0 0
    %2658 = vmatprep.subr.bf16.mxu0 0
    %2659 = vmatpush1.bf16.msra.mxu0 0
    %2660 = vmatprep.mubr.bf16.mxu0 0
    %2661 = vmatmul.mubr.bf16.gmra.mrb[0].mxu0 %v2623
    %v2662 = vpop.f32.mrb[0].mxu0
    %v2663 = vadd.f32 0.0, %v2662
    %v2664 = vpop.f32.mrb[0].mxu0
    %v2665 = vpop.f32.mrb[0].mxu0
    %v2666 = vadd.f32 0.0, %v2665
    %v2667 = vpop.f32.mrb[0].mxu0
    %2668 = vmatprep.mubr.bf16.mxu0 0
    %2669 = vmatmul.mubr.bf16.gmra.mrb[0].mxu0 %v2626
    %v2670 = vpop.f32.mrb[0].mxu0
    %v2671 = vadd.f32 0.0, %v2670
    %v2672 = vpop.f32.mrb[0].mxu0
    %v2673 = vpop.f32.mrb[0].mxu0
    %v2674 = vadd.f32 0.0, %v2673
    %v2675 = vpop.f32.mrb[0].mxu0
    %2676 = vdwg.mxu0
    %2677 = vmatprep.subr.bf16.mxu0 0
    %2678 = vmatpush1.bf16.msra.mxu0 %v1870
    %2679 = vmatprep.subr.bf16.mxu0 0
    %2680 = vmatpush1.bf16.msra.mxu0 %v1871
    %2681 = vmatprep.subr.bf16.mxu0 0
    %2682 = vmatpush1.bf16.msra.mxu0 0
    %2683 = vmatprep.subr.bf16.mxu0 0
    %2684 = vmatpush1.bf16.msra.mxu0 0
    %2685 = vmatprep.subr.bf16.mxu0 0
    %2686 = vmatpush1.bf16.msra.mxu0 0
    %2687 = vmatprep.subr.bf16.mxu0 0
    %2688 = vmatpush1.bf16.msra.mxu0 0
    %2689 = vmatprep.subr.bf16.mxu0 0
    %2690 = vmatpush1.bf16.msra.mxu0 0
    %2691 = vmatprep.subr.bf16.mxu0 0
    %2692 = vmatpush1.bf16.msra.mxu0 0
    %2693 = vmatprep.subr.bf16.mxu0 0
    %2694 = vmatpush1.bf16.msra.mxu0 0
    %2695 = vmatprep.subr.bf16.mxu0 0
    %2696 = vmatpush1.bf16.msra.mxu0 0
    %2697 = vmatprep.subr.bf16.mxu0 0
    %2698 = vmatpush1.bf16.msra.mxu0 0
    %2699 = vmatprep.subr.bf16.mxu0 0
    %2700 = vmatpush1.bf16.msra.mxu0 0
    %2701 = vmatprep.subr.bf16.mxu0 0
    %2702 = vmatpush1.bf16.msra.mxu0 0
    %2703 = vmatprep.subr.bf16.mxu0 0
    %2704 = vmatpush1.bf16.msra.mxu0 0
    %2705 = vmatprep.subr.bf16.mxu0 0
    %2706 = vmatpush1.bf16.msra.mxu0 0
    %2707 = vmatprep.subr.bf16.mxu0 0
    %2708 = vmatpush1.bf16.msra.mxu0 0
    %2709 = vmatprep.mubr.bf16.mxu0 0
    %2710 = vmatmul.mubr.bf16.gmra.mrb[0].mxu0 %v2623
    %v2711 = vpop.f32.mrb[0].mxu0
    %v2712 = vadd.f32 0.0, %v2711
    %v2713 = vpop.f32.mrb[0].mxu0
    %v2714 = vpop.f32.mrb[0].mxu0
    %v2715 = vadd.f32 0.0, %v2714
    %v2716 = vpop.f32.mrb[0].mxu0
    %2717 = vmatprep.mubr.bf16.mxu0 0
    %2718 = vmatmul.mubr.bf16.gmra.mrb[0].mxu0 %v2626
    %v2719 = vpop.f32.mrb[0].mxu0
    %v2720 = vadd.f32 0.0, %v2719
    %v2721 = vpop.f32.mrb[0].mxu0
    %v2722 = vpop.f32.mrb[0].mxu0
    %v2723 = vadd.f32 0.0, %v2722
    %v2724 = vpop.f32.mrb[0].mxu0
    %2725 = vdwg.mxu0
    %2726 = vmatprep.subr.bf16.mxu0 0
    %2727 = vmatpush1.bf16.msra.mxu0 %v1931
    %2728 = vmatprep.subr.bf16.mxu0 0
    %2729 = vmatpush1.bf16.msra.mxu0 %v1932
    %2730 = vmatprep.subr.bf16.mxu0 0
    %2731 = vmatpush1.bf16.msra.mxu0 0
    %2732 = vmatprep.subr.bf16.mxu0 0
    %2733 = vmatpush1.bf16.msra.mxu0 0
    %2734 = vmatprep.subr.bf16.mxu0 0
    %2735 = vmatpush1.bf16.msra.mxu0 0
    %2736 = vmatprep.subr.bf16.mxu0 0
    %2737 = vmatpush1.bf16.msra.mxu0 0
    %2738 = vmatprep.subr.bf16.mxu0 0
    %2739 = vmatpush1.bf16.msra.mxu0 0
    %2740 = vmatprep.subr.bf16.mxu0 0
    %2741 = vmatpush1.bf16.msra.mxu0 0
    %2742 = vmatprep.subr.bf16.mxu0 0
    %2743 = vmatpush1.bf16.msra.mxu0 0
    %2744 = vmatprep.subr.bf16.mxu0 0
    %2745 = vmatpush1.bf16.msra.mxu0 0
    %2746 = vmatprep.subr.bf16.mxu0 0
    %2747 = vmatpush1.bf16.msra.mxu0 0
    %2748 = vmatprep.subr.bf16.mxu0 0
    %2749 = vmatpush1.bf16.msra.mxu0 0
    %2750 = vmatprep.subr.bf16.mxu0 0
    %2751 = vmatpush1.bf16.msra.mxu0 0
    %2752 = vmatprep.subr.bf16.mxu0 0
    %2753 = vmatpush1.bf16.msra.mxu0 0
    %2754 = vmatprep.subr.bf16.mxu0 0
    %2755 = vmatpush1.bf16.msra.mxu0 0
    %2756 = vmatprep.subr.bf16.mxu0 0
    %2757 = vmatpush1.bf16.msra.mxu0 0
    %2758 = vmatprep.mubr.bf16.mxu0 0
    %2759 = vmatmul.mubr.bf16.gmra.mrb[0].mxu0 %v2623
    %v2760 = vpop.f32.mrb[0].mxu0
    %v2761 = vadd.f32 0.0, %v2760
    %v2762 = vpop.f32.mrb[0].mxu0
    %v2763 = vpop.f32.mrb[0].mxu0
    %v2764 = vadd.f32 0.0, %v2763
    %v2765 = vpop.f32.mrb[0].mxu0
    %2766 = vmatprep.mubr.bf16.mxu0 0
    %2767 = vmatmul.mubr.bf16.gmra.mrb[0].mxu0 %v2626
    %v2768 = vpop.f32.mrb[0].mxu0
    %v2769 = vadd.f32 0.0, %v2768
    %v2770 = vpop.f32.mrb[0].mxu0
    %v2771 = vpop.f32.mrb[0].mxu0
    %v2772 = vadd.f32 0.0, %v2771
    %v2773 = vpop.f32.mrb[0].mxu0
    %2774 = vdwg.mxu0
    %2775 = vmatprep.subr.bf16.mxu0 0
    %2776 = vmatpush1.bf16.msra.mxu0 %v1992
    %2777 = vmatprep.subr.bf16.mxu0 0
    %2778 = vmatpush1.bf16.msra.mxu0 %v1993
    %2779 = vmatprep.subr.bf16.mxu0 0
    %2780 = vmatpush1.bf16.msra.mxu0 0
    %2781 = vmatprep.subr.bf16.mxu0 0
    %2782 = vmatpush1.bf16.msra.mxu0 0
    %2783 = vmatprep.subr.bf16.mxu0 0
    %2784 = vmatpush1.bf16.msra.mxu0 0
    %2785 = vmatprep.subr.bf16.mxu0 0
    %2786 = vmatpush1.bf16.msra.mxu0 0
    %2787 = vmatprep.subr.bf16.mxu0 0
    %2788 = vmatpush1.bf16.msra.mxu0 0
    %2789 = vmatprep.subr.bf16.mxu0 0
    %2790 = vmatpush1.bf16.msra.mxu0 0
    %2791 = vmatprep.subr.bf16.mxu0 0
    %2792 = vmatpush1.bf16.msra.mxu0 0
    %2793 = vmatprep.subr.bf16.mxu0 0
    %2794 = vmatpush1.bf16.msra.mxu0 0
    %2795 = vmatprep.subr.bf16.mxu0 0
    %2796 = vmatpush1.bf16.msra.mxu0 0
    %2797 = vmatprep.subr.bf16.mxu0 0
    %2798 = vmatpush1.bf16.msra.mxu0 0
    %2799 = vmatprep.subr.bf16.mxu0 0
    %2800 = vmatpush1.bf16.msra.mxu0 0
    %2801 = vmatprep.subr.bf16.mxu0 0
    %2802 = vmatpush1.bf16.msra.mxu0 0
    %2803 = vmatprep.subr.bf16.mxu0 0
    %2804 = vmatpush1.bf16.msra.mxu0 0
    %2805 = vmatprep.subr.bf16.mxu0 0
    %2806 = vmatpush1.bf16.msra.mxu0 0
    %2807 = vmatprep.mubr.bf16.mxu0 0
    %2808 = vmatmul.mubr.bf16.gmra.mrb[0].mxu0 %v2623
    %v2809 = vpop.f32.mrb[0].mxu0
    %v2810 = vadd.f32 0.0, %v2809
    %v2811 = vpop.f32.mrb[0].mxu0
    %v2812 = vpop.f32.mrb[0].mxu0
    %v2813 = vadd.f32 0.0, %v2812
    %v2814 = vpop.f32.mrb[0].mxu0
    %2815 = vmatprep.mubr.bf16.mxu0 0
    %2816 = vmatmul.mubr.bf16.gmra.mrb[0].mxu0 %v2626
    %v2817 = vpop.f32.mrb[0].mxu0
    %v2818 = vadd.f32 0.0, %v2817
    %v2819 = vpop.f32.mrb[0].mxu0
    %v2820 = vpop.f32.mrb[0].mxu0
    %v2821 = vadd.f32 0.0, %v2820
    %v2822 = vpop.f32.mrb[0].mxu0
    %2823 = vdwg.mxu0
    %2824 = vmatprep.subr.bf16.mxu0 0
    %2825 = vmatpush1.bf16.msra.mxu0 %v2053
    %2826 = vmatprep.subr.bf16.mxu0 0
    %2827 = vmatpush1.bf16.msra.mxu0 %v2054
    %2828 = vmatprep.subr.bf16.mxu0 0
    %2829 = vmatpush1.bf16.msra.mxu0 0
    %2830 = vmatprep.subr.bf16.mxu0 0
    %2831 = vmatpush1.bf16.msra.mxu0 0
    %2832 = vmatprep.subr.bf16.mxu0 0
    %2833 = vmatpush1.bf16.msra.mxu0 0
    %2834 = vmatprep.subr.bf16.mxu0 0
    %2835 = vmatpush1.bf16.msra.mxu0 0
    %2836 = vmatprep.subr.bf16.mxu0 0
    %2837 = vmatpush1.bf16.msra.mxu0 0
    %2838 = vmatprep.subr.bf16.mxu0 0
    %2839 = vmatpush1.bf16.msra.mxu0 0
    %2840 = vmatprep.subr.bf16.mxu0 0
    %2841 = vmatpush1.bf16.msra.mxu0 0
    %2842 = vmatprep.subr.bf16.mxu0 0
    %2843 = vmatpush1.bf16.msra.mxu0 0
    %2844 = vmatprep.subr.bf16.mxu0 0
    %2845 = vmatpush1.bf16.msra.mxu0 0
    %2846 = vmatprep.subr.bf16.mxu0 0
    %2847 = vmatpush1.bf16.msra.mxu0 0
    %2848 = vmatprep.subr.bf16.mxu0 0
    %2849 = vmatpush1.bf16.msra.mxu0 0
    %2850 = vmatprep.subr.bf16.mxu0 0
    %2851 = vmatpush1.bf16.msra.mxu0 0
    %2852 = vmatprep.subr.bf16.mxu0 0
    %2853 = vmatpush1.bf16.msra.mxu0 0
    %2854 = vmatprep.subr.bf16.mxu0 0
    %2855 = vmatpush1.bf16.msra.mxu0 0
    %2856 = vmatprep.mubr.bf16.mxu0 0
    %2857 = vmatmul.mubr.bf16.gmra.mrb[0].mxu0 %v2623
    %v2858 = vpop.f32.mrb[0].mxu0
    %v2859 = vadd.f32 0.0, %v2858
    %v2860 = vpop.f32.mrb[0].mxu0
    %v2861 = vpop.f32.mrb[0].mxu0
    %v2862 = vadd.f32 0.0, %v2861
    %v2863 = vpop.f32.mrb[0].mxu0
    %2864 = vmatprep.mubr.bf16.mxu0 0
    %2865 = vmatmul.mubr.bf16.gmra.mrb[0].mxu0 %v2626
    %v2866 = vpop.f32.mrb[0].mxu0
    %v2867 = vadd.f32 0.0, %v2866
    %v2868 = vpop.f32.mrb[0].mxu0
    %v2869 = vpop.f32.mrb[0].mxu0
    %v2870 = vadd.f32 0.0, %v2869
    %v2871 = vpop.f32.mrb[0].mxu0
    %2872 = vdwg.mxu0
    %2873 = vmatprep.subr.bf16.mxu0 0
    %2874 = vmatpush1.bf16.msra.mxu0 %v2114
    %2875 = vmatprep.subr.bf16.mxu0 0
    %2876 = vmatpush1.bf16.msra.mxu0 %v2115
    %2877 = vmatprep.subr.bf16.mxu0 0
    %2878 = vmatpush1.bf16.msra.mxu0 0
    %2879 = vmatprep.subr.bf16.mxu0 0
    %2880 = vmatpush1.bf16.msra.mxu0 0
    %2881 = vmatprep.subr.bf16.mxu0 0
    %2882 = vmatpush1.bf16.msra.mxu0 0
    %2883 = vmatprep.subr.bf16.mxu0 0
    %2884 = vmatpush1.bf16.msra.mxu0 0
    %2885 = vmatprep.subr.bf16.mxu0 0
    %2886 = vmatpush1.bf16.msra.mxu0 0
    %2887 = vmatprep.subr.bf16.mxu0 0
    %2888 = vmatpush1.bf16.msra.mxu0 0
    %2889 = vmatprep.subr.bf16.mxu0 0
    %2890 = vmatpush1.bf16.msra.mxu0 0
    %2891 = vmatprep.subr.bf16.mxu0 0
    %2892 = vmatpush1.bf16.msra.mxu0 0
    %2893 = vmatprep.subr.bf16.mxu0 0
    %2894 = vmatpush1.bf16.msra.mxu0 0
    %2895 = vmatprep.subr.bf16.mxu0 0
    %2896 = vmatpush1.bf16.msra.mxu0 0
    %2897 = vmatprep.subr.bf16.mxu0 0
    %2898 = vmatpush1.bf16.msra.mxu0 0
    %2899 = vmatprep.subr.bf16.mxu0 0
    %2900 = vmatpush1.bf16.msra.mxu0 0
    %2901 = vmatprep.subr.bf16.mxu0 0
    %2902 = vmatpush1.bf16.msra.mxu0 0
    %2903 = vmatprep.subr.bf16.mxu0 0
    %2904 = vmatpush1.bf16.msra.mxu0 0
    %2905 = vmatprep.mubr.bf16.mxu0 0
    %2906 = vmatmul.mubr.bf16.gmra.mrb[0].mxu0 %v2623
    %v2907 = vpop.f32.mrb[0].mxu0
    %v2908 = vadd.f32 0.0, %v2907
    %v2909 = vpop.f32.mrb[0].mxu0
    %v2910 = vpop.f32.mrb[0].mxu0
    %v2911 = vadd.f32 0.0, %v2910
    %v2912 = vpop.f32.mrb[0].mxu0
    %2913 = vmatprep.mubr.bf16.mxu0 0
    %2914 = vmatmul.mubr.bf16.gmra.mrb[0].mxu0 %v2626
    %v2915 = vpop.f32.mrb[0].mxu0
    %v2916 = vadd.f32 0.0, %v2915
    %v2917 = vpop.f32.mrb[0].mxu0
    %v2918 = vpop.f32.mrb[0].mxu0
    %v2919 = vadd.f32 0.0, %v2918
    %v2920 = vpop.f32.mrb[0].mxu0
    %2921 = vdwg.mxu0
    %2922 = vmatprep.subr.bf16.mxu0 0
    %2923 = vmatpush1.bf16.msra.mxu0 %v2175
    %2924 = vmatprep.subr.bf16.mxu0 0
    %2925 = vmatpush1.bf16.msra.mxu0 %v2176
    %2926 = vmatprep.subr.bf16.mxu0 0
    %2927 = vmatpush1.bf16.msra.mxu0 0
    %2928 = vmatprep.subr.bf16.mxu0 0
    %2929 = vmatpush1.bf16.msra.mxu0 0
    %2930 = vmatprep.subr.bf16.mxu0 0
    %2931 = vmatpush1.bf16.msra.mxu0 0
    %2932 = vmatprep.subr.bf16.mxu0 0
    %2933 = vmatpush1.bf16.msra.mxu0 0
    %2934 = vmatprep.subr.bf16.mxu0 0
    %2935 = vmatpush1.bf16.msra.mxu0 0
    %2936 = vmatprep.subr.bf16.mxu0 0
    %2937 = vmatpush1.bf16.msra.mxu0 0
    %2938 = vmatprep.subr.bf16.mxu0 0
    %2939 = vmatpush1.bf16.msra.mxu0 0
    %2940 = vmatprep.subr.bf16.mxu0 0
    %2941 = vmatpush1.bf16.msra.mxu0 0
    %2942 = vmatprep.subr.bf16.mxu0 0
    %2943 = vmatpush1.bf16.msra.mxu0 0
    %2944 = vmatprep.subr.bf16.mxu0 0
    %2945 = vmatpush1.bf16.msra.mxu0 0
    %2946 = vmatprep.subr.bf16.mxu0 0
    %2947 = vmatpush1.bf16.msra.mxu0 0
    %2948 = vmatprep.subr.bf16.mxu0 0
    %2949 = vmatpush1.bf16.msra.mxu0 0
    %2950 = vmatprep.subr.bf16.mxu0 0
    %2951 = vmatpush1.bf16.msra.mxu0 0
    %2952 = vmatprep.subr.bf16.mxu0 0
    %2953 = vmatpush1.bf16.msra.mxu0 0
    %2954 = vmatprep.mubr.bf16.mxu0 0
    %2955 = vmatmul.mubr.bf16.gmra.mrb[0].mxu0 %v2623
    %v2956 = vpop.f32.mrb[0].mxu0
    %v2957 = vadd.f32 0.0, %v2956
    %v2958 = vpop.f32.mrb[0].mxu0
    %v2959 = vpop.f32.mrb[0].mxu0
    %v2960 = vadd.f32 0.0, %v2959
    %v2961 = vpop.f32.mrb[0].mxu0
    %2962 = vmatprep.mubr.bf16.mxu0 0
    %2963 = vmatmul.mubr.bf16.gmra.mrb[0].mxu0 %v2626
    %v2964 = vpop.f32.mrb[0].mxu0
    %v2965 = vadd.f32 0.0, %v2964
    %v2966 = vpop.f32.mrb[0].mxu0
    %v2967 = vpop.f32.mrb[0].mxu0
    %v2968 = vadd.f32 0.0, %v2967
    %v2969 = vpop.f32.mrb[0].mxu0
    %2970 = vdwg.mxu0
    %2971 = vmatprep.subr.bf16.mxu0 0
    %2972 = vmatpush1.bf16.msra.mxu0 %v2236
    %2973 = vmatprep.subr.bf16.mxu0 0
    %2974 = vmatpush1.bf16.msra.mxu0 %v2237
    %2975 = vmatprep.subr.bf16.mxu0 0
    %2976 = vmatpush1.bf16.msra.mxu0 0
    %2977 = vmatprep.subr.bf16.mxu0 0
    %2978 = vmatpush1.bf16.msra.mxu0 0
    %2979 = vmatprep.subr.bf16.mxu0 0
    %2980 = vmatpush1.bf16.msra.mxu0 0
    %2981 = vmatprep.subr.bf16.mxu0 0
    %2982 = vmatpush1.bf16.msra.mxu0 0
    %2983 = vmatprep.subr.bf16.mxu0 0
    %2984 = vmatpush1.bf16.msra.mxu0 0
    %2985 = vmatprep.subr.bf16.mxu0 0
    %2986 = vmatpush1.bf16.msra.mxu0 0
    %2987 = vmatprep.subr.bf16.mxu0 0
    %2988 = vmatpush1.bf16.msra.mxu0 0
    %2989 = vmatprep.subr.bf16.mxu0 0
    %2990 = vmatpush1.bf16.msra.mxu0 0
    %2991 = vmatprep.subr.bf16.mxu0 0
    %2992 = vmatpush1.bf16.msra.mxu0 0
    %2993 = vmatprep.subr.bf16.mxu0 0
    %2994 = vmatpush1.bf16.msra.mxu0 0
    %2995 = vmatprep.subr.bf16.mxu0 0
    %2996 = vmatpush1.bf16.msra.mxu0 0
    %2997 = vmatprep.subr.bf16.mxu0 0
    %2998 = vmatpush1.bf16.msra.mxu0 0
    %2999 = vmatprep.subr.bf16.mxu0 0
    %3000 = vmatpush1.bf16.msra.mxu0 0
    %3001 = vmatprep.subr.bf16.mxu0 0
    %3002 = vmatpush1.bf16.msra.mxu0 0
    %3003 = vmatprep.mubr.bf16.mxu0 0
    %3004 = vmatmul.mubr.bf16.gmra.mrb[0].mxu0 %v2623
    %v3005 = vpop.f32.mrb[0].mxu0
    %v3006 = vadd.f32 0.0, %v3005
    %v3007 = vpop.f32.mrb[0].mxu0
    %v3008 = vpop.f32.mrb[0].mxu0
    %v3009 = vadd.f32 0.0, %v3008
    %v3010 = vpop.f32.mrb[0].mxu0
    %3011 = vmatprep.mubr.bf16.mxu0 0
    %3012 = vmatmul.mubr.bf16.gmra.mrb[0].mxu0 %v2626
    %v3013 = vpop.f32.mrb[0].mxu0
    %v3014 = vadd.f32 0.0, %v3013
    %v3015 = vpop.f32.mrb[0].mxu0
    %v3016 = vpop.f32.mrb[0].mxu0
    %v3017 = vadd.f32 0.0, %v3016
    %v3018 = vpop.f32.mrb[0].mxu0
    %3019 = vdwg.mxu0
    %v3020 = vpack.c.bf16 %v2666, %v2663
    %v3021 = vpack.c.bf16 %v2674, %v2671
    %v3022 = vpack.c.bf16 %v2715, %v2712
    %v3023 = vpack.c.bf16 %v2723, %v2720
    %v3024 = vpack.c.bf16 %v2764, %v2761
    %v3025 = vpack.c.bf16 %v2772, %v2769
    %v3026 = vpack.c.bf16 %v2813, %v2810
    %v3027 = vpack.c.bf16 %v2821, %v2818
    %v3028 = vpack.c.bf16 %v2862, %v2859
    %v3029 = vpack.c.bf16 %v2870, %v2867
    %v3030 = vpack.c.bf16 %v2911, %v2908
    %v3031 = vpack.c.bf16 %v2919, %v2916
    %v3032 = vpack.c.bf16 %v2960, %v2957
    %v3033 = vpack.c.bf16 %v2968, %v2965
    %v3034 = vpack.c.bf16 %v3009, %v3006
    %v3035 = vpack.c.bf16 %v3017, %v3014
    %v3036 = vld [vmem:[#allocation10] sm:$0xff]
    %v3037 = vld [vmem:[#allocation10 + $0x8] sm:$0xf]
    %v3038 = vld [vmem:[#allocation10 + $0xc] sm:$0xff]
    %v3039 = vld [vmem:[#allocation10 + $0x14] sm:$0xf]
    %v3040 = vld [vmem:[#allocation10 + $0x18] sm:$0xff]
    %v3041 = vld [vmem:[#allocation10 + $0x20] sm:$0xf]
    %v3042 = vld [vmem:[#allocation10 + $0x24] sm:$0xff]
    %v3043 = vld [vmem:[#allocation10 + $0x2c] sm:$0xf]
    %v3052 = vunpack.c.l.b16 %v3036
    %v3053 = vunpack.c.h.b16 %v3036
    %v3054 = vunpack.c.l.b16 %v3037
    %v3055 = vunpack.c.l.b16 %v3038
    %v3056 = vunpack.c.h.b16 %v3038
    %v3057 = vunpack.c.l.b16 %v3039
    %v3058 = vunpack.c.l.b16 %v3040
    %v3059 = vunpack.c.h.b16 %v3040
    %v3060 = vunpack.c.l.b16 %v3041
    %v3061 = vunpack.c.l.b16 %v3042
    %v3062 = vunpack.c.h.b16 %v3042
    %v3063 = vunpack.c.l.b16 %v3043
    %v3064 = vpack.c.b16 %v3055, %v3052
    %v3065 = vpack.c.b16 %v3056, %v3053
    %v3066 = vpack.c.b16 %v3057, %v3054
    %v3067 = vpack.c.b16 %v3061, %v3058
    %v3068 = vpack.c.b16 %v3062, %v3059
    %v3069 = vpack.c.b16 %v3063, %v3060
    %v3075 = vsel %vm1806, %v3066, 0
    %v3078 = vsel %vm1806, %v3069, 0
    %3080 = vmatprep.subr.bf16.mxu0 0
    %3081 = vmatpush1.bf16.msra.mxu0 %v3020
    %3082 = vmatprep.subr.bf16.mxu0 0
    %3083 = vmatpush1.bf16.msra.mxu0 %v3021
    %3084 = vmatprep.subr.bf16.mxu0 0
    %3085 = vmatpush1.bf16.msra.mxu0 %v3022
    %3086 = vmatprep.subr.bf16.mxu0 0
    %3087 = vmatpush1.bf16.msra.mxu0 %v3023
    %3088 = vmatprep.subr.bf16.mxu0 0
    %3089 = vmatpush1.bf16.msra.mxu0 %v3024
    %3090 = vmatprep.subr.bf16.mxu0 0
    %3091 = vmatpush1.bf16.msra.mxu0 %v3025
    %3092 = vmatprep.subr.bf16.mxu0 0
    %3093 = vmatpush1.bf16.msra.mxu0 %v3026
    %3094 = vmatprep.subr.bf16.mxu0 0
    %3095 = vmatpush1.bf16.msra.mxu0 %v3027
    %3096 = vmatprep.subr.bf16.mxu0 0
    %3097 = vmatpush1.bf16.msra.mxu0 %v2620
    %3098 = vmatprep.subr.bf16.mxu0 0
    %3099 = vmatpush1.bf16.msra.mxu0 %v2621
    %3100 = vmatprep.subr.bf16.mxu0 0
    %3101 = vmatpush1.bf16.msra.mxu0 %v3028
    %3102 = vmatprep.subr.bf16.mxu0 0
    %3103 = vmatpush1.bf16.msra.mxu0 %v3029
    %3104 = vmatprep.subr.bf16.mxu0 0
    %3105 = vmatpush1.bf16.msra.mxu0 %v3030
    %3106 = vmatprep.subr.bf16.mxu0 0
    %3107 = vmatpush1.bf16.msra.mxu0 %v3031
    %3108 = vmatprep.subr.bf16.mxu0 0
    %3109 = vmatpush1.bf16.msra.mxu0 %v3032
    %3110 = vmatprep.subr.bf16.mxu0 0
    %3111 = vmatpush1.bf16.msra.mxu0 %v3033
    %3112 = vmatprep.mubr.bf16.mxu0 %v3065
    %3113 = vmatmul.mubr.bf16.gmra.mrb[0].mxu0 %v3064
    %v3114 = vpop.f32.mrb[0].mxu0
    %v3115 = vadd.f32 0.0, %v3114
    %v3116 = vpop.f32.mrb[0].mxu0
    %v3117 = vpop.f32.mrb[0].mxu0
    %v3118 = vadd.f32 0.0, %v3117
    %v3119 = vpop.f32.mrb[0].mxu0
    %3120 = vmatprep.mubr.bf16.mxu0 %v3068
    %3121 = vmatmul.mubr.bf16.gmra.mrb[0].mxu0 %v3067
    %v3122 = vpop.f32.mrb[0].mxu0
    %v3123 = vadd.f32 0.0, %v3122
    %v3124 = vpop.f32.mrb[0].mxu0
    %v3125 = vpop.f32.mrb[0].mxu0
    %v3126 = vadd.f32 0.0, %v3125
    %v3127 = vpop.f32.mrb[0].mxu0
    %3128 = vdwg.mxu0
    %3129 = vmatprep.subr.bf16.mxu0 0
    %3130 = vmatpush1.bf16.msra.mxu0 %v3034
    %3131 = vmatprep.subr.bf16.mxu0 0
    %3132 = vmatpush1.bf16.msra.mxu0 %v3035
    %3133 = vmatprep.subr.bf16.mxu0 0
    %3134 = vmatpush1.bf16.msra.mxu0 0
    %3135 = vmatprep.subr.bf16.mxu0 0
    %3136 = vmatpush1.bf16.msra.mxu0 0
    %3137 = vmatprep.subr.bf16.mxu0 0
    %3138 = vmatpush1.bf16.msra.mxu0 0
    %3139 = vmatprep.subr.bf16.mxu0 0
    %3140 = vmatpush1.bf16.msra.mxu0 0
    %3141 = vmatprep.subr.bf16.mxu0 0
    %3142 = vmatpush1.bf16.msra.mxu0 0
    %3143 = vmatprep.subr.bf16.mxu0 0
    %3144 = vmatpush1.bf16.msra.mxu0 0
    %3145 = vmatprep.subr.bf16.mxu0 0
    %3146 = vmatpush1.bf16.msra.mxu0 0
    %3147 = vmatprep.subr.bf16.mxu0 0
    %3148 = vmatpush1.bf16.msra.mxu0 0
    %3149 = vmatprep.subr.bf16.mxu0 0
    %3150 = vmatpush1.bf16.msra.mxu0 0
    %3151 = vmatprep.subr.bf16.mxu0 0
    %3152 = vmatpush1.bf16.msra.mxu0 0
    %3153 = vmatprep.subr.bf16.mxu0 0
    %3154 = vmatpush1.bf16.msra.mxu0 0
    %3155 = vmatprep.subr.bf16.mxu0 0
    %3156 = vmatpush1.bf16.msra.mxu0 0
    %3157 = vmatprep.subr.bf16.mxu0 0
    %3158 = vmatpush1.bf16.msra.mxu0 0
    %3159 = vmatprep.subr.bf16.mxu0 0
    %3160 = vmatpush1.bf16.msra.mxu0 0
    %3161 = vmatprep.mubr.bf16.mxu0 0
    %3162 = vmatmul.mubr.bf16.gmra.mrb[0].mxu0 %v3075
    %v3163 = vpop.f32.mrb[0].mxu0
    %v3164 = vadd.f32 %v3115, %v3163
    %v3165 = vpop.f32.mrb[0].mxu0
    %v3166 = vpop.f32.mrb[0].mxu0
    %v3167 = vadd.f32 %v3118, %v3166
    %v3168 = vpop.f32.mrb[0].mxu0
    %3169 = vmatprep.mubr.bf16.mxu0 0
    %3170 = vmatmul.mubr.bf16.gmra.mrb[0].mxu0 %v3078
    %v3171 = vpop.f32.mrb[0].mxu0
    %v3172 = vadd.f32 %v3123, %v3171
    %v3173 = vpop.f32.mrb[0].mxu0
    %v3174 = vpop.f32.mrb[0].mxu0
    %v3175 = vadd.f32 %v3126, %v3174
    %v3176 = vpop.f32.mrb[0].mxu0
    %3177 = vdwg.mxu0
    %v3178 = vsel %vm1806, %v3164, 0.0
    %3179 = vadd.xlane.f32.xlu0 %v3178
    %v3180 = vpop.xlane.xlu0 %3179
    %v3181 = vsel %vm1806, %v3167, 0.0
    %3182 = vadd.xlane.f32.xlu0 %v3181
    %v3183 = vpop.xlane.xlu0 %3182
    %v3184 = vsel %vm1806, %v3172, 0.0
    %3185 = vadd.xlane.f32.xlu0 %v3184
    %v3186 = vpop.xlane.xlu0 %3185
    %v3187 = vsel %vm1806, %v3175, 0.0
    %3188 = vadd.xlane.f32.xlu0 %v3187
    %v3189 = vpop.xlane.xlu0 %3188
    %v3190 = vmul.f32 %v3180, %v2459
    %v3191 = vmul.f32 %v3183, %v2459
    %v3192 = vmul.f32 %v3186, %v2459
    %v3193 = vmul.f32 %v3189, %v2459
    %v3194 = vsub.f32 %v3164, %v3190
    %v3195 = vsub.f32 %v3167, %v3191
    %v3196 = vsub.f32 %v3172, %v3192
    %v3197 = vsub.f32 %v3175, %v3193
    %v3198 = vmul.f32 %v3194, %v3194
    %v3199 = vmul.f32 %v3195, %v3195
    %v3200 = vmul.f32 %v3196, %v3196
    %v3201 = vmul.f32 %v3197, %v3197
    %v3202 = vsel %vm1806, %v3198, 0.0
    %3203 = vadd.xlane.f32.xlu0 %v3202
    %v3204 = vpop.xlane.xlu0 %3203
    %v3205 = vsel %vm1806, %v3199, 0.0
    %3206 = vadd.xlane.f32.xlu0 %v3205
    %v3207 = vpop.xlane.xlu0 %3206
    %v3208 = vsel %vm1806, %v3200, 0.0
    %3209 = vadd.xlane.f32.xlu0 %v3208
    %v3210 = vpop.xlane.xlu0 %3209
    %v3211 = vsel %vm1806, %v3201, 0.0
    %3212 = vadd.xlane.f32.xlu0 %v3211
    %v3213 = vpop.xlane.xlu0 %3212
    %v3214 = vmul.f32 %v3204, %v2459
    %v3215 = vmul.f32 %v3207, %v2459
    %v3216 = vmul.f32 %v3210, %v2459
    %v3217 = vmul.f32 %v3213, %v2459
    %v3218 = vmul.f32 %v3194, 1.1
    %v3219 = vmul.f32 %v3195, 1.1
    %v3220 = vmul.f32 %v3196, 1.1
    %v3221 = vmul.f32 %v3197, 1.1
    %v3222 = vadd.f32 %v3214, 1e-05
    %v3223 = vadd.f32 %v3215, 1e-05
    %v3224 = vadd.f32 %v3216, 1e-05
    %v3225 = vadd.f32 %v3217, 1e-05
    %v3226 = vrsqrt.pop %v3222
    %v3227 = vrsqrt.pop %v3223
    %v3228 = vrsqrt.pop %v3224
    %v3229 = vrsqrt.pop %v3225
    %v3230 = vmul.f32 %v3218, %v3226
    %v3231 = vmul.f32 %v3219, %v3227
    %v3232 = vmul.f32 %v3220, %v3228
    %v3233 = vmul.f32 %v3221, %v3229
    %v3234 = vmul.f32 %v3230, 0.70710677
    %v3235 = vmul.f32 %v3231, 0.70710677
    %v3236 = vmul.f32 %v3232, 0.70710677
    %v3237 = vmul.f32 %v3233, 0.70710677
    %v3238 = vand.u32 2147483647, %v3234
    %v3239 = vand.u32 2147483647, %v3235
    %v3240 = vand.u32 2147483647, %v3236
    %v3241 = vand.u32 2147483647, %v3237
    %v3242 = vmul.f32 %v3238, 0.3275911
    %v3243 = vmul.f32 %v3239, 0.3275911
    %v3244 = vmul.f32 %v3240, 0.3275911
    %v3245 = vmul.f32 %v3241, 0.3275911
    %v3246 = vadd.f32 %v3242, 1.0
    %v3247 = vadd.f32 %v3243, 1.0
    %v3248 = vadd.f32 %v3244, 1.0
    %v3249 = vadd.f32 %v3245, 1.0
    %v3250 = vrcp.pop %v3246
    %v3251 = vrcp.pop %v3247
    %v3252 = vrcp.pop %v3248
    %v3253 = vrcp.pop %v3249
    %v3254 = vmul.f32 %v3246, %v3250
    %v3255 = vmul.f32 %v3247, %v3251
    %v3256 = vmul.f32 %v3248, %v3252
    %v3257 = vmul.f32 %v3249, %v3253
    %v3258 = vsub.f32 2.0, %v3254
    %v3259 = vsub.f32 2.0, %v3255
    %v3260 = vsub.f32 2.0, %v3256
    %v3261 = vsub.f32 2.0, %v3257
    %v3262 = vmul.f32 %v3250, %v3258
    %v3263 = vmul.f32 %v3251, %v3259
    %v3264 = vmul.f32 %v3252, %v3260
    %v3265 = vmul.f32 %v3253, %v3261
    %v3266 = vmul.f32 %v3262, 1.0614054
    %v3267 = vmul.f32 %v3263, 1.0614054
    %v3268 = vmul.f32 %v3264, 1.0614054
    %v3269 = vmul.f32 %v3265, 1.0614054
    %v3270 = vsub.f32 %v3266, 1.4531521
    %v3271 = vsub.f32 %v3267, 1.4531521
    %v3272 = vsub.f32 %v3268, 1.4531521
    %v3273 = vsub.f32 %v3269, 1.4531521
    %v3274 = vmul.f32 %v3270, %v3262
    %v3275 = vmul.f32 %v3271, %v3263
    %v3276 = vmul.f32 %v3272, %v3264
    %v3277 = vmul.f32 %v3273, %v3265
    %v3278 = vadd.f32 %v3274, 1.4214138
    %v3279 = vadd.f32 %v3275, 1.4214138
    %v3280 = vadd.f32 %v3276, 1.4214138
    %v3281 = vadd.f32 %v3277, 1.4214138
    %v3282 = vmul.f32 %v3278, %v3262
    %v3283 = vmul.f32 %v3279, %v3263
    %v3284 = vmul.f32 %v3280, %v3264
    %v3285 = vmul.f32 %v3281, %v3265
    %v3286 = vsub.f32 %v3282, 0.28449672
    %v3287 = vsub.f32 %v3283, 0.28449672
    %v3288 = vsub.f32 %v3284, 0.28449672
    %v3289 = vsub.f32 %v3285, 0.28449672
    %v3290 = vmul.f32 %v3286, %v3262
    %v3291 = vmul.f32 %v3287, %v3263
    %v3292 = vmul.f32 %v3288, %v3264
    %v3293 = vmul.f32 %v3289, %v3265
    %v3294 = vadd.f32 %v3290, 0.2548296
    %v3295 = vadd.f32 %v3291, 0.2548296
    %v3296 = vadd.f32 %v3292, 0.2548296
    %v3297 = vadd.f32 %v3293, 0.2548296
    %v3298 = vmul.f32 %v3294, %v3262
    %v3299 = vmul.f32 %v3295, %v3263
    %v3300 = vmul.f32 %v3296, %v3264
    %v3301 = vmul.f32 %v3297, %v3265
    %v3302 = vsub.f32 0.0, %v3238
    %v3303 = vsub.f32 0.0, %v3239
    %v3304 = vsub.f32 0.0, %v3240
    %v3305 = vsub.f32 0.0, %v3241
    %v3306 = vmul.f32 %v3302, %v3238
    %v3307 = vmul.f32 %v3303, %v3239
    %v3308 = vmul.f32 %v3304, %v3240
    %v3309 = vmul.f32 %v3305, %v3241
    %v3310 = vmul.f32 %v3306, 1.442695
    %v3311 = vpow.pop %v3310
    %v3312 = vmul.f32 %v3307, 1.442695
    %v3313 = vpow.pop %v3312
    %v3314 = vmul.f32 %v3308, 1.442695
    %v3315 = vpow.pop %v3314
    %v3316 = vmul.f32 %v3309, 1.442695
    %v3317 = vpow.pop %v3316
    %v3318 = vmul.f32 %v3298, %v3311
    %v3319 = vmul.f32 %v3299, %v3313
    %v3320 = vmul.f32 %v3300, %v3315
    %v3321 = vmul.f32 %v3301, %v3317
    %v3322 = vsub.f32 1.0, %v3318
    %v3323 = vsub.f32 1.0, %v3319
    %v3324 = vsub.f32 1.0, %v3320
    %v3325 = vsub.f32 1.0, %v3321
    %vm3326 = vcmp.ge.f32.partialorder %v3234, 0.0
    %vm3327 = vcmp.ge.f32.partialorder %v3235, 0.0
    %vm3328 = vcmp.ge.f32.partialorder %v3236, 0.0
    %vm3329 = vcmp.ge.f32.partialorder %v3237, 0.0
    %v3330 = vsub.f32 0.0, %v3322
    %v3331 = vsub.f32 0.0, %v3323
    %v3332 = vsub.f32 0.0, %v3324
    %v3333 = vsub.f32 0.0, %v3325
    %v3334 = vsel %vm3326, %v3322, %v3330
    %v3335 = vsel %vm3327, %v3323, %v3331
    %v3336 = vsel %vm3328, %v3324, %v3332
    %v3337 = vsel %vm3329, %v3325, %v3333
    %v3338 = vmul.f32 %v3230, 0.5
    %v3339 = vmul.f32 %v3231, 0.5
    %v3340 = vmul.f32 %v3232, 0.5
    %v3341 = vmul.f32 %v3233, 0.5
    %v3342 = vadd.f32 %v3334, 1.0
    %v3343 = vadd.f32 %v3335, 1.0
    %v3344 = vadd.f32 %v3336, 1.0
    %v3345 = vadd.f32 %v3337, 1.0
    %v3346 = vmul.f32 %v3338, %v3342
    %v3347 = vmul.f32 %v3339, %v3343
    %v3348 = vmul.f32 %v3340, %v3344
    %v3349 = vmul.f32 %v3341, %v3345
    %v3350 = vpack.c.bf16 %v3347, %v3346
    %v3351 = vpack.c.bf16 %v3349, %v3348
    %v3353 = vsel %vm1806, %v3350, 0
    %v3356 = vsel %vm1806, %v3351, 0
    %3358 = vmatprep.subr.bf16.mxu0 0
    %3359 = vmatpush1.bf16.msra.mxu0 %v2053
    %3360 = vmatprep.subr.bf16.mxu0 0
    %3361 = vmatpush1.bf16.msra.mxu0 %v2054
    %3362 = vmatprep.subr.bf16.mxu0 0
    %3363 = vmatpush1.bf16.msra.mxu0 0
    %3364 = vmatprep.subr.bf16.mxu0 0
    %3365 = vmatpush1.bf16.msra.mxu0 0
    %3366 = vmatprep.subr.bf16.mxu0 0
    %3367 = vmatpush1.bf16.msra.mxu0 0
    %3368 = vmatprep.subr.bf16.mxu0 0
    %3369 = vmatpush1.bf16.msra.mxu0 0
    %3370 = vmatprep.subr.bf16.mxu0 0
    %3371 = vmatpush1.bf16.msra.mxu0 0
    %3372 = vmatprep.subr.bf16.mxu0 0
    %3373 = vmatpush1.bf16.msra.mxu0 0
    %3374 = vmatprep.subr.bf16.mxu0 0
    %3375 = vmatpush1.bf16.msra.mxu0 0
    %3376 = vmatprep.subr.bf16.mxu0 0
    %3377 = vmatpush1.bf16.msra.mxu0 0
    %3378 = vmatprep.subr.bf16.mxu0 0
    %3379 = vmatpush1.bf16.msra.mxu0 0
    %3380 = vmatprep.subr.bf16.mxu0 0
    %3381 = vmatpush1.bf16.msra.mxu0 0
    %3382 = vmatprep.subr.bf16.mxu0 0
    %3383 = vmatpush1.bf16.msra.mxu0 0
    %3384 = vmatprep.subr.bf16.mxu0 0
    %3385 = vmatpush1.bf16.msra.mxu0 0
    %3386 = vmatprep.subr.bf16.mxu0 0
    %3387 = vmatpush1.bf16.msra.mxu0 0
    %3388 = vmatprep.subr.bf16.mxu0 0
    %3389 = vmatpush1.bf16.msra.mxu0 0
    %3390 = vmatprep.mubr.bf16.mxu0 0
    %3391 = vmatmul.mubr.bf16.gmra.mrb[0].mxu0 %v3353
    %v3392 = vpop.f32.mrb[0].mxu0
    %v3393 = vadd.f32 0.0, %v3392
    %v3394 = vpop.f32.mrb[0].mxu0
    %v3395 = vpop.f32.mrb[0].mxu0
    %v3396 = vadd.f32 0.0, %v3395
    %v3397 = vpop.f32.mrb[0].mxu0
    %3398 = vmatprep.mubr.bf16.mxu0 0
    %3399 = vmatmul.mubr.bf16.gmra.mrb[0].mxu0 %v3356
    %v3400 = vpop.f32.mrb[0].mxu0
    %v3401 = vadd.f32 0.0, %v3400
    %v3402 = vpop.f32.mrb[0].mxu0
    %v3403 = vpop.f32.mrb[0].mxu0
    %v3404 = vadd.f32 0.0, %v3403
    %v3405 = vpop.f32.mrb[0].mxu0
    %3406 = vdwg.mxu0
    %v3407 = vmax.f32 %v3346, %v3393
    %v3408 = vmax.f32 %v3347, %v3396
    %v3409 = vmax.f32 %v3348, %v3401
    %v3410 = vmax.f32 %v3349, %v3404
    %v3411 = vpack.c.bf16 %v3408, %v3407
    %v3412 = vpack.c.bf16 %v3410, %v3409
    %v3414 = vsel %vm1806, %v3411, 0
    %v3417 = vsel %vm1806, %v3412, 0
    %3419 = vmatprep.subr.bf16.mxu0 0
    %3420 = vmatpush1.bf16.msra.mxu0 %v2175
    %3421 = vmatprep.subr.bf16.mxu0 0
    %3422 = vmatpush1.bf16.msra.mxu0 %v2176
    %3423 = vmatprep.subr.bf16.mxu0 0
    %3424 = vmatpush1.bf16.msra.mxu0 0
    %3425 = vmatprep.subr.bf16.mxu0 0
    %3426 = vmatpush1.bf16.msra.mxu0 0
    %3427 = vmatprep.subr.bf16.mxu0 0
    %3428 = vmatpush1.bf16.msra.mxu0 0
    %3429 = vmatprep.subr.bf16.mxu0 0
    %3430 = vmatpush1.bf16.msra.mxu0 0
    %3431 = vmatprep.subr.bf16.mxu0 0
    %3432 = vmatpush1.bf16.msra.mxu0 0
    %3433 = vmatprep.subr.bf16.mxu0 0
    %3434 = vmatpush1.bf16.msra.mxu0 0
    %3435 = vmatprep.subr.bf16.mxu0 0
    %3436 = vmatpush1.bf16.msra.mxu0 0
    %3437 = vmatprep.subr.bf16.mxu0 0
    %3438 = vmatpush1.bf16.msra.mxu0 0
    %3439 = vmatprep.subr.bf16.mxu0 0
    %3440 = vmatpush1.bf16.msra.mxu0 0
    %3441 = vmatprep.subr.bf16.mxu0 0
    %3442 = vmatpush1.bf16.msra.mxu0 0
    %3443 = vmatprep.subr.bf16.mxu0 0
    %3444 = vmatpush1.bf16.msra.mxu0 0
    %3445 = vmatprep.subr.bf16.mxu0 0
    %3446 = vmatpush1.bf16.msra.mxu0 0
    %3447 = vmatprep.subr.bf16.mxu0 0
    %3448 = vmatpush1.bf16.msra.mxu0 0
    %3449 = vmatprep.subr.bf16.mxu0 0
    %3450 = vmatpush1.bf16.msra.mxu0 0
    %3451 = vmatprep.mubr.bf16.mxu0 0
    %3452 = vmatmul.mubr.bf16.gmra.mrb[0].mxu0 %v3414
    %v3453 = vpop.f32.mrb[0].mxu0
    %v3454 = vadd.f32 0.0, %v3453
    %v3455 = vpop.f32.mrb[0].mxu0
    %v3456 = vpop.f32.mrb[0].mxu0
    %v3457 = vadd.f32 0.0, %v3456
    %v3458 = vpop.f32.mrb[0].mxu0
    %3459 = vmatprep.mubr.bf16.mxu0 0
    %3460 = vmatmul.mubr.bf16.gmra.mrb[0].mxu0 %v3417
    %v3461 = vpop.f32.mrb[0].mxu0
    %v3462 = vadd.f32 0.0, %v3461
    %v3463 = vpop.f32.mrb[0].mxu0
    %v3464 = vpop.f32.mrb[0].mxu0
    %v3465 = vadd.f32 0.0, %v3464
    %v3466 = vpop.f32.mrb[0].mxu0
    %3467 = vdwg.mxu0
    %v3468 = vmax.f32 %v3407, %v3454
    %v3469 = vmax.f32 %v3408, %v3457
    %v3470 = vmax.f32 %v3409, %v3462
    %v3471 = vmax.f32 %v3410, %v3465
    %v3472 = vld [vmem:[%s14] sm:$0x1]
    %v3473 = vpack.c.bf16 %v3469, %v3468
    %v3474 = vpack.c.bf16 %v3471, %v3470
    %v3476 = vsel %vm1806, %v3472, 0
    %v3479 = vsel %vm1806, %v3473, 0
    %v3482 = vsel %vm1806, %v3474, 0
    %3484 = vmatprep.subr.bf16.mxu0 0
    %3485 = vmatpush1.bf16.xpose.msra.mxu0 %v3479
    %3486 = vmatprep.subr.bf16.mxu0 0
    %3487 = vmatpush1.bf16.xpose.msra.mxu0 %v3482
    %3488 = vmatprep.subr.bf16.mxu0 0
    %3489 = vmatpush1.bf16.xpose.msra.mxu0 0
    %3490 = vmatprep.subr.bf16.mxu0 0
    %3491 = vmatpush1.bf16.xpose.msra.mxu0 0
    %3492 = vmatprep.subr.bf16.mxu0 0
    %3493 = vmatpush1.bf16.xpose.msra.mxu0 0
    %3494 = vmatprep.subr.bf16.mxu0 0
    %3495 = vmatpush1.bf16.xpose.msra.mxu0 0
    %3496 = vmatprep.subr.bf16.mxu0 0
    %3497 = vmatpush1.bf16.xpose.msra.mxu0 0
    %3498 = vmatprep.subr.bf16.mxu0 0
    %3499 = vmatpush1.bf16.xpose.msra.mxu0 0
    %3500 = vmatprep.subr.bf16.mxu0 0
    %3501 = vmatpush1.bf16.xpose.msra.mxu0 0
    %3502 = vmatprep.subr.bf16.mxu0 0
    %3503 = vmatpush1.bf16.xpose.msra.mxu0 0
    %3504 = vmatprep.subr.bf16.mxu0 0
    %3505 = vmatpush1.bf16.xpose.msra.mxu0 0
    %3506 = vmatprep.subr.bf16.mxu0 0
    %3507 = vmatpush1.bf16.xpose.msra.mxu0 0
    %3508 = vmatprep.subr.bf16.mxu0 0
    %3509 = vmatpush1.bf16.xpose.msra.mxu0 0
    %3510 = vmatprep.subr.bf16.mxu0 0
    %3511 = vmatpush1.bf16.xpose.msra.mxu0 0
    %3512 = vmatprep.subr.bf16.mxu0 0
    %3513 = vmatpush1.bf16.xpose.msra.mxu0 0
    %3514 = vmatprep.subr.bf16.mxu0 0
    %3515 = vmatpush1.bf16.xpose.msra.mxu0 0
    %3516 = vmatprep.mubr.bf16.mxu0 0
    %3517 = vmatmul.mubr.bf16.gmra.mrb[0].mxu0 %v3476
    %v3518 = vpop.f32.mrb[0].mxu0
    %v3519 = vadd.f32 0.0, %v3518
    %v3520 = vpop.f32.mrb[0].mxu0
    %v3521 = vpop.f32.mrb[0].mxu0
    %v3522 = vpop.f32.mrb[0].mxu0
    %3523 = vdwg.mxu0
    %v3524 = vpack.c.bf16 %v3519, %v3519
    %v3525 = vld [vmem:[#allocation14] sm:$0xf]
    %v3526 = vld [vmem:[#allocation14 + $0x4] sm:$0xf]
    %v3527 = vld [vmem:[#allocation14 + $0x8] sm:$0xf]
    %v3528 = vld [vmem:[#allocation14 + $0xc] sm:$0xf]
    %v3533 = vunpack.c.l.b16 %v3525
    %v3534 = vunpack.c.l.b16 %v3526
    %v3535 = vunpack.c.l.b16 %v3527
    %v3536 = vunpack.c.l.b16 %v3528
    %v3537 = vpack.c.b16 %v3534, %v3533
    %v3538 = vpack.c.b16 %v3536, %v3535
    %v3542 = vsel %vm1806, %v3524, 0
    %3544 = vmatprep.subr.bf16.mxu0 0
    %3545 = vmatpush1.bf16.msra.mxu0 %v3537
    %3546 = vmatprep.subr.bf16.mxu0 0
    %3547 = vmatpush1.bf16.msra.mxu0 %v3538
    %3548 = vmatprep.subr.bf16.mxu0 0
    %3549 = vmatpush1.bf16.msra.mxu0 0
    %3550 = vmatprep.subr.bf16.mxu0 0
    %3551 = vmatpush1.bf16.msra.mxu0 0
    %3552 = vmatprep.subr.bf16.mxu0 0
    %3553 = vmatpush1.bf16.msra.mxu0 0
    %3554 = vmatprep.subr.bf16.mxu0 0
    %3555 = vmatpush1.bf16.msra.mxu0 0
    %3556 = vmatprep.subr.bf16.mxu0 0
    %3557 = vmatpush1.bf16.msra.mxu0 0
    %3558 = vmatprep.subr.bf16.mxu0 0
    %3559 = vmatpush1.bf16.msra.mxu0 0
    %3560 = vmatprep.subr.bf16.mxu0 0
    %3561 = vmatpush1.bf16.msra.mxu0 0
    %3562 = vmatprep.subr.bf16.mxu0 0
    %3563 = vmatpush1.bf16.msra.mxu0 0
    %3564 = vmatprep.subr.bf16.mxu0 0
    %3565 = vmatpush1.bf16.msra.mxu0 0
    %3566 = vmatprep.subr.bf16.mxu0 0
    %3567 = vmatpush1.bf16.msra.mxu0 0
    %3568 = vmatprep.subr.bf16.mxu0 0
    %3569 = vmatpush1.bf16.msra.mxu0 0
    %3570 = vmatprep.subr.bf16.mxu0 0
    %3571 = vmatpush1.bf16.msra.mxu0 0
    %3572 = vmatprep.subr.bf16.mxu0 0
    %3573 = vmatpush1.bf16.msra.mxu0 0
    %3574 = vmatprep.subr.bf16.mxu0 0
    %3575 = vmatpush1.bf16.msra.mxu0 0
    %3576 = vmatprep.mubr.bf16.mxu0 0
    %3577 = vmatmul.mubr.bf16.gmra.mrb[0].mxu0 %v3542
    %v3578 = vpop.f32.mrb[0].mxu0
    %v3579 = vadd.f32 0.0, %v3578
    %v3580 = vpop.f32.mrb[0].mxu0
    %v3581 = vpop.f32.mrb[0].mxu0
    %v3582 = vpop.f32.mrb[0].mxu0
    %3583 = vdwg.mxu0
    %vm3584 = vcmask 254976
    %v3585 = vsel %vm3584, %v3579, 0.0
    %v3586 = vrot.slane %v3585, 4
    %v3587 = vadd.f32 %v3585, %v3586
    %v3588 = vrot.slane %v3587, 2
    %v3589 = vadd.f32 %v3587, %v3588
    %v3590 = vrot.slane %v3589, 1
    %v3591 = vadd.f32 %v3589, %v3590
    %v3592 = vrcp.pop 2.0
    %v3593 = vmul.f32 %v3591, %v3592
    %v3594 = vsub.f32 %v3579, %v3593
    %v3595 = vmul.f32 %v3594, %v3594
    %v3596 = vsel %vm3584, %v3595, 0.0
    %v3597 = vrot.slane %v3596, 4
    %v3598 = vadd.f32 %v3596, %v3597
    %v3599 = vrot.slane %v3598, 2
    %v3600 = vadd.f32 %v3598, %v3599
    %v3601 = vrot.slane %v3600, 1
    %v3602 = vadd.f32 %v3600, %v3601
    %v3603 = vmul.f32 %v3602, %v3592
    %v3604 = vmul.f32 %v3594, 1.1
    %v3605 = vadd.f32 %v3603, 1e-05
    %v3606 = vrsqrt.pop %v3605
    %v3607 = vmul.f32 %v3604, %v3606
    %v3608 = vmul.f32 %v3607, 0.70710677
    %v3609 = vand.u32 2147483647, %v3608
    %v3610 = vmul.f32 %v3609, 0.3275911
    %v3611 = vadd.f32 %v3610, 1.0
    %v3612 = vrcp.pop %v3611
    %v3613 = vmul.f32 %v3611, %v3612
    %v3614 = vsub.f32 2.0, %v3613
    %v3615 = vmul.f32 %v3612, %v3614
    %v3616 = vmul.f32 %v3615, 1.0614054
    %v3617 = vsub.f32 %v3616, 1.4531521
    %v3618 = vmul.f32 %v3617, %v3615
    %v3619 = vadd.f32 %v3618, 1.4214138
    %v3620 = vmul.f32 %v3619, %v3615
    %v3621 = vsub.f32 %v3620, 0.28449672
    %v3622 = vmul.f32 %v3621, %v3615
    %v3623 = vadd.f32 %v3622, 0.2548296
    %v3624 = vmul.f32 %v3623, %v3615
    %v3625 = vsub.f32 0.0, %v3609
    %v3626 = vmul.f32 %v3625, %v3609
    %v3627 = vmul.f32 %v3626, 1.442695
    %v3628 = vpow.pop %v3627
    %v3629 = vmul.f32 %v3624, %v3628
    %v3630 = vsub.f32 1.0, %v3629
    %vm3631 = vcmp.ge.f32.partialorder %v3608, 0.0
    %v3632 = vsub.f32 0.0, %v3630
    %v3633 = vsel %vm3631, %v3630, %v3632
    %v3634 = vmul.f32 %v3607, 0.5
    %v3635 = vadd.f32 %v3633, 1.0
    %v3636 = vmul.f32 %v3634, %v3635
    %v3637 = vpack.c.bf16 %v3636, %v3636
    %v3638 = vld [vmem:[%s17] sm:$0xf]
    %v3639 = vld [vmem:[%s17 + $0x4] sm:$0xf]
    %v3640 = vld [vmem:[%s17 + $0x8] sm:$0xf]
    %v3641 = vld [vmem:[%s17 + $0xc] sm:$0xf]
    %v3642 = vld [vmem:[%s18] sm:$0x1]
    %v3644 = vlaneseq
    %v3645 = vshrl.u32 %v3644, 7
    %v3646 = vsub.s32 0, %v3645
    %v3647 = vrot.slane %v3642, %v3646
    %v3653 = vunpack.c.l.b16 %v3638
    %v3654 = vunpack.c.l.b16 %v3639
    %v3655 = vunpack.c.l.b16 %v3640
    %v3656 = vunpack.c.l.b16 %v3641
    %v3657 = vpack.c.b16 %v3654, %v3653
    %v3658 = vpack.c.b16 %v3656, %v3655
    %v3662 = vsel %vm1806, %v3637, 0
    %3664 = vmatprep.subr.bf16.mxu0 0
    %3665 = vmatpush1.bf16.msra.mxu0 %v3657
    %3666 = vmatprep.subr.bf16.mxu0 0
    %3667 = vmatpush1.bf16.msra.mxu0 %v3658
    %3668 = vmatprep.subr.bf16.mxu0 0
    %3669 = vmatpush1.bf16.msra.mxu0 0
    %3670 = vmatprep.subr.bf16.mxu0 0
    %3671 = vmatpush1.bf16.msra.mxu0 0
    %3672 = vmatprep.subr.bf16.mxu0 0
    %3673 = vmatpush1.bf16.msra.mxu0 0
    %3674 = vmatprep.subr.bf16.mxu0 0
    %3675 = vmatpush1.bf16.msra.mxu0 0
    %3676 = vmatprep.subr.bf16.mxu0 0
    %3677 = vmatpush1.bf16.msra.mxu0 0
    %3678 = vmatprep.subr.bf16.mxu0 0
    %3679 = vmatpush1.bf16.msra.mxu0 0
    %3680 = vmatprep.subr.bf16.mxu0 0
    %3681 = vmatpush1.bf16.msra.mxu0 0
    %3682 = vmatprep.subr.bf16.mxu0 0
    %3683 = vmatpush1.bf16.msra.mxu0 0
    %3684 = vmatprep.subr.bf16.mxu0 0
    %3685 = vmatpush1.bf16.msra.mxu0 0
    %3686 = vmatprep.subr.bf16.mxu0 0
    %3687 = vmatpush1.bf16.msra.mxu0 0
    %3688 = vmatprep.subr.bf16.mxu0 0
    %3689 = vmatpush1.bf16.msra.mxu0 0
    %3690 = vmatprep.subr.bf16.mxu0 0
    %3691 = vmatpush1.bf16.msra.mxu0 0
    %3692 = vmatprep.subr.bf16.mxu0 0
    %3693 = vmatpush1.bf16.msra.mxu0 0
    %3694 = vmatprep.subr.bf16.mxu0 0
    %3695 = vmatpush1.bf16.msra.mxu0 0
    %3696 = vmatprep.mubr.bf16.mxu0 0
    %3697 = vmatmul.mubr.bf16.gmra.mrb[0].mxu0 %v3662
    %v3698 = vpop.f32.mrb[0].mxu0
    %v3699 = vadd.f32 %v3647, %v3698
    %v3700 = vpop.f32.mrb[0].mxu0
    %v3701 = vpop.f32.mrb[0].mxu0
    %v3702 = vpop.f32.mrb[0].mxu0
    %3703 = vdwg.mxu0
    %vm3704 = vcmask 123904
    %3705 = vst.msk [vmem:[#allocation16] sm:$0x3] %vm3704, %v3699
    // Predicated region
    $region110: #{forward.1} parent=1 // pred_check
      _
    $region111: #{forward.1} parent=1 // pred_check_branch
      %3707 = sbr.rel (0) target = $region113
    $region112: #{forward.1} parent=1 // pred_region
      %s3709 = ssub.s32 32, 32
      %3710 = vsyncadd [#allocation4], %s3709
      %s3712 = sshll.u32 [#allocation16], 4
      %s3713 = int_to_ptr.vmem [resolvable:$true] %s3712
      %3715 = dma.vmem_to_hbm [thread:$0]  %s3713, 32, %s19, [#allocation4]
    $region113: #{forward.1} parent=1 // pred_fallthru
      _
    // Predicated region
    $region114: #{forward.1} parent=1 // pred_check
      _
    $region115: #{forward.1} parent=1 // pred_check_branch
      %3717 = sbr.rel (0) target = $region117
    $region116: #{forward.1} parent=1 // pred_region
      %3718 = dma.done [#allocation4], 32
    $region117: #{forward.1} parent=1 // pred_fallthru
      _
    %3719 = vsyncpa [#allocation3], 1
    %3720 = vsyncpa [#allocation6], 1
    %3721 = vsyncpa [#allocation9], 1
    %3722 = vsyncpa [#allocation12], 1
    %3723 = vsyncpa [#allocation15], 1
    %3724 = vsyncpa [#allocation4], 1

</llo_original>
